<compile_context>
chip_gen: v6e
topology: v6e:2x2x1
jax: 0.10.0
libtpu: 0.0.40
codegen_flags: <defaults>
</compile_context>

<pallas_src>
import jax
import jax.numpy as jnp
from jax.experimental import pallas as pl
from jax.experimental.pallas import tpu as pltpu

_NEG_SLOPE = 0.01          # nn.LeakyReLU default
_BN_EPS = 1e-5
_VMEM_LIMIT = 32 << 20


def _leaky(x):
    return jnp.where(x > 0, x, _NEG_SLOPE * x)


def _first_step():
    return jnp.logical_and(pl.program_id(0) == 0, pl.program_id(1) == 0)


# ---------------------------------------------------------------------------
# Pallas kernels
# ---------------------------------------------------------------------------

def _conv12_kernel(t_ref, w2_ref, b2_ref, w1_ref, b1_ref,
                   z_ref, sc_ref, sum_ref, sq_ref):
    """Fused conv2 (3x3, taps folded into K) + LeakyReLU + BN1 stats, plus the
    conv1 (1x1) shortcut + LeakyReLU computed from the centre tap of the slab.

    t_ref: (1, 9*Cin, T) bf16   w2_ref: (Cout, 9*Cin) bf16   w1_ref: (Cout, Cin) bf16
    z_ref: (1, Cout, T) bf16    sc_ref: (1, Cout, T) f32     sum/sq: (Cout, 1) f32
    """
    @pl.when(_first_step())
    def _():
        sum_ref[...] = jnp.zeros_like(sum_ref)
        sq_ref[...] = jnp.zeros_like(sq_ref)

    t = t_ref[0]                                                  # (9*Cin, T)
    z = jnp.dot(w2_ref[...], t, preferred_element_type=jnp.float32) + b2_ref[...]
    z = _leaky(z)
    z_ref[0] = z.astype(jnp.bfloat16)
    sum_ref[...] += jnp.sum(z, axis=1, keepdims=True)
    sq_ref[...] += jnp.sum(z * z, axis=1, keepdims=True)

    cin = w1_ref.shape[1]
    xc = t[4 * cin:5 * cin, :]                                    # centre tap == x
    s = jnp.dot(w1_ref[...], xc, preferred_element_type=jnp.float32) + b1_ref[...]
    sc_ref[0] = _leaky(s)


def _conv_stats_kernel(t_ref, w_ref, b_ref, z_ref, sum_ref, sq_ref):
    """Generic folded-tap conv + LeakyReLU + BN stats (used for conv3 / conv4)."""
    @pl.when(_first_step())
    def _():
        sum_ref[...] = jnp.zeros_like(sum_ref)
        sq_ref[...] = jnp.zeros_like(sq_ref)

    z = jnp.dot(w_ref[...], t_ref[0], preferred_element_type=jnp.float32) + b_ref[...]
    z = _leaky(z)
    z_ref[0] = z.astype(jnp.bfloat16)
    sum_ref[...] += jnp.sum(z, axis=1, keepdims=True)
    sq_ref[...] += jnp.sum(z * z, axis=1, keepdims=True)


def _conv5_kernel(z1_ref, z2_ref, z3_ref, w_ref, b_ref, z_ref, sum_ref, sq_ref):
    """1x1 conv over the in-kernel concat of the three branch activations.
    BN1/BN2/BN3 are pre-folded into w/b, so raw activations are consumed.
    Fused LeakyReLU + BN4 stats."""
    @pl.when(_first_step())
    def _():
        sum_ref[...] = jnp.zeros_like(sum_ref)
        sq_ref[...] = jnp.zeros_like(sq_ref)

    zc = jnp.concatenate([z1_ref[0], z2_ref[0], z3_ref[0]], axis=0)  # (3*C, T)
    y = jnp.dot(w_ref[...], zc, preferred_element_type=jnp.float32) + b_ref[...]
    y = _leaky(y)
    z_ref[0] = y.astype(jnp.bfloat16)
    sum_ref[...] += jnp.sum(y, axis=1, keepdims=True)
    sq_ref[...] += jnp.sum(y * y, axis=1, keepdims=True)


def _bn_residual_kernel(z_ref, sc_ref, s_ref, t_ref, o_ref):
    """BN4 affine + residual (shortcut) add."""
    o_ref[0] = z_ref[0].astype(jnp.float32) * s_ref[...] + t_ref[...] + sc_ref[0]


# ---------------------------------------------------------------------------
# pallas_call wrappers
# ---------------------------------------------------------------------------

def _hw_tile(hw, bytes_per_col, budget=12 << 20):
    """Largest HW tile (multiple of 128, dividing hw) whose double-buffered
    footprint stays under `budget`; falls back to full HW if not 128-aligned."""
    if hw % 128 == 0:
        for t in (2048, 1024, 512, 256, 128):
            if hw % t == 0 and 2 * bytes_per_col * t <= budget:
                return t
    return hw


def _conv12_call(taps, w2m, b2, w1m, b1):
    N, KC, HW = taps.shape
    C, cin = w1m.shape
    T = _hw_tile(HW, 2 * KC + 2 * C + 4 * C)
    grid = (N, HW // T)
    return pl.pallas_call(
        _conv12_kernel,
        out_shape=(jax.ShapeDtypeStruct((N, C, HW), jnp.bfloat16),
                   jax.ShapeDtypeStruct((N, C, HW), jnp.float32),
                   jax.ShapeDtypeStruct((C, 1), jnp.float32),
                   jax.ShapeDtypeStruct((C, 1), jnp.float32)),
        grid=grid,
        in_specs=[pl.BlockSpec((1, KC, T), lambda n, t: (n, 0, t)),
                  pl.BlockSpec((C, KC), lambda n, t: (0, 0)),
                  pl.BlockSpec((C, 1), lambda n, t: (0, 0)),
                  pl.BlockSpec((C, cin), lambda n, t: (0, 0)),
                  pl.BlockSpec((C, 1), lambda n, t: (0, 0))],
        out_specs=(pl.BlockSpec((1, C, T), lambda n, t: (n, 0, t)),
                   pl.BlockSpec((1, C, T), lambda n, t: (n, 0, t)),
                   pl.BlockSpec((C, 1), lambda n, t: (0, 0)),
                   pl.BlockSpec((C, 1), lambda n, t: (0, 0))),
        compiler_params=pltpu.CompilerParams(
            dimension_semantics=("arbitrary", "arbitrary"),  # stats accumulate across grid
            vmem_limit_bytes=_VMEM_LIMIT),
    )(taps, w2m, b2.reshape(C, 1), w1m, b1.reshape(C, 1))


def _conv_call(taps, wm, b):
    N, KC, HW = taps.shape
    C = wm.shape[0]
    T = _hw_tile(HW, 2 * KC + 2 * C)
    grid = (N, HW // T)
    return pl.pallas_call(
        _conv_stats_kernel,
        out_shape=(jax.ShapeDtypeStruct((N, C, HW), jnp.bfloat16),
                   jax.ShapeDtypeStruct((C, 1), jnp.float32),
                   jax.ShapeDtypeStruct((C, 1), jnp.float32)),
        grid=grid,
        in_specs=[pl.BlockSpec((1, KC, T), lambda n, t: (n, 0, t)),
                  pl.BlockSpec((C, KC), lambda n, t: (0, 0)),
                  pl.BlockSpec((C, 1), lambda n, t: (0, 0))],
        out_specs=(pl.BlockSpec((1, C, T), lambda n, t: (n, 0, t)),
                   pl.BlockSpec((C, 1), lambda n, t: (0, 0)),
                   pl.BlockSpec((C, 1), lambda n, t: (0, 0))),
        compiler_params=pltpu.CompilerParams(
            dimension_semantics=("arbitrary", "arbitrary"),
            vmem_limit_bytes=_VMEM_LIMIT),
    )(taps, wm, b.reshape(C, 1))


def _conv5_call(z1, z2, z3, w5f, b5f):
    N, C, HW = z1.shape
    T = _hw_tile(HW, 3 * 2 * C + 2 * C)
    grid = (N, HW // T)
    return pl.pallas_call(
        _conv5_kernel,
        out_shape=(jax.ShapeDtypeStruct((N, C, HW), jnp.bfloat16),
                   jax.ShapeDtypeStruct((C, 1), jnp.float32),
                   jax.ShapeDtypeStruct((C, 1), jnp.float32)),
        grid=grid,
        in_specs=[pl.BlockSpec((1, C, T), lambda n, t: (n, 0, t)),
                  pl.BlockSpec((1, C, T), lambda n, t: (n, 0, t)),
                  pl.BlockSpec((1, C, T), lambda n, t: (n, 0, t)),
                  pl.BlockSpec((C, 3 * C), lambda n, t: (0, 0)),
                  pl.BlockSpec((C, 1), lambda n, t: (0, 0))],
        out_specs=(pl.BlockSpec((1, C, T), lambda n, t: (n, 0, t)),
                   pl.BlockSpec((C, 1), lambda n, t: (0, 0)),
                   pl.BlockSpec((C, 1), lambda n, t: (0, 0))),
        compiler_params=pltpu.CompilerParams(
            dimension_semantics=("arbitrary", "arbitrary"),
            vmem_limit_bytes=_VMEM_LIMIT),
    )(z1, z2, z3, w5f, b5f.reshape(C, 1))


def _bn_residual_call(z5, shortcut, scale, shift):
    N, C, HW = z5.shape
    T = _hw_tile(HW, 2 * C + 4 * C + 4 * C)
    grid = (N, HW // T)
    return pl.pallas_call(
        _bn_residual_kernel,
        out_shape=jax.ShapeDtypeStruct((N, C, HW), jnp.float32),
        grid=grid,
        in_specs=[pl.BlockSpec((1, C, T), lambda n, t: (n, 0, t)),
                  pl.BlockSpec((1, C, T), lambda n, t: (n, 0, t)),
                  pl.BlockSpec((C, 1), lambda n, t: (0, 0)),
                  pl.BlockSpec((C, 1), lambda n, t: (0, 0))],
        out_specs=pl.BlockSpec((1, C, T), lambda n, t: (n, 0, t)),
        compiler_params=pltpu.CompilerParams(
            dimension_semantics=("parallel", "parallel"),
            vmem_limit_bytes=_VMEM_LIMIT),
    )(z5, shortcut, scale.reshape(C, 1), shift.reshape(C, 1))


# ---------------------------------------------------------------------------
# Glue (pure JAX): im2col tap slabs, BN affine from accumulated stats
# ---------------------------------------------------------------------------

def _im2col(x, offsets_y, offsets_x, pad):
    """x: (N, C, H, W) -> (N, K*C, H*W); taps ordered (dy-major, dx, channel-minor),
    matching weights reshaped with transpose(0,2,3,1)."""
    N, C, H, W = x.shape
    xp = jnp.pad(x, ((0, 0), (0, 0), (pad, pad), (pad, pad)))
    taps = [xp[:, :, dy:dy + H, dx:dx + W].reshape(N, C, H * W)
            for dy in offsets_y for dx in offsets_x]
    return jnp.concatenate(taps, axis=1)


def _bn_affine(ssum, ssq, count, gamma, beta):
    """Training-mode BatchNorm2d affine from accumulated sum / sum-of-squares."""
    mean = ssum[:, 0] / count
    var = jnp.maximum(ssq[:, 0] / count - mean * mean, 0.0)   # biased variance
    scale = gamma * jax.lax.rsqrt(var + _BN_EPS)
    shift = beta - mean * scale
    return scale, shift


# ---------------------------------------------------------------------------
# Forward pass (matches ResBlock1122.forward)
# ---------------------------------------------------------------------------

def resblock1122_forward(params, x):
    N, Cin, H, W = x.shape
    C = params["b2"].shape[0]
    HW = H * W
    cnt = float(N * HW)

    # conv1 (1x1 shortcut) + conv2 (3x3, pad 1) + LeakyReLU + BN1 stats, fused.
    taps = _im2col(x, (0, 1, 2), (0, 1, 2), 1).astype(jnp.bfloat16)
    z2, shortcut, s1, q1 = _conv12_call(taps, params["w2m"], params["b2"],
                                        params["w1m"], params["b1"])
    sc1, sh1 = _bn_affine(s1, q1, cnt, params["g1"], params["be1"])

    # conv3 (3x3, dilation 2, pad 2) on bn1 output + LeakyReLU + BN2 stats.
    z2n = (z2.astype(jnp.float32) * sc1[None, :, None]
           + sh1[None, :, None]).reshape(N, C, H, W)
    taps = _im2col(z2n, (0, 2, 4), (0, 2, 4), 2).astype(jnp.bfloat16)
    z3, s2, q2 = _conv_call(taps, params["w3m"], params["b3"])
    sc2, sh2 = _bn_affine(s2, q2, cnt, params["g2"], params["be2"])

    # conv4 (2x2, dilation 2, pad 1) on bn2 output + LeakyReLU + BN3 stats.
    z3n = (z3.astype(jnp.float32) * sc2[None, :, None]
           + sh2[None, :, None]).reshape(N, C, H, W)
    taps = _im2col(z3n, (0, 2), (0, 2), 1).astype(jnp.bfloat16)
    z4, s3, q3 = _conv_call(taps, params["w4m"], params["b4"])
    sc3, sh3 = _bn_affine(s3, q3, cnt, params["g3"], params["be3"])

    # conv5 (1x1 on concat(bn1, bn2, bn3)); fold BN1-3 into its weights/bias
    # (exact for a 1x1 conv) so normalized branch tensors are never stored.
    scale_cat = jnp.concatenate([sc1, sc2, sc3])
    shift_cat = jnp.concatenate([sh1, sh2, sh3])
    w5f = (params["w5"] * scale_cat[None, :]).astype(jnp.bfloat16)
    b5f = params["b5"] + params["w5"] @ shift_cat
    z5, s4, q4 = _conv5_call(z2, z3, z4, w5f, b5f)
    sc4, sh4 = _bn_affine(s4, q4, cnt, params["g4"], params["be4"])

    # BN4 affine + shortcut residual add.
    # TODO(synk): Dropout2d(p=0.2) is stochastic in training mode; applied here
    # as identity (eval-mode behaviour).
    out = _bn_residual_call(z5, shortcut, sc4, sh4)
    return out.reshape(N, C, H, W)


# ---------------------------------------------------------------------------
# Parameter init (deterministic, synthetic; PyTorch BN defaults gamma=1 beta=0)
# ---------------------------------------------------------------------------

def init_params(key, in_filters, out_filters):
    ks = jax.random.split(key, 10)
    C = out_filters

    def conv_w(k, co, ci, kh, kw):
        std = (ci * kh * kw) ** -0.5
        return jax.random.normal(k, (co, ci, kh, kw), jnp.float32) * std

    def bias(k, co):
        return jax.random.normal(k, (co,), jnp.float32) * 0.01

    def fold(w):   # (Cout, Cin, kh, kw) -> (Cout, kh*kw*Cin), tap-major, channel-minor
        co, ci, kh, kw = w.shape
        return jnp.transpose(w, (0, 2, 3, 1)).reshape(co, kh * kw * ci)

    w1 = conv_w(ks[0], C, in_filters, 1, 1)
    w2 = conv_w(ks[1], C, in_filters, 3, 3)
    w3 = conv_w(ks[2], C, C, 3, 3)
    w4 = conv_w(ks[3], C, C, 2, 2)
    w5 = conv_w(ks[4], C, 3 * C, 1, 1)

    ones = jnp.ones((C,), jnp.float32)
    zeros = jnp.zeros((C,), jnp.float32)
    return dict(
        w1m=w1[:, :, 0, 0].astype(jnp.bfloat16), b1=bias(ks[5], C),
        w2m=fold(w2).astype(jnp.bfloat16),       b2=bias(ks[6], C),
        w3m=fold(w3).astype(jnp.bfloat16),       b3=bias(ks[7], C),
        w4m=fold(w4).astype(jnp.bfloat16),       b4=bias(ks[8], C),
        w5=w5[:, :, 0, 0],                       b5=bias(ks[9], C),
        g1=ones, be1=zeros, g2=ones, be2=zeros,
        g3=ones, be3=zeros, g4=ones, be4=zeros,
    )


if __name__ == "__main__":
    N, IN_F, OUT_F, H, W = 2, 16, 32, 16, 16

    root = jax.random.PRNGKey(0)
    kp, kx = jax.random.split(root)
    params = init_params(kp, IN_F, OUT_F)
    x = jax.random.normal(kx, (N, IN_F, H, W), jnp.float32)

    fwd = jax.jit(resblock1122_forward)
    out = jax.block_until_ready(fwd(params, x))

    assert out.shape == (N, OUT_F, H, W), out.shape
    assert bool(jnp.all(jnp.isfinite(out)))
    print("KERNEL_OK")
</pallas_src>

<mosaic_0001>
module attributes {stable_mosaic.version = 11 : i64} {
  func.func @_conv12_kernel(%arg0: i32, %arg1: i32, %arg2: memref<1x144x256xbf16, #tpu.memory_space<vmem>>, %arg3: memref<32x144xbf16, #tpu.memory_space<vmem>>, %arg4: memref<32x1xf32, #tpu.memory_space<vmem>>, %arg5: memref<32x16xbf16, #tpu.memory_space<vmem>>, %arg6: memref<32x1xf32, #tpu.memory_space<vmem>>, %arg7: memref<1x32x256xbf16, #tpu.memory_space<vmem>>, %arg8: memref<1x32x256xf32, #tpu.memory_space<vmem>>, %arg9: memref<32x1xf32, #tpu.memory_space<vmem>>, %arg10: memref<32x1xf32, #tpu.memory_space<vmem>>) attributes {dimension_semantics = [#tpu.dimension_semantics<arbitrary>, #tpu.dimension_semantics<arbitrary>], iteration_bounds = array<i64: 2, 1>, scalar_prefetch = 0 : i64, scratch_operands = 0 : i64, tpu.core_type = #tpu.core_type<tc>, window_params = [{transform_indices = @transform_0, window_bounds = array<i64: 1, 144, 256>}, {pipeline_mode = #tpu.pipeline_mode<synchronous>, transform_indices = @transform_1, window_bounds = array<i64: 32, 144>}, {pipeline_mode = #tpu.pipeline_mode<synchronous>, transform_indices = @transform_2, window_bounds = array<i64: 32, 1>}, {pipeline_mode = #tpu.pipeline_mode<synchronous>, transform_indices = @transform_3, window_bounds = array<i64: 32, 16>}, {pipeline_mode = #tpu.pipeline_mode<synchronous>, transform_indices = @transform_4, window_bounds = array<i64: 32, 1>}, {transform_indices = @transform_5, window_bounds = array<i64: 1, 32, 256>}, {transform_indices = @transform_6, window_bounds = array<i64: 1, 32, 256>}, {pipeline_mode = #tpu.pipeline_mode<synchronous>, transform_indices = @transform_7, window_bounds = array<i64: 32, 1>}, {pipeline_mode = #tpu.pipeline_mode<synchronous>, transform_indices = @transform_8, window_bounds = array<i64: 32, 1>}]} {
    %c0_i32 = arith.constant 0 : i32
    %0 = arith.cmpi eq, %arg0, %c0_i32 : i32
    %c0_i32_0 = arith.constant 0 : i32
    %1 = arith.cmpi eq, %arg1, %c0_i32_0 : i32
    %2 = arith.andi %0, %1 : i1
    %3 = arith.extui %2 : i1 to i32
    %c0_i32_1 = arith.constant 0 : i32
    %4 = arith.cmpi ne, %3, %c0_i32_1 : i32
    scf.if %4 {
      %cst_33 = arith.constant 0.000000e+00 : f32
      %46 = vector.broadcast %cst_33 : f32 to vector<32x1xf32>
      %c0_34 = arith.constant 0 : index
      %c0_35 = arith.constant 0 : index
      %47 = vector.load %arg9[%c0_34, %c0_35] : memref<32x1xf32, #tpu.memory_space<vmem>>, vector<32x1xf32>
      tpu.vector_store %arg9[%c0_34, %c0_35], %46 {strides = array<i32>} : memref<32x1xf32, #tpu.memory_space<vmem>>, vector<32x1xf32>,
      %cst_36 = arith.constant 0.000000e+00 : f32
      %48 = vector.broadcast %cst_36 : f32 to vector<32x1xf32>
      %c0_37 = arith.constant 0 : index
      %c0_38 = arith.constant 0 : index
      %49 = vector.load %arg10[%c0_37, %c0_38] : memref<32x1xf32, #tpu.memory_space<vmem>>, vector<32x1xf32>
      tpu.vector_store %arg10[%c0_37, %c0_38], %48 {strides = array<i32>} : memref<32x1xf32, #tpu.memory_space<vmem>>, vector<32x1xf32>,
    } else {
    }
    %c0 = arith.constant 0 : index
    %c0_2 = arith.constant 0 : index
    %c0_3 = arith.constant 0 : index
    %5 = vector.load %arg2[%c0, %c0_2, %c0_3] : memref<1x144x256xbf16, #tpu.memory_space<vmem>>, vector<1x144x256xbf16>
    %6 = vector.shape_cast %5 : vector<1x144x256xbf16> to vector<144x256xbf16>
    %c0_4 = arith.constant 0 : index
    %c0_5 = arith.constant 0 : index
    %7 = vector.load %arg3[%c0_4, %c0_5] : memref<32x144xbf16, #tpu.memory_space<vmem>>, vector<32x144xbf16>
    %cst = arith.constant dense<0.000000e+00> : vector<32x256xf32>
    %8 = tpu.matmul %7, %6, %cst {dimension_numbers = #tpu.dot_dimension_numbers<[1], [0], [0], [1], [0, 0, 1, 1], [], []>} : vector<32x144xbf16>, vector<144x256xbf16>, vector<32x256xf32> -> vector<32x256xf32>
    %c0_6 = arith.constant 0 : index
    %c0_7 = arith.constant 0 : index
    %9 = vector.load %arg4[%c0_6, %c0_7] : memref<32x1xf32, #tpu.memory_space<vmem>>, vector<32x1xf32>
    %10 = vector.broadcast %9 : vector<32x1xf32> to vector<32x256xf32>
    %11 = arith.addf %8, %10 : vector<32x256xf32>
    %cst_8 = arith.constant 0.000000e+00 : f32
    %12 = vector.broadcast %cst_8 : f32 to vector<32x256xf32>
    %13 = arith.cmpf ogt, %11, %12 : vector<32x256xf32>
    %cst_9 = arith.constant 0.00999999977 : f32
    %14 = vector.broadcast %cst_9 : f32 to vector<32x256xf32>
    %15 = arith.mulf %14, %11 : vector<32x256xf32>
    %16 = arith.select %13, %11, %15 : vector<32x256xi1>, vector<32x256xf32>
    %17 = arith.truncf %16 : vector<32x256xf32> to vector<32x256xbf16>
    %c0_10 = arith.constant 0 : index
    %c0_11 = arith.constant 0 : index
    %c0_12 = arith.constant 0 : index
    %18 = vector.load %arg7[%c0_10, %c0_11, %c0_12] : memref<1x32x256xbf16, #tpu.memory_space<vmem>>, vector<1x32x256xbf16>
    %19 = vector.shape_cast %18 : vector<1x32x256xbf16> to vector<32x256xbf16>
    %20 = vector.shape_cast %17 : vector<32x256xbf16> to vector<1x32x256xbf16>
    tpu.vector_store %arg7[%c0_10, %c0_11, %c0_12], %20 {strides = array<i32>} : memref<1x32x256xbf16, #tpu.memory_space<vmem>>, vector<1x32x256xbf16>,
    %c0_13 = arith.constant 0 : index
    %c0_14 = arith.constant 0 : index
    %21 = vector.load %arg9[%c0_13, %c0_14] : memref<32x1xf32, #tpu.memory_space<vmem>>, vector<32x1xf32>
    %cst_15 = arith.constant dense<0.000000e+00> : vector<32xf32>
    %22 = vector.multi_reduction <add>, %16, %cst_15 [1] : vector<32x256xf32> to vector<32xf32>
    %23 = vector.shape_cast %22 : vector<32xf32> to vector<32x1xf32>
    %24 = arith.addf %21, %23 : vector<32x1xf32>
    %c0_16 = arith.constant 0 : index
    %c0_17 = arith.constant 0 : index
    %25 = vector.load %arg9[%c0_16, %c0_17] : memref<32x1xf32, #tpu.memory_space<vmem>>, vector<32x1xf32>
    tpu.vector_store %arg9[%c0_16, %c0_17], %24 {strides = array<i32>} : memref<32x1xf32, #tpu.memory_space<vmem>>, vector<32x1xf32>,
    %c0_18 = arith.constant 0 : index
    %c0_19 = arith.constant 0 : index
    %26 = vector.load %arg10[%c0_18, %c0_19] : memref<32x1xf32, #tpu.memory_space<vmem>>, vector<32x1xf32>
    %27 = arith.mulf %16, %16 : vector<32x256xf32>
    %cst_20 = arith.constant dense<0.000000e+00> : vector<32xf32>
    %28 = vector.multi_reduction <add>, %27, %cst_20 [1] : vector<32x256xf32> to vector<32xf32>
    %29 = vector.shape_cast %28 : vector<32xf32> to vector<32x1xf32>
    %30 = arith.addf %26, %29 : vector<32x1xf32>
    %c0_21 = arith.constant 0 : index
    %c0_22 = arith.constant 0 : index
    %31 = vector.load %arg10[%c0_21, %c0_22] : memref<32x1xf32, #tpu.memory_space<vmem>>, vector<32x1xf32>
    tpu.vector_store %arg10[%c0_21, %c0_22], %30 {strides = array<i32>} : memref<32x1xf32, #tpu.memory_space<vmem>>, vector<32x1xf32>,
    %32 = vector.extract_strided_slice %6 {offsets = [64, 0], sizes = [16, 256], strides = [1, 1]} : vector<144x256xbf16> to vector<16x256xbf16>
    %c0_23 = arith.constant 0 : index
    %c0_24 = arith.constant 0 : index
    %33 = vector.load %arg5[%c0_23, %c0_24] : memref<32x16xbf16, #tpu.memory_space<vmem>>, vector<32x16xbf16>
    %cst_25 = arith.constant dense<0.000000e+00> : vector<32x256xf32>
    %34 = tpu.matmul %33, %32, %cst_25 {dimension_numbers = #tpu.dot_dimension_numbers<[1], [0], [0], [1], [0, 0, 1, 1], [], []>} : vector<32x16xbf16>, vector<16x256xbf16>, vector<32x256xf32> -> vector<32x256xf32>
    %c0_26 = arith.constant 0 : index
    %c0_27 = arith.constant 0 : index
    %35 = vector.load %arg6[%c0_26, %c0_27] : memref<32x1xf32, #tpu.memory_space<vmem>>, vector<32x1xf32>
    %36 = vector.broadcast %35 : vector<32x1xf32> to vector<32x256xf32>
    %37 = arith.addf %34, %36 : vector<32x256xf32>
    %cst_28 = arith.constant 0.000000e+00 : f32
    %38 = vector.broadcast %cst_28 : f32 to vector<32x256xf32>
    %39 = arith.cmpf ogt, %37, %38 : vector<32x256xf32>
    %cst_29 = arith.constant 0.00999999977 : f32
    %40 = vector.broadcast %cst_29 : f32 to vector<32x256xf32>
    %41 = arith.mulf %40, %37 : vector<32x256xf32>
    %42 = arith.select %39, %37, %41 : vector<32x256xi1>, vector<32x256xf32>
    %c0_30 = arith.constant 0 : index
    %c0_31 = arith.constant 0 : index
    %c0_32 = arith.constant 0 : index
    %43 = vector.load %arg8[%c0_30, %c0_31, %c0_32] : memref<1x32x256xf32, #tpu.memory_space<vmem>>, vector<1x32x256xf32>
    %44 = vector.shape_cast %43 : vector<1x32x256xf32> to vector<32x256xf32>
    %45 = vector.shape_cast %42 : vector<32x256xf32> to vector<1x32x256xf32>
    tpu.vector_store %arg8[%c0_30, %c0_31, %c0_32], %45 {strides = array<i32>} : memref<1x32x256xf32, #tpu.memory_space<vmem>>, vector<1x32x256xf32>,
    return
  }
  func.func @transform_0(%arg0: i32, %arg1: i32) -> (i32, i32, i32) {
    %c0_i32 = arith.constant 0 : i32
    %c0_i32_0 = arith.constant 0 : i32
    return %arg0, %c0_i32, %arg1 : i32, i32, i32
  }
  func.func @transform_1(%arg0: i32, %arg1: i32) -> (i32, i32) {
    %c0_i32 = arith.constant 0 : i32
    %c0_i32_0 = arith.constant 0 : i32
    %c0_i32_1 = arith.constant 0 : i32
    return %c0_i32, %c0_i32_0 : i32, i32
  }
  func.func @transform_2(%arg0: i32, %arg1: i32) -> (i32, i32) {
    %c0_i32 = arith.constant 0 : i32
    %c0_i32_0 = arith.constant 0 : i32
    %c0_i32_1 = arith.constant 0 : i32
    return %c0_i32, %c0_i32_0 : i32, i32
  }
  func.func @transform_3(%arg0: i32, %arg1: i32) -> (i32, i32) {
    %c0_i32 = arith.constant 0 : i32
    %c0_i32_0 = arith.constant 0 : i32
    %c0_i32_1 = arith.constant 0 : i32
    return %c0_i32, %c0_i32_0 : i32, i32
  }
  func.func @transform_4(%arg0: i32, %arg1: i32) -> (i32, i32) {
    %c0_i32 = arith.constant 0 : i32
    %c0_i32_0 = arith.constant 0 : i32
    %c0_i32_1 = arith.constant 0 : i32
    return %c0_i32, %c0_i32_0 : i32, i32
  }
  func.func @transform_5(%arg0: i32, %arg1: i32) -> (i32, i32, i32) {
    %c0_i32 = arith.constant 0 : i32
    %c0_i32_0 = arith.constant 0 : i32
    return %arg0, %c0_i32, %arg1 : i32, i32, i32
  }
  func.func @transform_6(%arg0: i32, %arg1: i32) -> (i32, i32, i32) {
    %c0_i32 = arith.constant 0 : i32
    %c0_i32_0 = arith.constant 0 : i32
    return %arg0, %c0_i32, %arg1 : i32, i32, i32
  }
  func.func @transform_7(%arg0: i32, %arg1: i32) -> (i32, i32) {
    %c0_i32 = arith.constant 0 : i32
    %c0_i32_0 = arith.constant 0 : i32
    %c0_i32_1 = arith.constant 0 : i32
    return %c0_i32, %c0_i32_0 : i32, i32
  }
  func.func @transform_8(%arg0: i32, %arg1: i32) -> (i32, i32) {
    %c0_i32 = arith.constant 0 : i32
    %c0_i32_0 = arith.constant 0 : i32
    %c0_i32_1 = arith.constant 0 : i32
    return %c0_i32, %c0_i32_0 : i32, i32
  }
}

module attributes {stable_mosaic.version = 11 : i64} {
  func.func @_conv_stats_kernel(%arg0: i32, %arg1: i32, %arg2: memref<1x288x256xbf16, #tpu.memory_space<vmem>>, %arg3: memref<32x288xbf16, #tpu.memory_space<vmem>>, %arg4: memref<32x1xf32, #tpu.memory_space<vmem>>, %arg5: memref<1x32x256xbf16, #tpu.memory_space<vmem>>, %arg6: memref<32x1xf32, #tpu.memory_space<vmem>>, %arg7: memref<32x1xf32, #tpu.memory_space<vmem>>) attributes {dimension_semantics = [#tpu.dimension_semantics<arbitrary>, #tpu.dimension_semantics<arbitrary>], iteration_bounds = array<i64: 2, 1>, scalar_prefetch = 0 : i64, scratch_operands = 0 : i64, tpu.core_type = #tpu.core_type<tc>, window_params = [{transform_indices = @transform_0, window_bounds = array<i64: 1, 288, 256>}, {pipeline_mode = #tpu.pipeline_mode<synchronous>, transform_indices = @transform_1, window_bounds = array<i64: 32, 288>}, {pipeline_mode = #tpu.pipeline_mode<synchronous>, transform_indices = @transform_2, window_bounds = array<i64: 32, 1>}, {transform_indices = @transform_3, window_bounds = array<i64: 1, 32, 256>}, {pipeline_mode = #tpu.pipeline_mode<synchronous>, transform_indices = @transform_4, window_bounds = array<i64: 32, 1>}, {pipeline_mode = #tpu.pipeline_mode<synchronous>, transform_indices = @transform_5, window_bounds = array<i64: 32, 1>}]} {
    %c0_i32 = arith.constant 0 : i32
    %0 = arith.cmpi eq, %arg0, %c0_i32 : i32
    %c0_i32_0 = arith.constant 0 : i32
    %1 = arith.cmpi eq, %arg1, %c0_i32_0 : i32
    %2 = arith.andi %0, %1 : i1
    %3 = arith.extui %2 : i1 to i32
    %c0_i32_1 = arith.constant 0 : i32
    %4 = arith.cmpi ne, %3, %c0_i32_1 : i32
    scf.if %4 {
      %cst_23 = arith.constant 0.000000e+00 : f32
      %32 = vector.broadcast %cst_23 : f32 to vector<32x1xf32>
      %c0_24 = arith.constant 0 : index
      %c0_25 = arith.constant 0 : index
      %33 = vector.load %arg6[%c0_24, %c0_25] : memref<32x1xf32, #tpu.memory_space<vmem>>, vector<32x1xf32>
      tpu.vector_store %arg6[%c0_24, %c0_25], %32 {strides = array<i32>} : memref<32x1xf32, #tpu.memory_space<vmem>>, vector<32x1xf32>,
      %cst_26 = arith.constant 0.000000e+00 : f32
      %34 = vector.broadcast %cst_26 : f32 to vector<32x1xf32>
      %c0_27 = arith.constant 0 : index
      %c0_28 = arith.constant 0 : index
      %35 = vector.load %arg7[%c0_27, %c0_28] : memref<32x1xf32, #tpu.memory_space<vmem>>, vector<32x1xf32>
      tpu.vector_store %arg7[%c0_27, %c0_28], %34 {strides = array<i32>} : memref<32x1xf32, #tpu.memory_space<vmem>>, vector<32x1xf32>,
    } else {
    }
    %c0 = arith.constant 0 : index
    %c0_2 = arith.constant 0 : index
    %5 = vector.load %arg3[%c0, %c0_2] : memref<32x288xbf16, #tpu.memory_space<vmem>>, vector<32x288xbf16>
    %c0_3 = arith.constant 0 : index
    %c0_4 = arith.constant 0 : index
    %c0_5 = arith.constant 0 : index
    %6 = vector.load %arg2[%c0_3, %c0_4, %c0_5] : memref<1x288x256xbf16, #tpu.memory_space<vmem>>, vector<1x288x256xbf16>
    %7 = vector.shape_cast %6 : vector<1x288x256xbf16> to vector<288x256xbf16>
    %cst = arith.constant dense<0.000000e+00> : vector<32x256xf32>
    %8 = tpu.matmul %5, %7, %cst {dimension_numbers = #tpu.dot_dimension_numbers<[1], [0], [0], [1], [0, 0, 1, 1], [], []>} : vector<32x288xbf16>, vector<288x256xbf16>, vector<32x256xf32> -> vector<32x256xf32>
    %c0_6 = arith.constant 0 : index
    %c0_7 = arith.constant 0 : index
    %9 = vector.load %arg4[%c0_6, %c0_7] : memref<32x1xf32, #tpu.memory_space<vmem>>, vector<32x1xf32>
    %10 = vector.broadcast %9 : vector<32x1xf32> to vector<32x256xf32>
    %11 = arith.addf %8, %10 : vector<32x256xf32>
    %cst_8 = arith.constant 0.000000e+00 : f32
    %12 = vector.broadcast %cst_8 : f32 to vector<32x256xf32>
    %13 = arith.cmpf ogt, %11, %12 : vector<32x256xf32>
    %cst_9 = arith.constant 0.00999999977 : f32
    %14 = vector.broadcast %cst_9 : f32 to vector<32x256xf32>
    %15 = arith.mulf %14, %11 : vector<32x256xf32>
    %16 = arith.select %13, %11, %15 : vector<32x256xi1>, vector<32x256xf32>
    %17 = arith.truncf %16 : vector<32x256xf32> to vector<32x256xbf16>
    %c0_10 = arith.constant 0 : index
    %c0_11 = arith.constant 0 : index
    %c0_12 = arith.constant 0 : index
    %18 = vector.load %arg5[%c0_10, %c0_11, %c0_12] : memref<1x32x256xbf16, #tpu.memory_space<vmem>>, vector<1x32x256xbf16>
    %19 = vector.shape_cast %18 : vector<1x32x256xbf16> to vector<32x256xbf16>
    %20 = vector.shape_cast %17 : vector<32x256xbf16> to vector<1x32x256xbf16>
    tpu.vector_store %arg5[%c0_10, %c0_11, %c0_12], %20 {strides = array<i32>} : memref<1x32x256xbf16, #tpu.memory_space<vmem>>, vector<1x32x256xbf16>,
    %c0_13 = arith.constant 0 : index
    %c0_14 = arith.constant 0 : index
    %21 = vector.load %arg6[%c0_13, %c0_14] : memref<32x1xf32, #tpu.memory_space<vmem>>, vector<32x1xf32>
    %cst_15 = arith.constant dense<0.000000e+00> : vector<32xf32>
    %22 = vector.multi_reduction <add>, %16, %cst_15 [1] : vector<32x256xf32> to vector<32xf32>
    %23 = vector.shape_cast %22 : vector<32xf32> to vector<32x1xf32>
    %24 = arith.addf %21, %23 : vector<32x1xf32>
    %c0_16 = arith.constant 0 : index
    %c0_17 = arith.constant 0 : index
    %25 = vector.load %arg6[%c0_16, %c0_17] : memref<32x1xf32, #tpu.memory_space<vmem>>, vector<32x1xf32>
    tpu.vector_store %arg6[%c0_16, %c0_17], %24 {strides = array<i32>} : memref<32x1xf32, #tpu.memory_space<vmem>>, vector<32x1xf32>,
    %c0_18 = arith.constant 0 : index
    %c0_19 = arith.constant 0 : index
    %26 = vector.load %arg7[%c0_18, %c0_19] : memref<32x1xf32, #tpu.memory_space<vmem>>, vector<32x1xf32>
    %27 = arith.mulf %16, %16 : vector<32x256xf32>
    %cst_20 = arith.constant dense<0.000000e+00> : vector<32xf32>
    %28 = vector.multi_reduction <add>, %27, %cst_20 [1] : vector<32x256xf32> to vector<32xf32>
    %29 = vector.shape_cast %28 : vector<32xf32> to vector<32x1xf32>
    %30 = arith.addf %26, %29 : vector<32x1xf32>
    %c0_21 = arith.constant 0 : index
    %c0_22 = arith.constant 0 : index
    %31 = vector.load %arg7[%c0_21, %c0_22] : memref<32x1xf32, #tpu.memory_space<vmem>>, vector<32x1xf32>
    tpu.vector_store %arg7[%c0_21, %c0_22], %30 {strides = array<i32>} : memref<32x1xf32, #tpu.memory_space<vmem>>, vector<32x1xf32>,
    return
  }
  func.func @transform_0(%arg0: i32, %arg1: i32) -> (i32, i32, i32) {
    %c0_i32 = arith.constant 0 : i32
    %c0_i32_0 = arith.constant 0 : i32
    return %arg0, %c0_i32, %arg1 : i32, i32, i32
  }
  func.func @transform_1(%arg0: i32, %arg1: i32) -> (i32, i32) {
    %c0_i32 = arith.constant 0 : i32
    %c0_i32_0 = arith.constant 0 : i32
    %c0_i32_1 = arith.constant 0 : i32
    return %c0_i32, %c0_i32_0 : i32, i32
  }
  func.func @transform_2(%arg0: i32, %arg1: i32) -> (i32, i32) {
    %c0_i32 = arith.constant 0 : i32
    %c0_i32_0 = arith.constant 0 : i32
    %c0_i32_1 = arith.constant 0 : i32
    return %c0_i32, %c0_i32_0 : i32, i32
  }
  func.func @transform_3(%arg0: i32, %arg1: i32) -> (i32, i32, i32) {
    %c0_i32 = arith.constant 0 : i32
    %c0_i32_0 = arith.constant 0 : i32
    return %arg0, %c0_i32, %arg1 : i32, i32, i32
  }
  func.func @transform_4(%arg0: i32, %arg1: i32) -> (i32, i32) {
    %c0_i32 = arith.constant 0 : i32
    %c0_i32_0 = arith.constant 0 : i32
    %c0_i32_1 = arith.constant 0 : i32
    return %c0_i32, %c0_i32_0 : i32, i32
  }
  func.func @transform_5(%arg0: i32, %arg1: i32) -> (i32, i32) {
    %c0_i32 = arith.constant 0 : i32
    %c0_i32_0 = arith.constant 0 : i32
    %c0_i32_1 = arith.constant 0 : i32
    return %c0_i32, %c0_i32_0 : i32, i32
  }
}

module attributes {stable_mosaic.version = 11 : i64} {
  func.func @_conv_stats_kernel(%arg0: i32, %arg1: i32, %arg2: memref<1x128x256xbf16, #tpu.memory_space<vmem>>, %arg3: memref<32x128xbf16, #tpu.memory_space<vmem>>, %arg4: memref<32x1xf32, #tpu.memory_space<vmem>>, %arg5: memref<1x32x256xbf16, #tpu.memory_space<vmem>>, %arg6: memref<32x1xf32, #tpu.memory_space<vmem>>, %arg7: memref<32x1xf32, #tpu.memory_space<vmem>>) attributes {dimension_semantics = [#tpu.dimension_semantics<arbitrary>, #tpu.dimension_semantics<arbitrary>], iteration_bounds = array<i64: 2, 1>, scalar_prefetch = 0 : i64, scratch_operands = 0 : i64, tpu.core_type = #tpu.core_type<tc>, window_params = [{transform_indices = @transform_0, window_bounds = array<i64: 1, 128, 256>}, {pipeline_mode = #tpu.pipeline_mode<synchronous>, transform_indices = @transform_1, window_bounds = array<i64: 32, 128>}, {pipeline_mode = #tpu.pipeline_mode<synchronous>, transform_indices = @transform_2, window_bounds = array<i64: 32, 1>}, {transform_indices = @transform_3, window_bounds = array<i64: 1, 32, 256>}, {pipeline_mode = #tpu.pipeline_mode<synchronous>, transform_indices = @transform_4, window_bounds = array<i64: 32, 1>}, {pipeline_mode = #tpu.pipeline_mode<synchronous>, transform_indices = @transform_5, window_bounds = array<i64: 32, 1>}]} {
    %c0_i32 = arith.constant 0 : i32
    %0 = arith.cmpi eq, %arg0, %c0_i32 : i32
    %c0_i32_0 = arith.constant 0 : i32
    %1 = arith.cmpi eq, %arg1, %c0_i32_0 : i32
    %2 = arith.andi %0, %1 : i1
    %3 = arith.extui %2 : i1 to i32
    %c0_i32_1 = arith.constant 0 : i32
    %4 = arith.cmpi ne, %3, %c0_i32_1 : i32
    scf.if %4 {
      %cst_23 = arith.constant 0.000000e+00 : f32
      %32 = vector.broadcast %cst_23 : f32 to vector<32x1xf32>
      %c0_24 = arith.constant 0 : index
      %c0_25 = arith.constant 0 : index
      %33 = vector.load %arg6[%c0_24, %c0_25] : memref<32x1xf32, #tpu.memory_space<vmem>>, vector<32x1xf32>
      tpu.vector_store %arg6[%c0_24, %c0_25], %32 {strides = array<i32>} : memref<32x1xf32, #tpu.memory_space<vmem>>, vector<32x1xf32>,
      %cst_26 = arith.constant 0.000000e+00 : f32
      %34 = vector.broadcast %cst_26 : f32 to vector<32x1xf32>
      %c0_27 = arith.constant 0 : index
      %c0_28 = arith.constant 0 : index
      %35 = vector.load %arg7[%c0_27, %c0_28] : memref<32x1xf32, #tpu.memory_space<vmem>>, vector<32x1xf32>
      tpu.vector_store %arg7[%c0_27, %c0_28], %34 {strides = array<i32>} : memref<32x1xf32, #tpu.memory_space<vmem>>, vector<32x1xf32>,
    } else {
    }
    %c0 = arith.constant 0 : index
    %c0_2 = arith.constant 0 : index
    %5 = vector.load %arg3[%c0, %c0_2] : memref<32x128xbf16, #tpu.memory_space<vmem>>, vector<32x128xbf16>
    %c0_3 = arith.constant 0 : index
    %c0_4 = arith.constant 0 : index
    %c0_5 = arith.constant 0 : index
    %6 = vector.load %arg2[%c0_3, %c0_4, %c0_5] : memref<1x128x256xbf16, #tpu.memory_space<vmem>>, vector<1x128x256xbf16>
    %7 = vector.shape_cast %6 : vector<1x128x256xbf16> to vector<128x256xbf16>
    %cst = arith.constant dense<0.000000e+00> : vector<32x256xf32>
    %8 = tpu.matmul %5, %7, %cst {dimension_numbers = #tpu.dot_dimension_numbers<[1], [0], [0], [1], [0, 0, 1, 1], [], []>} : vector<32x128xbf16>, vector<128x256xbf16>, vector<32x256xf32> -> vector<32x256xf32>
    %c0_6 = arith.constant 0 : index
    %c0_7 = arith.constant 0 : index
    %9 = vector.load %arg4[%c0_6, %c0_7] : memref<32x1xf32, #tpu.memory_space<vmem>>, vector<32x1xf32>
    %10 = vector.broadcast %9 : vector<32x1xf32> to vector<32x256xf32>
    %11 = arith.addf %8, %10 : vector<32x256xf32>
    %cst_8 = arith.constant 0.000000e+00 : f32
    %12 = vector.broadcast %cst_8 : f32 to vector<32x256xf32>
    %13 = arith.cmpf ogt, %11, %12 : vector<32x256xf32>
    %cst_9 = arith.constant 0.00999999977 : f32
    %14 = vector.broadcast %cst_9 : f32 to vector<32x256xf32>
    %15 = arith.mulf %14, %11 : vector<32x256xf32>
    %16 = arith.select %13, %11, %15 : vector<32x256xi1>, vector<32x256xf32>
    %17 = arith.truncf %16 : vector<32x256xf32> to vector<32x256xbf16>
    %c0_10 = arith.constant 0 : index
    %c0_11 = arith.constant 0 : index
    %c0_12 = arith.constant 0 : index
    %18 = vector.load %arg5[%c0_10, %c0_11, %c0_12] : memref<1x32x256xbf16, #tpu.memory_space<vmem>>, vector<1x32x256xbf16>
    %19 = vector.shape_cast %18 : vector<1x32x256xbf16> to vector<32x256xbf16>
    %20 = vector.shape_cast %17 : vector<32x256xbf16> to vector<1x32x256xbf16>
    tpu.vector_store %arg5[%c0_10, %c0_11, %c0_12], %20 {strides = array<i32>} : memref<1x32x256xbf16, #tpu.memory_space<vmem>>, vector<1x32x256xbf16>,
    %c0_13 = arith.constant 0 : index
    %c0_14 = arith.constant 0 : index
    %21 = vector.load %arg6[%c0_13, %c0_14] : memref<32x1xf32, #tpu.memory_space<vmem>>, vector<32x1xf32>
    %cst_15 = arith.constant dense<0.000000e+00> : vector<32xf32>
    %22 = vector.multi_reduction <add>, %16, %cst_15 [1] : vector<32x256xf32> to vector<32xf32>
    %23 = vector.shape_cast %22 : vector<32xf32> to vector<32x1xf32>
    %24 = arith.addf %21, %23 : vector<32x1xf32>
    %c0_16 = arith.constant 0 : index
    %c0_17 = arith.constant 0 : index
    %25 = vector.load %arg6[%c0_16, %c0_17] : memref<32x1xf32, #tpu.memory_space<vmem>>, vector<32x1xf32>
    tpu.vector_store %arg6[%c0_16, %c0_17], %24 {strides = array<i32>} : memref<32x1xf32, #tpu.memory_space<vmem>>, vector<32x1xf32>,
    %c0_18 = arith.constant 0 : index
    %c0_19 = arith.constant 0 : index
    %26 = vector.load %arg7[%c0_18, %c0_19] : memref<32x1xf32, #tpu.memory_space<vmem>>, vector<32x1xf32>
    %27 = arith.mulf %16, %16 : vector<32x256xf32>
    %cst_20 = arith.constant dense<0.000000e+00> : vector<32xf32>
    %28 = vector.multi_reduction <add>, %27, %cst_20 [1] : vector<32x256xf32> to vector<32xf32>
    %29 = vector.shape_cast %28 : vector<32xf32> to vector<32x1xf32>
    %30 = arith.addf %26, %29 : vector<32x1xf32>
    %c0_21 = arith.constant 0 : index
    %c0_22 = arith.constant 0 : index
    %31 = vector.load %arg7[%c0_21, %c0_22] : memref<32x1xf32, #tpu.memory_space<vmem>>, vector<32x1xf32>
    tpu.vector_store %arg7[%c0_21, %c0_22], %30 {strides = array<i32>} : memref<32x1xf32, #tpu.memory_space<vmem>>, vector<32x1xf32>,
    return
  }
  func.func @transform_0(%arg0: i32, %arg1: i32) -> (i32, i32, i32) {
    %c0_i32 = arith.constant 0 : i32
    %c0_i32_0 = arith.constant 0 : i32
    return %arg0, %c0_i32, %arg1 : i32, i32, i32
  }
  func.func @transform_1(%arg0: i32, %arg1: i32) -> (i32, i32) {
    %c0_i32 = arith.constant 0 : i32
    %c0_i32_0 = arith.constant 0 : i32
    %c0_i32_1 = arith.constant 0 : i32
    return %c0_i32, %c0_i32_0 : i32, i32
  }
  func.func @transform_2(%arg0: i32, %arg1: i32) -> (i32, i32) {
    %c0_i32 = arith.constant 0 : i32
    %c0_i32_0 = arith.constant 0 : i32
    %c0_i32_1 = arith.constant 0 : i32
    return %c0_i32, %c0_i32_0 : i32, i32
  }
  func.func @transform_3(%arg0: i32, %arg1: i32) -> (i32, i32, i32) {
    %c0_i32 = arith.constant 0 : i32
    %c0_i32_0 = arith.constant 0 : i32
    return %arg0, %c0_i32, %arg1 : i32, i32, i32
  }
  func.func @transform_4(%arg0: i32, %arg1: i32) -> (i32, i32) {
    %c0_i32 = arith.constant 0 : i32
    %c0_i32_0 = arith.constant 0 : i32
    %c0_i32_1 = arith.constant 0 : i32
    return %c0_i32, %c0_i32_0 : i32, i32
  }
  func.func @transform_5(%arg0: i32, %arg1: i32) -> (i32, i32) {
    %c0_i32 = arith.constant 0 : i32
    %c0_i32_0 = arith.constant 0 : i32
    %c0_i32_1 = arith.constant 0 : i32
    return %c0_i32, %c0_i32_0 : i32, i32
  }
}

module attributes {stable_mosaic.version = 11 : i64} {
  func.func @_conv5_kernel(%arg0: i32, %arg1: i32, %arg2: memref<1x32x256xbf16, #tpu.memory_space<vmem>>, %arg3: memref<1x32x256xbf16, #tpu.memory_space<vmem>>, %arg4: memref<1x32x256xbf16, #tpu.memory_space<vmem>>, %arg5: memref<32x96xbf16, #tpu.memory_space<vmem>>, %arg6: memref<32x1xf32, #tpu.memory_space<vmem>>, %arg7: memref<1x32x256xbf16, #tpu.memory_space<vmem>>, %arg8: memref<32x1xf32, #tpu.memory_space<vmem>>, %arg9: memref<32x1xf32, #tpu.memory_space<vmem>>) attributes {dimension_semantics = [#tpu.dimension_semantics<arbitrary>, #tpu.dimension_semantics<arbitrary>], iteration_bounds = array<i64: 2, 1>, scalar_prefetch = 0 : i64, scratch_operands = 0 : i64, tpu.core_type = #tpu.core_type<tc>, window_params = [{transform_indices = @transform_0, window_bounds = array<i64: 1, 32, 256>}, {transform_indices = @transform_1, window_bounds = array<i64: 1, 32, 256>}, {transform_indices = @transform_2, window_bounds = array<i64: 1, 32, 256>}, {pipeline_mode = #tpu.pipeline_mode<synchronous>, transform_indices = @transform_3, window_bounds = array<i64: 32, 96>}, {pipeline_mode = #tpu.pipeline_mode<synchronous>, transform_indices = @transform_4, window_bounds = array<i64: 32, 1>}, {transform_indices = @transform_5, window_bounds = array<i64: 1, 32, 256>}, {pipeline_mode = #tpu.pipeline_mode<synchronous>, transform_indices = @transform_6, window_bounds = array<i64: 32, 1>}, {pipeline_mode = #tpu.pipeline_mode<synchronous>, transform_indices = @transform_7, window_bounds = array<i64: 32, 1>}]} {
    %c0_i32 = arith.constant 0 : i32
    %0 = arith.cmpi eq, %arg0, %c0_i32 : i32
    %c0_i32_0 = arith.constant 0 : i32
    %1 = arith.cmpi eq, %arg1, %c0_i32_0 : i32
    %2 = arith.andi %0, %1 : i1
    %3 = arith.extui %2 : i1 to i32
    %c0_i32_1 = arith.constant 0 : i32
    %4 = arith.cmpi ne, %3, %c0_i32_1 : i32
    scf.if %4 {
      %cst_29 = arith.constant 0.000000e+00 : f32
      %37 = vector.broadcast %cst_29 : f32 to vector<32x1xf32>
      %c0_30 = arith.constant 0 : index
      %c0_31 = arith.constant 0 : index
      %38 = vector.load %arg8[%c0_30, %c0_31] : memref<32x1xf32, #tpu.memory_space<vmem>>, vector<32x1xf32>
      tpu.vector_store %arg8[%c0_30, %c0_31], %37 {strides = array<i32>} : memref<32x1xf32, #tpu.memory_space<vmem>>, vector<32x1xf32>,
      %cst_32 = arith.constant 0.000000e+00 : f32
      %39 = vector.broadcast %cst_32 : f32 to vector<32x1xf32>
      %c0_33 = arith.constant 0 : index
      %c0_34 = arith.constant 0 : index
      %40 = vector.load %arg9[%c0_33, %c0_34] : memref<32x1xf32, #tpu.memory_space<vmem>>, vector<32x1xf32>
      tpu.vector_store %arg9[%c0_33, %c0_34], %39 {strides = array<i32>} : memref<32x1xf32, #tpu.memory_space<vmem>>, vector<32x1xf32>,
    } else {
    }
    %c0 = arith.constant 0 : index
    %c0_2 = arith.constant 0 : index
    %c0_3 = arith.constant 0 : index
    %5 = vector.load %arg2[%c0, %c0_2, %c0_3] : memref<1x32x256xbf16, #tpu.memory_space<vmem>>, vector<1x32x256xbf16>
    %6 = vector.shape_cast %5 : vector<1x32x256xbf16> to vector<32x256xbf16>
    %c0_4 = arith.constant 0 : index
    %c0_5 = arith.constant 0 : index
    %c0_6 = arith.constant 0 : index
    %7 = vector.load %arg3[%c0_4, %c0_5, %c0_6] : memref<1x32x256xbf16, #tpu.memory_space<vmem>>, vector<1x32x256xbf16>
    %8 = vector.shape_cast %7 : vector<1x32x256xbf16> to vector<32x256xbf16>
    %c0_7 = arith.constant 0 : index
    %c0_8 = arith.constant 0 : index
    %c0_9 = arith.constant 0 : index
    %9 = vector.load %arg4[%c0_7, %c0_8, %c0_9] : memref<1x32x256xbf16, #tpu.memory_space<vmem>>, vector<1x32x256xbf16>
    %10 = vector.shape_cast %9 : vector<1x32x256xbf16> to vector<32x256xbf16>
    %11 = tpu.concatenate %6, %8, %10 in 0 : vector<32x256xbf16>, vector<32x256xbf16>, vector<32x256xbf16> -> vector<96x256xbf16>
    %c0_10 = arith.constant 0 : index
    %c0_11 = arith.constant 0 : index
    %12 = vector.load %arg5[%c0_10, %c0_11] : memref<32x96xbf16, #tpu.memory_space<vmem>>, vector<32x96xbf16>
    %cst = arith.constant dense<0.000000e+00> : vector<32x256xf32>
    %13 = tpu.matmul %12, %11, %cst {dimension_numbers = #tpu.dot_dimension_numbers<[1], [0], [0], [1], [0, 0, 1, 1], [], []>} : vector<32x96xbf16>, vector<96x256xbf16>, vector<32x256xf32> -> vector<32x256xf32>
    %c0_12 = arith.constant 0 : index
    %c0_13 = arith.constant 0 : index
    %14 = vector.load %arg6[%c0_12, %c0_13] : memref<32x1xf32, #tpu.memory_space<vmem>>, vector<32x1xf32>
    %15 = vector.broadcast %14 : vector<32x1xf32> to vector<32x256xf32>
    %16 = arith.addf %13, %15 : vector<32x256xf32>
    %cst_14 = arith.constant 0.000000e+00 : f32
    %17 = vector.broadcast %cst_14 : f32 to vector<32x256xf32>
    %18 = arith.cmpf ogt, %16, %17 : vector<32x256xf32>
    %cst_15 = arith.constant 0.00999999977 : f32
    %19 = vector.broadcast %cst_15 : f32 to vector<32x256xf32>
    %20 = arith.mulf %19, %16 : vector<32x256xf32>
    %21 = arith.select %18, %16, %20 : vector<32x256xi1>, vector<32x256xf32>
    %22 = arith.truncf %21 : vector<32x256xf32> to vector<32x256xbf16>
    %c0_16 = arith.constant 0 : index
    %c0_17 = arith.constant 0 : index
    %c0_18 = arith.constant 0 : index
    %23 = vector.load %arg7[%c0_16, %c0_17, %c0_18] : memref<1x32x256xbf16, #tpu.memory_space<vmem>>, vector<1x32x256xbf16>
    %24 = vector.shape_cast %23 : vector<1x32x256xbf16> to vector<32x256xbf16>
    %25 = vector.shape_cast %22 : vector<32x256xbf16> to vector<1x32x256xbf16>
    tpu.vector_store %arg7[%c0_16, %c0_17, %c0_18], %25 {strides = array<i32>} : memref<1x32x256xbf16, #tpu.memory_space<vmem>>, vector<1x32x256xbf16>,
    %c0_19 = arith.constant 0 : index
    %c0_20 = arith.constant 0 : index
    %26 = vector.load %arg8[%c0_19, %c0_20] : memref<32x1xf32, #tpu.memory_space<vmem>>, vector<32x1xf32>
    %cst_21 = arith.constant dense<0.000000e+00> : vector<32xf32>
    %27 = vector.multi_reduction <add>, %21, %cst_21 [1] : vector<32x256xf32> to vector<32xf32>
    %28 = vector.shape_cast %27 : vector<32xf32> to vector<32x1xf32>
    %29 = arith.addf %26, %28 : vector<32x1xf32>
    %c0_22 = arith.constant 0 : index
    %c0_23 = arith.constant 0 : index
    %30 = vector.load %arg8[%c0_22, %c0_23] : memref<32x1xf32, #tpu.memory_space<vmem>>, vector<32x1xf32>
    tpu.vector_store %arg8[%c0_22, %c0_23], %29 {strides = array<i32>} : memref<32x1xf32, #tpu.memory_space<vmem>>, vector<32x1xf32>,
    %c0_24 = arith.constant 0 : index
    %c0_25 = arith.constant 0 : index
    %31 = vector.load %arg9[%c0_24, %c0_25] : memref<32x1xf32, #tpu.memory_space<vmem>>, vector<32x1xf32>
    %32 = arith.mulf %21, %21 : vector<32x256xf32>
    %cst_26 = arith.constant dense<0.000000e+00> : vector<32xf32>
    %33 = vector.multi_reduction <add>, %32, %cst_26 [1] : vector<32x256xf32> to vector<32xf32>
    %34 = vector.shape_cast %33 : vector<32xf32> to vector<32x1xf32>
    %35 = arith.addf %31, %34 : vector<32x1xf32>
    %c0_27 = arith.constant 0 : index
    %c0_28 = arith.constant 0 : index
    %36 = vector.load %arg9[%c0_27, %c0_28] : memref<32x1xf32, #tpu.memory_space<vmem>>, vector<32x1xf32>
    tpu.vector_store %arg9[%c0_27, %c0_28], %35 {strides = array<i32>} : memref<32x1xf32, #tpu.memory_space<vmem>>, vector<32x1xf32>,
    return
  }
  func.func @transform_0(%arg0: i32, %arg1: i32) -> (i32, i32, i32) {
    %c0_i32 = arith.constant 0 : i32
    %c0_i32_0 = arith.constant 0 : i32
    return %arg0, %c0_i32, %arg1 : i32, i32, i32
  }
  func.func @transform_1(%arg0: i32, %arg1: i32) -> (i32, i32, i32) {
    %c0_i32 = arith.constant 0 : i32
    %c0_i32_0 = arith.constant 0 : i32
    return %arg0, %c0_i32, %arg1 : i32, i32, i32
  }
  func.func @transform_2(%arg0: i32, %arg1: i32) -> (i32, i32, i32) {
    %c0_i32 = arith.constant 0 : i32
    %c0_i32_0 = arith.constant 0 : i32
    return %arg0, %c0_i32, %arg1 : i32, i32, i32
  }
  func.func @transform_3(%arg0: i32, %arg1: i32) -> (i32, i32) {
    %c0_i32 = arith.constant 0 : i32
    %c0_i32_0 = arith.constant 0 : i32
    %c0_i32_1 = arith.constant 0 : i32
    return %c0_i32, %c0_i32_0 : i32, i32
  }
  func.func @transform_4(%arg0: i32, %arg1: i32) -> (i32, i32) {
    %c0_i32 = arith.constant 0 : i32
    %c0_i32_0 = arith.constant 0 : i32
    %c0_i32_1 = arith.constant 0 : i32
    return %c0_i32, %c0_i32_0 : i32, i32
  }
  func.func @transform_5(%arg0: i32, %arg1: i32) -> (i32, i32, i32) {
    %c0_i32 = arith.constant 0 : i32
    %c0_i32_0 = arith.constant 0 : i32
    return %arg0, %c0_i32, %arg1 : i32, i32, i32
  }
  func.func @transform_6(%arg0: i32, %arg1: i32) -> (i32, i32) {
    %c0_i32 = arith.constant 0 : i32
    %c0_i32_0 = arith.constant 0 : i32
    %c0_i32_1 = arith.constant 0 : i32
    return %c0_i32, %c0_i32_0 : i32, i32
  }
  func.func @transform_7(%arg0: i32, %arg1: i32) -> (i32, i32) {
    %c0_i32 = arith.constant 0 : i32
    %c0_i32_0 = arith.constant 0 : i32
    %c0_i32_1 = arith.constant 0 : i32
    return %c0_i32, %c0_i32_0 : i32, i32
  }
}

module attributes {stable_mosaic.version = 11 : i64} {
  func.func @_bn_residual_kernel(%arg0: i32, %arg1: i32, %arg2: memref<1x32x256xbf16, #tpu.memory_space<vmem>>, %arg3: memref<1x32x256xf32, #tpu.memory_space<vmem>>, %arg4: memref<32x1xf32, #tpu.memory_space<vmem>>, %arg5: memref<32x1xf32, #tpu.memory_space<vmem>>, %arg6: memref<1x32x256xf32, #tpu.memory_space<vmem>>) attributes {dimension_semantics = [#tpu.dimension_semantics<parallel>, #tpu.dimension_semantics<parallel>], iteration_bounds = array<i64: 2, 1>, scalar_prefetch = 0 : i64, scratch_operands = 0 : i64, tpu.core_type = #tpu.core_type<tc>, window_params = [{transform_indices = @transform_0, window_bounds = array<i64: 1, 32, 256>}, {transform_indices = @transform_1, window_bounds = array<i64: 1, 32, 256>}, {pipeline_mode = #tpu.pipeline_mode<synchronous>, transform_indices = @transform_2, window_bounds = array<i64: 32, 1>}, {pipeline_mode = #tpu.pipeline_mode<synchronous>, transform_indices = @transform_3, window_bounds = array<i64: 32, 1>}, {transform_indices = @transform_4, window_bounds = array<i64: 1, 32, 256>}]} {
    %c0 = arith.constant 0 : index
    %c0_0 = arith.constant 0 : index
    %c0_1 = arith.constant 0 : index
    %0 = vector.load %arg2[%c0, %c0_0, %c0_1] : memref<1x32x256xbf16, #tpu.memory_space<vmem>>, vector<1x32x256xbf16>
    %1 = vector.shape_cast %0 : vector<1x32x256xbf16> to vector<32x256xbf16>
    %2 = arith.extf %1 : vector<32x256xbf16> to vector<32x256xf32>
    %c0_2 = arith.constant 0 : index
    %c0_3 = arith.constant 0 : index
    %3 = vector.load %arg4[%c0_2, %c0_3] : memref<32x1xf32, #tpu.memory_space<vmem>>, vector<32x1xf32>
    %4 = vector.broadcast %3 : vector<32x1xf32> to vector<32x256xf32>
    %5 = arith.mulf %2, %4 : vector<32x256xf32>
    %c0_4 = arith.constant 0 : index
    %c0_5 = arith.constant 0 : index
    %6 = vector.load %arg5[%c0_4, %c0_5] : memref<32x1xf32, #tpu.memory_space<vmem>>, vector<32x1xf32>
    %7 = vector.broadcast %6 : vector<32x1xf32> to vector<32x256xf32>
    %8 = arith.addf %5, %7 : vector<32x256xf32>
    %c0_6 = arith.constant 0 : index
    %c0_7 = arith.constant 0 : index
    %c0_8 = arith.constant 0 : index
    %9 = vector.load %arg3[%c0_6, %c0_7, %c0_8] : memref<1x32x256xf32, #tpu.memory_space<vmem>>, vector<1x32x256xf32>
    %10 = vector.shape_cast %9 : vector<1x32x256xf32> to vector<32x256xf32>
    %11 = arith.addf %8, %10 : vector<32x256xf32>
    %c0_9 = arith.constant 0 : index
    %c0_10 = arith.constant 0 : index
    %c0_11 = arith.constant 0 : index
    %12 = vector.load %arg6[%c0_9, %c0_10, %c0_11] : memref<1x32x256xf32, #tpu.memory_space<vmem>>, vector<1x32x256xf32>
    %13 = vector.shape_cast %12 : vector<1x32x256xf32> to vector<32x256xf32>
    %14 = vector.shape_cast %11 : vector<32x256xf32> to vector<1x32x256xf32>
    tpu.vector_store %arg6[%c0_9, %c0_10, %c0_11], %14 {strides = array<i32>} : memref<1x32x256xf32, #tpu.memory_space<vmem>>, vector<1x32x256xf32>,
    return
  }
  func.func @transform_0(%arg0: i32, %arg1: i32) -> (i32, i32, i32) {
    %c0_i32 = arith.constant 0 : i32
    %c0_i32_0 = arith.constant 0 : i32
    return %arg0, %c0_i32, %arg1 : i32, i32, i32
  }
  func.func @transform_1(%arg0: i32, %arg1: i32) -> (i32, i32, i32) {
    %c0_i32 = arith.constant 0 : i32
    %c0_i32_0 = arith.constant 0 : i32
    return %arg0, %c0_i32, %arg1 : i32, i32, i32
  }
  func.func @transform_2(%arg0: i32, %arg1: i32) -> (i32, i32) {
    %c0_i32 = arith.constant 0 : i32
    %c0_i32_0 = arith.constant 0 : i32
    %c0_i32_1 = arith.constant 0 : i32
    return %c0_i32, %c0_i32_0 : i32, i32
  }
  func.func @transform_3(%arg0: i32, %arg1: i32) -> (i32, i32) {
    %c0_i32 = arith.constant 0 : i32
    %c0_i32_0 = arith.constant 0 : i32
    %c0_i32_1 = arith.constant 0 : i32
    return %c0_i32, %c0_i32_0 : i32, i32
  }
  func.func @transform_4(%arg0: i32, %arg1: i32) -> (i32, i32, i32) {
    %c0_i32 = arith.constant 0 : i32
    %c0_i32_0 = arith.constant 0 : i32
    return %arg0, %c0_i32, %arg1 : i32, i32, i32
  }
}

</mosaic_0001>

<llo_original>
// kernel: resblock1122_forward.5
$region0: #{resblock1122_forward.5}
  #allocation0 [shape = 'u32[]', space=smem, size = 0x4, offset = 0x4, fixed_abs, tag = 'smem constant byte address 0x4 - core index']
  #allocation1 [shape = 'u32[144,128]{1,0:T(1,128)}', space=vmem, size = 0x12000, scoped, tag = 'internal scratch']
  %s0 = inlined_call_operand.vmem [shape: bf16[2,144,256], index: 0, kind: input, shape index: {}]
  %s1 = inlined_call_operand.vmem [shape: bf16[32,144], index: 1, kind: input, shape index: {}]
  %s2 = inlined_call_operand.vmem [shape: f32[32,1], index: 2, kind: input, shape index: {}]
  %s3 = inlined_call_operand.vmem [shape: bf16[32,16], index: 3, kind: input, shape index: {}]
  %s4 = inlined_call_operand.vmem [shape: f32[32,1], index: 4, kind: input, shape index: {}]
  %s5 = inlined_call_operand.vmem [shape: bf16[2,32,256], index: 5, kind: output, shape index: {0}]
  %s6 = inlined_call_operand.vmem [shape: f32[2,32,256], index: 6, kind: output, shape index: {1}]
  %s7 = inlined_call_operand.vmem [shape: f32[32,1], index: 7, kind: output, shape index: {2}]
  %s8 = inlined_call_operand.vmem [shape: f32[32,1], index: 8, kind: output, shape index: {3}]
  %9 = xla_tuple %s5, %s6, %s7, %s8
  %s10 = sld [smem:[#allocation0]]
  $region81: #{resblock1122_forward.5} parent=0
    _
  %s12 = ssub.s32 1, %s10
  %s13 = scalar_select 0, %s12, %s10
  loop: start=0, step=1, limit=4
  $region2: #{resblock1122_forward.5} parent=0 // loop_pre_header
    _
  $region3: #{resblock1122_forward.5} parent=0 // loop_header
    %s15 = sphi 0, %s19
    %p16 = scmp.ge.s32.totalorder %s15, 4
    %s22 = sphi 0, %s34
    %s23 = sphi 0, %s30
    %s24 = sphi 0, %s22
    %s25 = sphi 0, %s23
    %s26 = sphi 0, %s24
    %s27 = sphi 0, %s25
    %s39 = sphi 0, %s41
    %s42 = sphi 0, %s39
    %s43 = sphi 0, %s42
    %s59 = sphi 0, %s43
    %s63 = sphi 0, %s63
    %s65 = sphi 0, %s63
    %s66 = sphi 0, %s65
    %s80 = sphi 0, %s66
    %s84 = sphi 0, %s84
    %s86 = sphi 0, %s84
    %s87 = sphi 0, %s86
    %s101 = sphi 0, %s87
    %s105 = sphi 0, %s105
    %s107 = sphi 0, %s105
    %s108 = sphi 0, %s107
    %s122 = sphi 0, %s108
    %s126 = sphi 0, %s126
    %s128 = sphi 0, %s126
    %s129 = sphi 0, %s128
    %s143 = sphi 0, %s129
    %s151 = sphi 0, %s153
    %s154 = sphi 0, %s151
    %s155 = sphi 0, %s154
    %s171 = sphi 0, %s155
    %s179 = sphi 0, %s181
    %s182 = sphi 0, %s179
    %s183 = sphi 0, %s182
    %s199 = sphi 0, %s183
    %s203 = sphi 0, %s203
    %s205 = sphi 0, %s203
    %s206 = sphi 0, %s205
    %s220 = sphi 0, %s206
    %s224 = sphi 0, %s224
    %s226 = sphi 0, %s224
    %s227 = sphi 0, %s226
    %s241 = sphi 0, %s227
  $region4: #{resblock1122_forward.5} parent=0 // loop_header_branch
    %18 = sbr.rel (%p16) target = $region8
  $region5: #{resblock1122_forward.5} parent=0 // loop_body
    %s20 = ssub.s32 %s15, 1
    %s21 = ssub.s32 %s15, 2
    %s28 = sadd.s32 1, %s23
    %p29 = scmp.ge.s32.totalorder %s28, 1
    %s30 = scalar_select %p29, 0, %s28
    %s31 = sadd.s32 1, %s22
    %s32 = scalar_select %p29, %s31, %s22
    %p33 = scmp.ge.s32.totalorder %s32, 2
    %s34 = scalar_select %p33, 0, %s32
    %s35 = ssub.s32 %s22, %s34
    %s36 = ssub.s32 %s23, %s30
    %s37 = sor.u32 %s35, %s36
    %p38 = scmp.eq.s32.totalorder %s37, 0
    %s40 = sadd.s32 %s39, 1
    %s41 = scalar_select %p38, %s39, %s40
    %p44 = pneg %p38
    %p45 = scmp.eq.s32.totalorder %s15, 1
    %p46 = por %p44, %p45
    %p47 = scmp.ne.s32.totalorder %s39, %s42
    %p48 = scmp.eq.s32.totalorder %s15, 0
    %p49 = por %p47, %p48
    %p50 = scmp.ne.s32.totalorder %s39, %s42
    %p51 = scmp.eq.s32.totalorder %s20, 1
    %p52 = por %p50, %p51
    %p53 = scmp.ne.s32.totalorder %s42, %s43
    %p54 = scmp.eq.s32.totalorder %s20, 0
    %p55 = por %p53, %p54
    %p56 = scmp.ne.s32.totalorder %s42, %s43
    %p57 = scmp.eq.s32.totalorder %s21, 1
    %p58 = por %p56, %p57
    %p60 = scmp.ne.s32.totalorder %s43, %s59
    %p61 = scmp.eq.s32.totalorder %s21, 0
    %p62 = por %p60, %p61
    %s64 = sadd.s32 %s63, 1
    %p67 = scmp.eq.s32.totalorder %s15, 1
    %p68 = scmp.ne.s32.totalorder %s63, %s65
    %p69 = scmp.eq.s32.totalorder %s15, 0
    %p70 = por %p68, %p69
    %p71 = scmp.ne.s32.totalorder %s63, %s65
    %p72 = scmp.eq.s32.totalorder %s20, 1
    %p73 = por %p71, %p72
    %p74 = scmp.ne.s32.totalorder %s65, %s66
    %p75 = scmp.eq.s32.totalorder %s20, 0
    %p76 = por %p74, %p75
    %p77 = scmp.ne.s32.totalorder %s65, %s66
    %p78 = scmp.eq.s32.totalorder %s21, 1
    %p79 = por %p77, %p78
    %p81 = scmp.ne.s32.totalorder %s66, %s80
    %p82 = scmp.eq.s32.totalorder %s21, 0
    %p83 = por %p81, %p82
    %s85 = sadd.s32 %s84, 1
    %p88 = scmp.eq.s32.totalorder %s15, 1
    %p89 = scmp.ne.s32.totalorder %s84, %s86
    %p90 = scmp.eq.s32.totalorder %s15, 0
    %p91 = por %p89, %p90
    %p92 = scmp.ne.s32.totalorder %s84, %s86
    %p93 = scmp.eq.s32.totalorder %s20, 1
    %p94 = por %p92, %p93
    %p95 = scmp.ne.s32.totalorder %s86, %s87
    %p96 = scmp.eq.s32.totalorder %s20, 0
    %p97 = por %p95, %p96
    %p98 = scmp.ne.s32.totalorder %s86, %s87
    %p99 = scmp.eq.s32.totalorder %s21, 1
    %p100 = por %p98, %p99
    %p102 = scmp.ne.s32.totalorder %s87, %s101
    %p103 = scmp.eq.s32.totalorder %s21, 0
    %p104 = por %p102, %p103
    %s106 = sadd.s32 %s105, 1
    %p109 = scmp.eq.s32.totalorder %s15, 1
    %p110 = scmp.ne.s32.totalorder %s105, %s107
    %p111 = scmp.eq.s32.totalorder %s15, 0
    %p112 = por %p110, %p111
    %p113 = scmp.ne.s32.totalorder %s105, %s107
    %p114 = scmp.eq.s32.totalorder %s20, 1
    %p115 = por %p113, %p114
    %p116 = scmp.ne.s32.totalorder %s107, %s108
    %p117 = scmp.eq.s32.totalorder %s20, 0
    %p118 = por %p116, %p117
    %p119 = scmp.ne.s32.totalorder %s107, %s108
    %p120 = scmp.eq.s32.totalorder %s21, 1
    %p121 = por %p119, %p120
    %p123 = scmp.ne.s32.totalorder %s108, %s122
    %p124 = scmp.eq.s32.totalorder %s21, 0
    %p125 = por %p123, %p124
    %s127 = sadd.s32 %s126, 1
    %p130 = scmp.eq.s32.totalorder %s15, 1
    %p131 = scmp.ne.s32.totalorder %s126, %s128
    %p132 = scmp.eq.s32.totalorder %s15, 0
    %p133 = por %p131, %p132
    %p134 = scmp.ne.s32.totalorder %s126, %s128
    %p135 = scmp.eq.s32.totalorder %s20, 1
    %p136 = por %p134, %p135
    %p137 = scmp.ne.s32.totalorder %s128, %s129
    %p138 = scmp.eq.s32.totalorder %s20, 0
    %p139 = por %p137, %p138
    %p140 = scmp.ne.s32.totalorder %s128, %s129
    %p141 = scmp.eq.s32.totalorder %s21, 1
    %p142 = por %p140, %p141
    %p144 = scmp.ne.s32.totalorder %s129, %s143
    %p145 = scmp.eq.s32.totalorder %s21, 0
    %p146 = por %p144, %p145
    %s147 = ssub.s32 %s22, %s34
    %s148 = ssub.s32 %s23, %s30
    %s149 = sor.u32 %s147, %s148
    %p150 = scmp.eq.s32.totalorder %s149, 0
    %s152 = sadd.s32 %s151, 1
    %s153 = scalar_select %p150, %s151, %s152
    %p156 = pneg %p150
    %p157 = scmp.eq.s32.totalorder %s15, 1
    %p158 = por %p156, %p157
    %p159 = scmp.ne.s32.totalorder %s151, %s154
    %p160 = scmp.eq.s32.totalorder %s15, 0
    %p161 = por %p159, %p160
    %p162 = scmp.ne.s32.totalorder %s151, %s154
    %p163 = scmp.eq.s32.totalorder %s20, 1
    %p164 = por %p162, %p163
    %p165 = scmp.ne.s32.totalorder %s154, %s155
    %p166 = scmp.eq.s32.totalorder %s20, 0
    %p167 = por %p165, %p166
    %p168 = scmp.ne.s32.totalorder %s154, %s155
    %p169 = scmp.eq.s32.totalorder %s21, 1
    %p170 = por %p168, %p169
    %p172 = scmp.ne.s32.totalorder %s155, %s171
    %p173 = scmp.eq.s32.totalorder %s21, 0
    %p174 = por %p172, %p173
    %s175 = ssub.s32 %s22, %s34
    %s176 = ssub.s32 %s23, %s30
    %s177 = sor.u32 %s175, %s176
    %p178 = scmp.eq.s32.totalorder %s177, 0
    %s180 = sadd.s32 %s179, 1
    %s181 = scalar_select %p178, %s179, %s180
    %p184 = pneg %p178
    %p185 = scmp.eq.s32.totalorder %s15, 1
    %p186 = por %p184, %p185
    %p187 = scmp.ne.s32.totalorder %s179, %s182
    %p188 = scmp.eq.s32.totalorder %s15, 0
    %p189 = por %p187, %p188
    %p190 = scmp.ne.s32.totalorder %s179, %s182
    %p191 = scmp.eq.s32.totalorder %s20, 1
    %p192 = por %p190, %p191
    %p193 = scmp.ne.s32.totalorder %s182, %s183
    %p194 = scmp.eq.s32.totalorder %s20, 0
    %p195 = por %p193, %p194
    %p196 = scmp.ne.s32.totalorder %s182, %s183
    %p197 = scmp.eq.s32.totalorder %s21, 1
    %p198 = por %p196, %p197
    %p200 = scmp.ne.s32.totalorder %s183, %s199
    %p201 = scmp.eq.s32.totalorder %s21, 0
    %p202 = por %p200, %p201
    %s204 = sadd.s32 %s203, 1
    %p207 = scmp.eq.s32.totalorder %s15, 1
    %p208 = scmp.ne.s32.totalorder %s203, %s205
    %p209 = scmp.eq.s32.totalorder %s15, 0
    %p210 = por %p208, %p209
    %p211 = scmp.ne.s32.totalorder %s203, %s205
    %p212 = scmp.eq.s32.totalorder %s20, 1
    %p213 = por %p211, %p212
    %p214 = scmp.ne.s32.totalorder %s205, %s206
    %p215 = scmp.eq.s32.totalorder %s20, 0
    %p216 = por %p214, %p215
    %p217 = scmp.ne.s32.totalorder %s205, %s206
    %p218 = scmp.eq.s32.totalorder %s21, 1
    %p219 = por %p217, %p218
    %p221 = scmp.ne.s32.totalorder %s206, %s220
    %p222 = scmp.eq.s32.totalorder %s21, 0
    %p223 = por %p221, %p222
    %s225 = sadd.s32 %s224, 1
    %p228 = scmp.eq.s32.totalorder %s15, 1
    %p229 = scmp.ne.s32.totalorder %s224, %s226
    %p230 = scmp.eq.s32.totalorder %s15, 0
    %p231 = por %p229, %p230
    %p232 = scmp.ne.s32.totalorder %s224, %s226
    %p233 = scmp.eq.s32.totalorder %s20, 1
    %p234 = por %p232, %p233
    %p235 = scmp.ne.s32.totalorder %s226, %s227
    %p236 = scmp.eq.s32.totalorder %s20, 0
    %p237 = por %p235, %p236
    %p238 = scmp.ne.s32.totalorder %s226, %s227
    %p239 = scmp.eq.s32.totalorder %s21, 1
    %p240 = por %p238, %p239
    %p242 = scmp.ne.s32.totalorder %s227, %s241
    %p243 = scmp.eq.s32.totalorder %s21, 0
    %p244 = por %p242, %p243
    %p245 = scmp.le.s32.totalorder 1, %s15
    %p246 = scmp.lt.s32.totalorder %s15, 3
    %p247 = pnand %p245, %p246
    %p248 = pneg %p247
    // Predicated region
    $region9: #{resblock1122_forward.5} parent=5 // pred_check
      _
    $region10: #{resblock1122_forward.5} parent=5 // pred_check_branch
      %250 = sbr.rel (%p247) target = $region12
    $region11: #{resblock1122_forward.5} parent=5 // pred_region
      %s251 = ssub.s32 %s15, 1
      // Predicated region
      $region13: #{resblock1122_forward.5} parent=11 // pred_check
        %p252 = pneg %p76
      $region14: #{resblock1122_forward.5} parent=11 // pred_check_branch
        %254 = sbr.rel (%p252) target = $region16
      $region15: #{resblock1122_forward.5} parent=11 // pred_region
        _
      $region16: #{resblock1122_forward.5} parent=11 // pred_fallthru
        _
      // Predicated region
      $region17: #{resblock1122_forward.5} parent=11 // pred_check
        %p255 = pneg %p97
      $region18: #{resblock1122_forward.5} parent=11 // pred_check_branch
        %257 = sbr.rel (%p255) target = $region20
      $region19: #{resblock1122_forward.5} parent=11 // pred_region
        _
      $region20: #{resblock1122_forward.5} parent=11 // pred_fallthru
        _
      // Predicated region
      $region21: #{resblock1122_forward.5} parent=11 // pred_check
        %p258 = pneg %p118
      $region22: #{resblock1122_forward.5} parent=11 // pred_check_branch
        %260 = sbr.rel (%p258) target = $region24
      $region23: #{resblock1122_forward.5} parent=11 // pred_region
        _
      $region24: #{resblock1122_forward.5} parent=11 // pred_fallthru
        _
      // Predicated region
      $region25: #{resblock1122_forward.5} parent=11 // pred_check
        %p261 = pneg %p139
      $region26: #{resblock1122_forward.5} parent=11 // pred_check_branch
        %263 = sbr.rel (%p261) target = $region28
      $region27: #{resblock1122_forward.5} parent=11 // pred_region
        _
      $region28: #{resblock1122_forward.5} parent=11 // pred_fallthru
        _
    $region12: #{resblock1122_forward.5} parent=5 // pred_fallthru
      _
    %p264 = scmp.lt.s32.totalorder %s15, 2
    // Predicated region
    $region29: #{resblock1122_forward.5} parent=5 // pred_check
      %p265 = pneg %p264
    $region30: #{resblock1122_forward.5} parent=5 // pred_check_branch
      %267 = sbr.rel (%p265) target = $region32
    $region31: #{resblock1122_forward.5} parent=5 // pred_region
      // Predicated region
      $region33: #{resblock1122_forward.5} parent=31 // pred_check
        %p268 = pneg %p49
      $region34: #{resblock1122_forward.5} parent=31 // pred_check_branch
        %270 = sbr.rel (%p268) target = $region36
      $region35: #{resblock1122_forward.5} parent=31 // pred_region
        %s271 = smul.u32 2, %s23
        %p272 = scmp.lt.s32.totalorder %s22, 1
        %s273 = scalar_select %p272, %s22, 1
        %p274 = scmp.lt.s32.totalorder %s271, 1
        %s275 = scalar_select %p274, %s271, 1
        %s276 = smul.addr %s273, 36
        %s277 = sadd.s32 %s275, %s276
        %s278 = smul.addr %s277, 4
        %s279 = scalar_lea.vmem %s0, %s278
        %s280 = smul.u32 2, %s23
      $region36: #{resblock1122_forward.5} parent=31 // pred_fallthru
        _
    $region32: #{resblock1122_forward.5} parent=5 // pred_fallthru
      _
    %p281 = scmp.le.s32.totalorder 1, %s15
    %p282 = scmp.lt.s32.totalorder %s15, 3
    %p283 = pnand %p281, %p282
    %p284 = pneg %p283
    // Predicated region
    $region37: #{resblock1122_forward.5} parent=5 // pred_check
      _
    $region38: #{resblock1122_forward.5} parent=5 // pred_check_branch
      %286 = sbr.rel (%p283) target = $region40
    $region39: #{resblock1122_forward.5} parent=5 // pred_region
      %s287 = ssub.s32 %s15, 1
      %s288 = smul.u32 2, %s25
      %p289 = scmp.lt.s32.totalorder %s24, 1
      %s290 = scalar_select %p289, %s24, 1
      %p291 = scmp.lt.s32.totalorder %s288, 1
      %s292 = scalar_select %p291, %s288, 1
      %s293 = smul.addr %s290, 36
      %s294 = sadd.s32 %s292, %s293
      %s295 = smul.addr %s294, 4
      %s296 = scalar_lea.vmem %s0, %s295
      %p297 = pneg %p55
      %p298 = pneg %p52
      %p299 = pneg %p76
      %p300 = pneg %p73
      %p301 = pneg %p97
      %p302 = pneg %p94
      %p303 = pneg %p118
      %p304 = pneg %p115
      %p305 = pneg %p139
      %p306 = pneg %p136
      %p307 = pneg %p167
      %p308 = pneg %p164
      %s309 = smul.u32 2, %s25
      %p310 = scmp.lt.s32.totalorder %s24, 1
      %s311 = scalar_select %p310, %s24, 1
      %p312 = scmp.lt.s32.totalorder %s309, 1
      %s313 = scalar_select %p312, %s309, 1
      %s314 = smul.addr %s311, 8
      %s315 = sadd.s32 %s313, %s314
      %s316 = smul.addr %s315, 4
      %s317 = scalar_lea.vmem %s5, %s316
      %p318 = pneg %p195
      %p319 = pneg %p192
      %s320 = smul.u32 2, %s25
      %p321 = scmp.lt.s32.totalorder %s24, 1
      %s322 = scalar_select %p321, %s24, 1
      %p323 = scmp.lt.s32.totalorder %s320, 1
      %s324 = scalar_select %p323, %s320, 1
      %s325 = smul.addr %s322, 8
      %s326 = sadd.s32 %s324, %s325
      %s327 = smul.addr %s326, 8
      %s328 = scalar_lea.vmem %s6, %s327
      %p329 = pneg %p216
      %p330 = pneg %p213
      %p331 = pneg %p237
      %p332 = pneg %p234
      %s333 = smul.u32 2, %s25
      %p334 = scmp.lt.s32.totalorder %s24, 1
      %s335 = scalar_select %p334, %s24, 1
      %p336 = scmp.lt.s32.totalorder %s333, 1
      %s337 = scalar_select %p336, %s333, 1
      %s338 = smul.addr %s335, 36
      %s339 = sadd.s32 %s337, %s338
      %s340 = smul.addr %s339, 4
      %s341 = scalar_lea.vmem %s0, %s340
      %s342 = smul.u32 2, %s25
      %s343 = smul.u32 2, %s25
      %p344 = scmp.lt.s32.totalorder %s24, 1
      %s345 = scalar_select %p344, %s24, 1
      %p346 = scmp.lt.s32.totalorder %s343, 1
      %s347 = scalar_select %p346, %s343, 1
      %s348 = smul.addr %s345, 8
      %s349 = sadd.s32 %s347, %s348
      %s350 = smul.addr %s349, 4
      %s351 = scalar_lea.vmem %s5, %s350
      %s352 = smul.u32 2, %s25
      %s353 = smul.u32 2, %s25
      %p354 = scmp.lt.s32.totalorder %s24, 1
      %s355 = scalar_select %p354, %s24, 1
      %p356 = scmp.lt.s32.totalorder %s353, 1
      %s357 = scalar_select %p356, %s353, 1
      %s358 = smul.addr %s355, 8
      %s359 = sadd.s32 %s357, %s358
      %s360 = smul.addr %s359, 8
      %s361 = scalar_lea.vmem %s6, %s360
      %s362 = smul.u32 2, %s25
      %p364 = scmp.eq.s32.totalorder %s24, 0
      %p365 = scmp.eq.s32.totalorder %s25, 0
      %p366 = pnand %p364, %p365
      %p367 = pneg %p366
      // Predicated region
      $region41: #{resblock1122_forward.5} parent=39 // pred_check
        _
      $region42: #{resblock1122_forward.5} parent=39 // pred_check_branch
        %369 = sbr.rel (%p366) target = $region44
      $region43: #{resblock1122_forward.5} parent=39 // pred_region
        %vm370 = vcmask 7168
        %371 = vst.msk [vmem:[%s7] sm:$0xff] %vm370, 0.0
        %372 = vst.msk [vmem:[%s7 + $0x8] sm:$0xff] %vm370, 0.0
        %373 = vst.msk [vmem:[%s7 + $0x10] sm:$0xff] %vm370, 0.0
        %374 = vst.msk [vmem:[%s7 + $0x18] sm:$0xff] %vm370, 0.0
        %375 = vst.msk [vmem:[%s8] sm:$0xff] %vm370, 0.0
        %376 = vst.msk [vmem:[%s8 + $0x8] sm:$0xff] %vm370, 0.0
        %377 = vst.msk [vmem:[%s8 + $0x10] sm:$0xff] %vm370, 0.0
        %378 = vst.msk [vmem:[%s8 + $0x18] sm:$0xff] %vm370, 0.0
      $region44: #{resblock1122_forward.5} parent=39 // pred_fallthru
        _
      %v379 = vld [vmem:[%s341] sm:$0xff]
      %v380 = vld [vmem:[%s341 + $0x8] sm:$0xff]
      %v381 = vld [vmem:[%s341 + $0x10] sm:$0xff]
      %v382 = vld [vmem:[%s341 + $0x18] sm:$0xff]
      %v383 = vld [vmem:[%s341 + $0x20] sm:$0xff]
      %v384 = vld [vmem:[%s341 + $0x28] sm:$0xff]
      %v385 = vld [vmem:[%s341 + $0x30] sm:$0xff]
      %v386 = vld [vmem:[%s341 + $0x38] sm:$0xff]
      %v387 = vld [vmem:[%s341 + $0x40] sm:$0xff]
      %v388 = vld [vmem:[%s341 + $0x48] sm:$0xff]
      %v389 = vld [vmem:[%s341 + $0x50] sm:$0xff]
      %v390 = vld [vmem:[%s341 + $0x58] sm:$0xff]
      %v391 = vld [vmem:[%s341 + $0x60] sm:$0xff]
      %v392 = vld [vmem:[%s341 + $0x68] sm:$0xff]
      %v393 = vld [vmem:[%s341 + $0x70] sm:$0xff]
      %v394 = vld [vmem:[%s341 + $0x78] sm:$0xff]
      %v395 = vld [vmem:[%s341 + $0x80] sm:$0xff]
      %v396 = vld [vmem:[%s341 + $0x88] sm:$0xff]
      %v397 = vld [vmem:[%s1] sm:$0xff]
      %v398 = vld [vmem:[%s1 + $0x8] sm:$0xff]
      %v399 = vld [vmem:[%s1 + $0x10] sm:$0xff]
      %v400 = vld [vmem:[%s1 + $0x18] sm:$0xff]
      %v401 = vld [vmem:[%s2] sm:$0xff]
      %v402 = vld [vmem:[%s2 + $0x8] sm:$0xff]
      %v403 = vld [vmem:[%s2 + $0x10] sm:$0xff]
      %v404 = vld [vmem:[%s2 + $0x18] sm:$0xff]
      %406 = vset.pattern.permute.xlu0 0
      %407 = vperm.xlu0 %406, %v401
      %v408 = vpop.permute.xlu0 %407
      %411 = vset.pattern.permute.xlu0 0
      %412 = vperm.xlu0 %411, %v402
      %v413 = vpop.permute.xlu0 %412
      %416 = vset.pattern.permute.xlu0 0
      %417 = vperm.xlu0 %416, %v403
      %v418 = vpop.permute.xlu0 %417
      %421 = vset.pattern.permute.xlu0 0
      %422 = vperm.xlu0 %421, %v404
      %v423 = vpop.permute.xlu0 %422
      %v429 = vunpack.c.l.b16 %v397
      %v430 = vunpack.c.h.b16 %v397
      %v431 = vunpack.c.l.b16 %v398
      %v432 = vunpack.c.h.b16 %v398
      %v433 = vunpack.c.l.b16 %v399
      %v434 = vunpack.c.h.b16 %v399
      %v435 = vunpack.c.l.b16 %v400
      %v436 = vunpack.c.h.b16 %v400
      %v437 = vpack.c.b16 %v431, %v429
      %v438 = vpack.c.b16 %v432, %v430
      %v439 = vpack.c.b16 %v435, %v433
      %v440 = vpack.c.b16 %v436, %v434
      %v461 = vunpack.c.l.b16 %v379
      %v462 = vunpack.c.h.b16 %v379
      %v463 = vunpack.c.l.b16 %v380
      %v464 = vunpack.c.h.b16 %v380
      %v465 = vunpack.c.l.b16 %v381
      %v466 = vunpack.c.h.b16 %v381
      %v467 = vunpack.c.l.b16 %v382
      %v468 = vunpack.c.h.b16 %v382
      %v469 = vunpack.c.l.b16 %v383
      %v470 = vunpack.c.h.b16 %v383
      %v471 = vunpack.c.l.b16 %v384
      %v472 = vunpack.c.h.b16 %v384
      %v473 = vunpack.c.l.b16 %v385
      %v474 = vunpack.c.h.b16 %v385
      %v475 = vunpack.c.l.b16 %v386
      %v476 = vunpack.c.h.b16 %v386
      %v477 = vunpack.c.l.b16 %v387
      %v478 = vunpack.c.h.b16 %v387
      %v479 = vunpack.c.l.b16 %v388
      %v480 = vunpack.c.h.b16 %v388
      %v481 = vunpack.c.l.b16 %v389
      %v482 = vunpack.c.h.b16 %v389
      %v483 = vunpack.c.l.b16 %v390
      %v484 = vunpack.c.h.b16 %v390
      %v485 = vunpack.c.l.b16 %v391
      %v486 = vunpack.c.h.b16 %v391
      %v487 = vunpack.c.l.b16 %v392
      %v488 = vunpack.c.h.b16 %v392
      %v489 = vunpack.c.l.b16 %v393
      %v490 = vunpack.c.h.b16 %v393
      %v491 = vunpack.c.l.b16 %v394
      %v492 = vunpack.c.h.b16 %v394
      %v493 = vunpack.c.l.b16 %v395
      %v494 = vunpack.c.h.b16 %v395
      %v495 = vunpack.c.l.b16 %v396
      %v496 = vunpack.c.h.b16 %v396
      %v497 = vpack.c.b16 %v463, %v461
      %v498 = vpack.c.b16 %v464, %v462
      %v499 = vpack.c.b16 %v467, %v465
      %v500 = vpack.c.b16 %v468, %v466
      %v501 = vpack.c.b16 %v471, %v469
      %v502 = vpack.c.b16 %v472, %v470
      %v503 = vpack.c.b16 %v475, %v473
      %v504 = vpack.c.b16 %v476, %v474
      %v505 = vpack.c.b16 %v479, %v477
      %v506 = vpack.c.b16 %v480, %v478
      %v507 = vpack.c.b16 %v483, %v481
      %v508 = vpack.c.b16 %v484, %v482
      %v509 = vpack.c.b16 %v487, %v485
      %v510 = vpack.c.b16 %v488, %v486
      %v511 = vpack.c.b16 %v491, %v489
      %v512 = vpack.c.b16 %v492, %v490
      %v513 = vpack.c.b16 %v495, %v493
      %v514 = vpack.c.b16 %v496, %v494
      %vm533 = vcmask 130048
      %v535 = vsel %vm533, %v438, 0
      %v538 = vsel %vm533, %v440, 0
      %540 = vmatprep.subr.bf16.mxu0 %v512
      %541 = vmatpush1.bf16.msra.mxu0 %v511
      %542 = vmatprep.subr.bf16.mxu0 %v510
      %543 = vmatpush1.bf16.msra.mxu0 %v509
      %544 = vmatprep.subr.bf16.mxu0 %v508
      %545 = vmatpush1.bf16.msra.mxu0 %v507
      %546 = vmatprep.subr.bf16.mxu0 %v506
      %547 = vmatpush1.bf16.msra.mxu0 %v505
      %548 = vmatprep.subr.bf16.mxu0 %v504
      %549 = vmatpush1.bf16.msra.mxu0 %v503
      %550 = vmatprep.subr.bf16.mxu0 %v502
      %551 = vmatpush1.bf16.msra.mxu0 %v501
      %552 = vmatprep.subr.bf16.mxu0 %v500
      %553 = vmatpush1.bf16.msra.mxu0 %v499
      %554 = vmatprep.subr.bf16.mxu0 %v498
      %555 = vmatpush1.bf16.msra.mxu0 %v497
      %556 = vmatprep.subr.bf16.mxu0 0
      %557 = vmatpush2.bf16.msra.mxu0 0
      %558 = vmatprep.subr.bf16.mxu0 0
      %559 = vmatpush2.bf16.msra.mxu0 0
      %560 = vmatprep.subr.bf16.mxu0 0
      %561 = vmatpush2.bf16.msra.mxu0 0
      %562 = vmatprep.subr.bf16.mxu0 0
      %563 = vmatpush2.bf16.msra.mxu0 0
      %564 = vmatprep.subr.bf16.mxu0 0
      %565 = vmatpush2.bf16.msra.mxu0 0
      %566 = vmatprep.subr.bf16.mxu0 0
      %567 = vmatpush2.bf16.msra.mxu0 0
      %568 = vmatprep.subr.bf16.mxu0 0
      %569 = vmatpush2.bf16.msra.mxu0 0
      %570 = vmatprep.subr.bf16.mxu0 %v514
      %571 = vmatpush2.bf16.msra.mxu0 %v513
      %572 = vmatprep.mubr.bf16.mxu0 %v535
      %573 = vmatmul.mubr.bf16.gmra.mxu0 %v437
      %v574 = vpop.f32.mrf.mxu0
      %v575 = vadd.f32 %v408, %v574
      %v576 = vpop.f32.mrf.mxu0
      %v577 = vadd.f32 %v408, %v576
      %v578 = vpop.f32.mrf.mxu0
      %v579 = vadd.f32 %v413, %v578
      %v580 = vpop.f32.mrf.mxu0
      %v581 = vadd.f32 %v413, %v580
      %582 = vmatprep.mubr.bf16.mxu0 %v538
      %583 = vmatmul.mubr.bf16.gmra.mxu0 %v439
      %v584 = vpop.f32.mrf.mxu0
      %v585 = vadd.f32 %v418, %v584
      %v586 = vpop.f32.mrf.mxu0
      %v587 = vadd.f32 %v418, %v586
      %v588 = vpop.f32.mrf.mxu0
      %v589 = vadd.f32 %v423, %v588
      %v590 = vpop.f32.mrf.mxu0
      %v591 = vadd.f32 %v423, %v590
      %592 = vdwg.mxu0
      %vm593 = vcmp.gt.f32.partialorder %v575, 0.0
      %vm594 = vcmp.gt.f32.partialorder %v577, 0.0
      %vm595 = vcmp.gt.f32.partialorder %v579, 0.0
      %vm596 = vcmp.gt.f32.partialorder %v581, 0.0
      %vm597 = vcmp.gt.f32.partialorder %v585, 0.0
      %vm598 = vcmp.gt.f32.partialorder %v587, 0.0
      %vm599 = vcmp.gt.f32.partialorder %v589, 0.0
      %vm600 = vcmp.gt.f32.partialorder %v591, 0.0
      %v601 = vmul.f32 %v575, 0.01
      %v602 = vmul.f32 %v577, 0.01
      %v603 = vmul.f32 %v579, 0.01
      %v604 = vmul.f32 %v581, 0.01
      %v605 = vmul.f32 %v585, 0.01
      %v606 = vmul.f32 %v587, 0.01
      %v607 = vmul.f32 %v589, 0.01
      %v608 = vmul.f32 %v591, 0.01
      %v609 = vsel %vm593, %v575, %v601
      %v610 = vsel %vm594, %v577, %v602
      %v611 = vsel %vm595, %v579, %v603
      %v612 = vsel %vm596, %v581, %v604
      %v613 = vsel %vm597, %v585, %v605
      %v614 = vsel %vm598, %v587, %v606
      %v615 = vsel %vm599, %v589, %v607
      %v616 = vsel %vm600, %v591, %v608
      %v617 = vpack.c.bf16 %v611, %v609
      %v618 = vpack.c.bf16 %v612, %v610
      %v619 = vpack.c.bf16 %v615, %v613
      %v620 = vpack.c.bf16 %v616, %v614
      %v625 = vunpack.c.l.b16 %v617
      %v626 = vunpack.c.l.b16 %v618
      %v627 = vunpack.c.h.b16 %v617
      %v628 = vunpack.c.h.b16 %v618
      %v629 = vunpack.c.l.b16 %v619
      %v630 = vunpack.c.l.b16 %v620
      %v631 = vunpack.c.h.b16 %v619
      %v632 = vunpack.c.h.b16 %v620
      %v633 = vpack.c.b16 %v626, %v625
      %v634 = vpack.c.b16 %v628, %v627
      %v635 = vpack.c.b16 %v630, %v629
      %v636 = vpack.c.b16 %v632, %v631
      %641 = vst [vmem:[%s351] sm:$0xff] %v633
      %642 = vst [vmem:[%s351 + $0x8] sm:$0xff] %v634
      %643 = vst [vmem:[%s351 + $0x10] sm:$0xff] %v635
      %644 = vst [vmem:[%s351 + $0x18] sm:$0xff] %v636
      %v645 = vld [vmem:[%s7] sm:$0xff]
      %v646 = vld [vmem:[%s7 + $0x8] sm:$0xff]
      %v647 = vld [vmem:[%s7 + $0x10] sm:$0xff]
      %v648 = vld [vmem:[%s7 + $0x18] sm:$0xff]
      %v649 = vadd.f32 %v609, %v610
      %650 = vadd.xlane.f32.xlu0 %v649
      %v651 = vpop.xlane.xlu0 %650
      %v652 = vadd.f32 %v611, %v612
      %653 = vadd.xlane.f32.xlu0 %v652
      %v654 = vpop.xlane.xlu0 %653
      %v655 = vadd.f32 %v613, %v614
      %656 = vadd.xlane.f32.xlu0 %v655
      %v657 = vpop.xlane.xlu0 %656
      %v658 = vadd.f32 %v615, %v616
      %659 = vadd.xlane.f32.xlu0 %v658
      %v660 = vpop.xlane.xlu0 %659
      %v661 = vadd.f32 %v645, %v651
      %v662 = vadd.f32 %v646, %v654
      %v663 = vadd.f32 %v647, %v657
      %v664 = vadd.f32 %v648, %v660
      %vm665 = vcmask 7168
      %666 = vst.msk [vmem:[%s7] sm:$0xff] %vm665, %v661
      %667 = vst.msk [vmem:[%s7 + $0x8] sm:$0xff] %vm665, %v662
      %668 = vst.msk [vmem:[%s7 + $0x10] sm:$0xff] %vm665, %v663
      %669 = vst.msk [vmem:[%s7 + $0x18] sm:$0xff] %vm665, %v664
      %v670 = vld [vmem:[%s8] sm:$0xff]
      %v671 = vld [vmem:[%s8 + $0x8] sm:$0xff]
      %v672 = vld [vmem:[%s8 + $0x10] sm:$0xff]
      %v673 = vld [vmem:[%s8 + $0x18] sm:$0xff]
      %v674 = vmul.f32 %v609, %v609
      %v675 = vmul.f32 %v610, %v610
      %v676 = vmul.f32 %v611, %v611
      %v677 = vmul.f32 %v612, %v612
      %v678 = vmul.f32 %v613, %v613
      %v679 = vmul.f32 %v614, %v614
      %v680 = vmul.f32 %v615, %v615
      %v681 = vmul.f32 %v616, %v616
      %v682 = vadd.f32 %v674, %v675
      %683 = vadd.xlane.f32.xlu0 %v682
      %v684 = vpop.xlane.xlu0 %683
      %v685 = vadd.f32 %v676, %v677
      %686 = vadd.xlane.f32.xlu0 %v685
      %v687 = vpop.xlane.xlu0 %686
      %v688 = vadd.f32 %v678, %v679
      %689 = vadd.xlane.f32.xlu0 %v688
      %v690 = vpop.xlane.xlu0 %689
      %v691 = vadd.f32 %v680, %v681
      %692 = vadd.xlane.f32.xlu0 %v691
      %v693 = vpop.xlane.xlu0 %692
      %v694 = vadd.f32 %v670, %v684
      %v695 = vadd.f32 %v671, %v687
      %v696 = vadd.f32 %v672, %v690
      %v697 = vadd.f32 %v673, %v693
      %698 = vst.msk [vmem:[%s8] sm:$0xff] %vm665, %v694
      %699 = vst.msk [vmem:[%s8 + $0x8] sm:$0xff] %vm665, %v695
      %700 = vst.msk [vmem:[%s8 + $0x10] sm:$0xff] %vm665, %v696
      %701 = vst.msk [vmem:[%s8 + $0x18] sm:$0xff] %vm665, %v697
      %v702 = vld [vmem:[%s3] sm:$0xf]
      %v703 = vld [vmem:[%s3 + $0x4] sm:$0xf]
      %v704 = vld [vmem:[%s3 + $0x8] sm:$0xf]
      %v705 = vld [vmem:[%s3 + $0xc] sm:$0xf]
      %v706 = vld [vmem:[%s4] sm:$0xff]
      %v707 = vld [vmem:[%s4 + $0x8] sm:$0xff]
      %v708 = vld [vmem:[%s4 + $0x10] sm:$0xff]
      %v709 = vld [vmem:[%s4 + $0x18] sm:$0xff]
      %711 = vset.pattern.permute.xlu0 0
      %712 = vperm.xlu0 %711, %v706
      %v713 = vpop.permute.xlu0 %712
      %716 = vset.pattern.permute.xlu0 0
      %717 = vperm.xlu0 %716, %v707
      %v718 = vpop.permute.xlu0 %717
      %721 = vset.pattern.permute.xlu0 0
      %722 = vperm.xlu0 %721, %v708
      %v723 = vpop.permute.xlu0 %722
      %726 = vset.pattern.permute.xlu0 0
      %727 = vperm.xlu0 %726, %v709
      %v728 = vpop.permute.xlu0 %727
      %v734 = vunpack.c.l.b16 %v702
      %v735 = vunpack.c.l.b16 %v703
      %v736 = vunpack.c.l.b16 %v704
      %v737 = vunpack.c.l.b16 %v705
      %v738 = vpack.c.b16 %v735, %v734
      %v739 = vpack.c.b16 %v737, %v736
      %v741 = vsel %vm533, %v738, 0
      %v744 = vsel %vm533, %v739, 0
      %746 = vmatprep.subr.bf16.mxu0 0
      %747 = vmatpush1.bf16.msra.mxu0 0
      %748 = vmatprep.subr.bf16.mxu0 0
      %749 = vmatpush1.bf16.msra.mxu0 0
      %750 = vmatprep.subr.bf16.mxu0 0
      %751 = vmatpush1.bf16.msra.mxu0 0
      %752 = vmatprep.subr.bf16.mxu0 0
      %753 = vmatpush1.bf16.msra.mxu0 0
      %754 = vmatprep.subr.bf16.mxu0 0
      %755 = vmatpush1.bf16.msra.mxu0 0
      %756 = vmatprep.subr.bf16.mxu0 0
      %757 = vmatpush1.bf16.msra.mxu0 0
      %758 = vmatprep.subr.bf16.mxu0 0
      %759 = vmatpush1.bf16.msra.mxu0 0
      %760 = vmatprep.subr.bf16.mxu0 %v506
      %761 = vmatpush1.bf16.msra.mxu0 %v505
      %762 = vmatprep.subr.bf16.mxu0 0
      %763 = vmatpush2.bf16.msra.mxu0 0
      %764 = vmatprep.subr.bf16.mxu0 0
      %765 = vmatpush2.bf16.msra.mxu0 0
      %766 = vmatprep.subr.bf16.mxu0 0
      %767 = vmatpush2.bf16.msra.mxu0 0
      %768 = vmatprep.subr.bf16.mxu0 0
      %769 = vmatpush2.bf16.msra.mxu0 0
      %770 = vmatprep.subr.bf16.mxu0 0
      %771 = vmatpush2.bf16.msra.mxu0 0
      %772 = vmatprep.subr.bf16.mxu0 0
      %773 = vmatpush2.bf16.msra.mxu0 0
      %774 = vmatprep.subr.bf16.mxu0 0
      %775 = vmatpush2.bf16.msra.mxu0 0
      %776 = vmatprep.subr.bf16.mxu0 0
      %777 = vmatpush2.bf16.msra.mxu0 0
      %778 = vmatprep.mubr.bf16.mxu0 0
      %779 = vmatmul.mubr.bf16.gmra.mxu0 %v741
      %v780 = vpop.f32.mrf.mxu0
      %v781 = vadd.f32 %v713, %v780
      %v782 = vpop.f32.mrf.mxu0
      %v783 = vadd.f32 %v713, %v782
      %v784 = vpop.f32.mrf.mxu0
      %v785 = vadd.f32 %v718, %v784
      %v786 = vpop.f32.mrf.mxu0
      %v787 = vadd.f32 %v718, %v786
      %788 = vmatprep.mubr.bf16.mxu0 0
      %789 = vmatmul.mubr.bf16.gmra.mxu0 %v744
      %v790 = vpop.f32.mrf.mxu0
      %v791 = vadd.f32 %v723, %v790
      %v792 = vpop.f32.mrf.mxu0
      %v793 = vadd.f32 %v723, %v792
      %v794 = vpop.f32.mrf.mxu0
      %v795 = vadd.f32 %v728, %v794
      %v796 = vpop.f32.mrf.mxu0
      %v797 = vadd.f32 %v728, %v796
      %798 = vdwg.mxu0
      %vm799 = vcmp.gt.f32.partialorder %v781, 0.0
      %vm800 = vcmp.gt.f32.partialorder %v783, 0.0
      %vm801 = vcmp.gt.f32.partialorder %v785, 0.0
      %vm802 = vcmp.gt.f32.partialorder %v787, 0.0
      %vm803 = vcmp.gt.f32.partialorder %v791, 0.0
      %vm804 = vcmp.gt.f32.partialorder %v793, 0.0
      %vm805 = vcmp.gt.f32.partialorder %v795, 0.0
      %vm806 = vcmp.gt.f32.partialorder %v797, 0.0
      %v807 = vmul.f32 %v781, 0.01
      %v808 = vmul.f32 %v783, 0.01
      %v809 = vmul.f32 %v785, 0.01
      %v810 = vmul.f32 %v787, 0.01
      %v811 = vmul.f32 %v791, 0.01
      %v812 = vmul.f32 %v793, 0.01
      %v813 = vmul.f32 %v795, 0.01
      %v814 = vmul.f32 %v797, 0.01
      %v815 = vsel %vm799, %v781, %v807
      %v816 = vsel %vm800, %v783, %v808
      %v817 = vsel %vm801, %v785, %v809
      %v818 = vsel %vm802, %v787, %v810
      %v819 = vsel %vm803, %v791, %v811
      %v820 = vsel %vm804, %v793, %v812
      %v821 = vsel %vm805, %v795, %v813
      %v822 = vsel %vm806, %v797, %v814
      %823 = vst [vmem:[%s361] sm:$0xff] %v815
      %824 = vst [vmem:[%s361 + $0x8] sm:$0xff] %v816
      %825 = vst [vmem:[%s361 + $0x10] sm:$0xff] %v817
      %826 = vst [vmem:[%s361 + $0x18] sm:$0xff] %v818
      %827 = vst [vmem:[%s361 + $0x20] sm:$0xff] %v819
      %828 = vst [vmem:[%s361 + $0x28] sm:$0xff] %v820
      %829 = vst [vmem:[%s361 + $0x30] sm:$0xff] %v821
      %830 = vst [vmem:[%s361 + $0x38] sm:$0xff] %v822
      %s831 = smul.u32 2, %s25
      %p832 = scmp.lt.s32.totalorder %s24, 1
      %s833 = scalar_select %p832, %s24, 1
      %p834 = scmp.lt.s32.totalorder %s831, 1
      %s835 = scalar_select %p834, %s831, 1
      %s836 = smul.addr %s833, 8
      %s837 = sadd.s32 %s835, %s836
      %s838 = smul.addr %s837, 4
      %s839 = scalar_lea.vmem %s5, %s838
      %s840 = smul.u32 2, %s25
      %p841 = scmp.lt.s32.totalorder %s24, 1
      %s842 = scalar_select %p841, %s24, 1
      %p843 = scmp.lt.s32.totalorder %s840, 1
      %s844 = scalar_select %p843, %s840, 1
      %s845 = smul.addr %s842, 8
      %s846 = sadd.s32 %s844, %s845
      %s847 = smul.addr %s846, 8
      %s848 = scalar_lea.vmem %s6, %s847
      // Predicated region
      $region45: #{resblock1122_forward.5} parent=39 // pred_check
        %p849 = pneg %p164
      $region46: #{resblock1122_forward.5} parent=39 // pred_check_branch
        %851 = sbr.rel (%p849) target = $region48
      $region47: #{resblock1122_forward.5} parent=39 // pred_region
        %s852 = smul.u32 2, %s25
      $region48: #{resblock1122_forward.5} parent=39 // pred_fallthru
        _
      // Predicated region
      $region49: #{resblock1122_forward.5} parent=39 // pred_check
        %p853 = pneg %p192
      $region50: #{resblock1122_forward.5} parent=39 // pred_check_branch
        %855 = sbr.rel (%p853) target = $region52
      $region51: #{resblock1122_forward.5} parent=39 // pred_region
        %s856 = smul.u32 2, %s25
      $region52: #{resblock1122_forward.5} parent=39 // pred_fallthru
        _
      // Predicated region
      $region53: #{resblock1122_forward.5} parent=39 // pred_check
        %p857 = pneg %p213
      $region54: #{resblock1122_forward.5} parent=39 // pred_check_branch
        %859 = sbr.rel (%p857) target = $region56
      $region55: #{resblock1122_forward.5} parent=39 // pred_region
        _
      $region56: #{resblock1122_forward.5} parent=39 // pred_fallthru
        _
      // Predicated region
      $region57: #{resblock1122_forward.5} parent=39 // pred_check
        %p860 = pneg %p234
      $region58: #{resblock1122_forward.5} parent=39 // pred_check_branch
        %862 = sbr.rel (%p860) target = $region60
      $region59: #{resblock1122_forward.5} parent=39 // pred_region
        _
      $region60: #{resblock1122_forward.5} parent=39 // pred_fallthru
        _
      // Predicated region
      $region61: #{resblock1122_forward.5} parent=39 // pred_check
        %p863 = pneg %p213
      $region62: #{resblock1122_forward.5} parent=39 // pred_check_branch
        %865 = sbr.rel (%p863) target = $region64
      $region63: #{resblock1122_forward.5} parent=39 // pred_region
        _
      $region64: #{resblock1122_forward.5} parent=39 // pred_fallthru
        _
      // Predicated region
      $region65: #{resblock1122_forward.5} parent=39 // pred_check
        %p866 = pneg %p234
      $region66: #{resblock1122_forward.5} parent=39 // pred_check_branch
        %868 = sbr.rel (%p866) target = $region68
      $region67: #{resblock1122_forward.5} parent=39 // pred_region
        _
      $region68: #{resblock1122_forward.5} parent=39 // pred_fallthru
        _
    $region40: #{resblock1122_forward.5} parent=5 // pred_fallthru
      _
    %p869 = scmp.le.s32.totalorder 2, %s15
    // Predicated region
    $region69: #{resblock1122_forward.5} parent=5 // pred_check
      %p870 = pneg %p869
    $region70: #{resblock1122_forward.5} parent=5 // pred_check_branch
      %872 = sbr.rel (%p870) target = $region72
    $region71: #{resblock1122_forward.5} parent=5 // pred_region
      %s873 = ssub.s32 %s15, 2
      // Predicated region
      $region73: #{resblock1122_forward.5} parent=71 // pred_check
        %p874 = pneg %p170
      $region74: #{resblock1122_forward.5} parent=71 // pred_check_branch
        %876 = sbr.rel (%p874) target = $region76
      $region75: #{resblock1122_forward.5} parent=71 // pred_region
        %s877 = smul.u32 2, %s27
        %p878 = scmp.lt.s32.totalorder %s26, 1
        %s879 = scalar_select %p878, %s26, 1
        %p880 = scmp.lt.s32.totalorder %s877, 1
        %s881 = scalar_select %p880, %s877, 1
        %s882 = smul.addr %s879, 8
        %s883 = sadd.s32 %s881, %s882
        %s884 = smul.addr %s883, 4
        %s885 = scalar_lea.vmem %s5, %s884
      $region76: #{resblock1122_forward.5} parent=71 // pred_fallthru
        _
      // Predicated region
      $region77: #{resblock1122_forward.5} parent=71 // pred_check
        %p886 = pneg %p198
      $region78: #{resblock1122_forward.5} parent=71 // pred_check_branch
        %888 = sbr.rel (%p886) target = $region80
      $region79: #{resblock1122_forward.5} parent=71 // pred_region
        %s889 = smul.u32 2, %s27
        %p890 = scmp.lt.s32.totalorder %s26, 1
        %s891 = scalar_select %p890, %s26, 1
        %p892 = scmp.lt.s32.totalorder %s889, 1
        %s893 = scalar_select %p892, %s889, 1
        %s894 = smul.addr %s891, 8
        %s895 = sadd.s32 %s893, %s894
        %s896 = smul.addr %s895, 8
        %s897 = scalar_lea.vmem %s6, %s896
      $region80: #{resblock1122_forward.5} parent=71 // pred_fallthru
        _
    $region72: #{resblock1122_forward.5} parent=5 // pred_fallthru
      _
  $region6: #{resblock1122_forward.5} parent=0 // loop_footer
    %s19 = sadd.s32 1, %s15
  $region7: #{resblock1122_forward.5} parent=0 // loop_footer_branch
    %14 = sbr.rel target = $region3
  $region8: #{resblock1122_forward.5} parent=0 // loop_exit
    _

// kernel: resblock1122_forward.6
$region0: #{resblock1122_forward.6}
  #allocation0 [shape = 'u32[]', space=smem, size = 0x4, offset = 0x4, fixed_abs, tag = 'smem constant byte address 0x4 - core index']
  #allocation1 [shape = 'u32[144,128]{1,0:T(1,128)}', space=vmem, size = 0x12000, scoped, tag = 'internal scratch']
  %s0 = inlined_call_operand.vmem [shape: bf16[2,288,256], index: 0, kind: input, shape index: {}]
  %s1 = inlined_call_operand.vmem [shape: bf16[32,288], index: 1, kind: input, shape index: {}]
  %s2 = inlined_call_operand.vmem [shape: f32[32,1], index: 2, kind: input, shape index: {}]
  %s3 = inlined_call_operand.vmem [shape: bf16[2,32,256], index: 3, kind: output, shape index: {0}]
  %s4 = inlined_call_operand.vmem [shape: f32[32,1], index: 4, kind: output, shape index: {1}]
  %s5 = inlined_call_operand.vmem [shape: f32[32,1], index: 5, kind: output, shape index: {2}]
  %6 = xla_tuple %s3, %s4, %s5
  %s7 = sld [smem:[#allocation0]]
  $region65: #{resblock1122_forward.6} parent=0
    _
  %s9 = ssub.s32 1, %s7
  %s10 = scalar_select 0, %s9, %s7
  loop: start=0, step=1, limit=4
  $region2: #{resblock1122_forward.6} parent=0 // loop_pre_header
    _
  $region3: #{resblock1122_forward.6} parent=0 // loop_header
    %s12 = sphi 0, %s16
    %p13 = scmp.ge.s32.totalorder %s12, 4
    %s19 = sphi 0, %s31
    %s20 = sphi 0, %s27
    %s21 = sphi 0, %s19
    %s22 = sphi 0, %s20
    %s23 = sphi 0, %s21
    %s24 = sphi 0, %s22
    %s36 = sphi 0, %s38
    %s39 = sphi 0, %s36
    %s40 = sphi 0, %s39
    %s56 = sphi 0, %s40
    %s60 = sphi 0, %s60
    %s62 = sphi 0, %s60
    %s63 = sphi 0, %s62
    %s77 = sphi 0, %s63
    %s81 = sphi 0, %s81
    %s83 = sphi 0, %s81
    %s84 = sphi 0, %s83
    %s98 = sphi 0, %s84
    %s106 = sphi 0, %s108
    %s109 = sphi 0, %s106
    %s110 = sphi 0, %s109
    %s126 = sphi 0, %s110
    %s130 = sphi 0, %s130
    %s132 = sphi 0, %s130
    %s133 = sphi 0, %s132
    %s147 = sphi 0, %s133
    %s151 = sphi 0, %s151
    %s153 = sphi 0, %s151
    %s154 = sphi 0, %s153
    %s168 = sphi 0, %s154
  $region4: #{resblock1122_forward.6} parent=0 // loop_header_branch
    %15 = sbr.rel (%p13) target = $region8
  $region5: #{resblock1122_forward.6} parent=0 // loop_body
    %s17 = ssub.s32 %s12, 1
    %s18 = ssub.s32 %s12, 2
    %s25 = sadd.s32 1, %s20
    %p26 = scmp.ge.s32.totalorder %s25, 1
    %s27 = scalar_select %p26, 0, %s25
    %s28 = sadd.s32 1, %s19
    %s29 = scalar_select %p26, %s28, %s19
    %p30 = scmp.ge.s32.totalorder %s29, 2
    %s31 = scalar_select %p30, 0, %s29
    %s32 = ssub.s32 %s19, %s31
    %s33 = ssub.s32 %s20, %s27
    %s34 = sor.u32 %s32, %s33
    %p35 = scmp.eq.s32.totalorder %s34, 0
    %s37 = sadd.s32 %s36, 1
    %s38 = scalar_select %p35, %s36, %s37
    %p41 = pneg %p35
    %p42 = scmp.eq.s32.totalorder %s12, 1
    %p43 = por %p41, %p42
    %p44 = scmp.ne.s32.totalorder %s36, %s39
    %p45 = scmp.eq.s32.totalorder %s12, 0
    %p46 = por %p44, %p45
    %p47 = scmp.ne.s32.totalorder %s36, %s39
    %p48 = scmp.eq.s32.totalorder %s17, 1
    %p49 = por %p47, %p48
    %p50 = scmp.ne.s32.totalorder %s39, %s40
    %p51 = scmp.eq.s32.totalorder %s17, 0
    %p52 = por %p50, %p51
    %p53 = scmp.ne.s32.totalorder %s39, %s40
    %p54 = scmp.eq.s32.totalorder %s18, 1
    %p55 = por %p53, %p54
    %p57 = scmp.ne.s32.totalorder %s40, %s56
    %p58 = scmp.eq.s32.totalorder %s18, 0
    %p59 = por %p57, %p58
    %s61 = sadd.s32 %s60, 1
    %p64 = scmp.eq.s32.totalorder %s12, 1
    %p65 = scmp.ne.s32.totalorder %s60, %s62
    %p66 = scmp.eq.s32.totalorder %s12, 0
    %p67 = por %p65, %p66
    %p68 = scmp.ne.s32.totalorder %s60, %s62
    %p69 = scmp.eq.s32.totalorder %s17, 1
    %p70 = por %p68, %p69
    %p71 = scmp.ne.s32.totalorder %s62, %s63
    %p72 = scmp.eq.s32.totalorder %s17, 0
    %p73 = por %p71, %p72
    %p74 = scmp.ne.s32.totalorder %s62, %s63
    %p75 = scmp.eq.s32.totalorder %s18, 1
    %p76 = por %p74, %p75
    %p78 = scmp.ne.s32.totalorder %s63, %s77
    %p79 = scmp.eq.s32.totalorder %s18, 0
    %p80 = por %p78, %p79
    %s82 = sadd.s32 %s81, 1
    %p85 = scmp.eq.s32.totalorder %s12, 1
    %p86 = scmp.ne.s32.totalorder %s81, %s83
    %p87 = scmp.eq.s32.totalorder %s12, 0
    %p88 = por %p86, %p87
    %p89 = scmp.ne.s32.totalorder %s81, %s83
    %p90 = scmp.eq.s32.totalorder %s17, 1
    %p91 = por %p89, %p90
    %p92 = scmp.ne.s32.totalorder %s83, %s84
    %p93 = scmp.eq.s32.totalorder %s17, 0
    %p94 = por %p92, %p93
    %p95 = scmp.ne.s32.totalorder %s83, %s84
    %p96 = scmp.eq.s32.totalorder %s18, 1
    %p97 = por %p95, %p96
    %p99 = scmp.ne.s32.totalorder %s84, %s98
    %p100 = scmp.eq.s32.totalorder %s18, 0
    %p101 = por %p99, %p100
    %s102 = ssub.s32 %s19, %s31
    %s103 = ssub.s32 %s20, %s27
    %s104 = sor.u32 %s102, %s103
    %p105 = scmp.eq.s32.totalorder %s104, 0
    %s107 = sadd.s32 %s106, 1
    %s108 = scalar_select %p105, %s106, %s107
    %p111 = pneg %p105
    %p112 = scmp.eq.s32.totalorder %s12, 1
    %p113 = por %p111, %p112
    %p114 = scmp.ne.s32.totalorder %s106, %s109
    %p115 = scmp.eq.s32.totalorder %s12, 0
    %p116 = por %p114, %p115
    %p117 = scmp.ne.s32.totalorder %s106, %s109
    %p118 = scmp.eq.s32.totalorder %s17, 1
    %p119 = por %p117, %p118
    %p120 = scmp.ne.s32.totalorder %s109, %s110
    %p121 = scmp.eq.s32.totalorder %s17, 0
    %p122 = por %p120, %p121
    %p123 = scmp.ne.s32.totalorder %s109, %s110
    %p124 = scmp.eq.s32.totalorder %s18, 1
    %p125 = por %p123, %p124
    %p127 = scmp.ne.s32.totalorder %s110, %s126
    %p128 = scmp.eq.s32.totalorder %s18, 0
    %p129 = por %p127, %p128
    %s131 = sadd.s32 %s130, 1
    %p134 = scmp.eq.s32.totalorder %s12, 1
    %p135 = scmp.ne.s32.totalorder %s130, %s132
    %p136 = scmp.eq.s32.totalorder %s12, 0
    %p137 = por %p135, %p136
    %p138 = scmp.ne.s32.totalorder %s130, %s132
    %p139 = scmp.eq.s32.totalorder %s17, 1
    %p140 = por %p138, %p139
    %p141 = scmp.ne.s32.totalorder %s132, %s133
    %p142 = scmp.eq.s32.totalorder %s17, 0
    %p143 = por %p141, %p142
    %p144 = scmp.ne.s32.totalorder %s132, %s133
    %p145 = scmp.eq.s32.totalorder %s18, 1
    %p146 = por %p144, %p145
    %p148 = scmp.ne.s32.totalorder %s133, %s147
    %p149 = scmp.eq.s32.totalorder %s18, 0
    %p150 = por %p148, %p149
    %s152 = sadd.s32 %s151, 1
    %p155 = scmp.eq.s32.totalorder %s12, 1
    %p156 = scmp.ne.s32.totalorder %s151, %s153
    %p157 = scmp.eq.s32.totalorder %s12, 0
    %p158 = por %p156, %p157
    %p159 = scmp.ne.s32.totalorder %s151, %s153
    %p160 = scmp.eq.s32.totalorder %s17, 1
    %p161 = por %p159, %p160
    %p162 = scmp.ne.s32.totalorder %s153, %s154
    %p163 = scmp.eq.s32.totalorder %s17, 0
    %p164 = por %p162, %p163
    %p165 = scmp.ne.s32.totalorder %s153, %s154
    %p166 = scmp.eq.s32.totalorder %s18, 1
    %p167 = por %p165, %p166
    %p169 = scmp.ne.s32.totalorder %s154, %s168
    %p170 = scmp.eq.s32.totalorder %s18, 0
    %p171 = por %p169, %p170
    %p172 = scmp.le.s32.totalorder 1, %s12
    %p173 = scmp.lt.s32.totalorder %s12, 3
    %p174 = pnand %p172, %p173
    %p175 = pneg %p174
    // Predicated region
    $region9: #{resblock1122_forward.6} parent=5 // pred_check
      _
    $region10: #{resblock1122_forward.6} parent=5 // pred_check_branch
      %177 = sbr.rel (%p174) target = $region12
    $region11: #{resblock1122_forward.6} parent=5 // pred_region
      %s178 = ssub.s32 %s12, 1
      // Predicated region
      $region13: #{resblock1122_forward.6} parent=11 // pred_check
        %p179 = pneg %p73
      $region14: #{resblock1122_forward.6} parent=11 // pred_check_branch
        %181 = sbr.rel (%p179) target = $region16
      $region15: #{resblock1122_forward.6} parent=11 // pred_region
        _
      $region16: #{resblock1122_forward.6} parent=11 // pred_fallthru
        _
      // Predicated region
      $region17: #{resblock1122_forward.6} parent=11 // pred_check
        %p182 = pneg %p94
      $region18: #{resblock1122_forward.6} parent=11 // pred_check_branch
        %184 = sbr.rel (%p182) target = $region20
      $region19: #{resblock1122_forward.6} parent=11 // pred_region
        _
      $region20: #{resblock1122_forward.6} parent=11 // pred_fallthru
        _
    $region12: #{resblock1122_forward.6} parent=5 // pred_fallthru
      _
    %p185 = scmp.lt.s32.totalorder %s12, 2
    // Predicated region
    $region21: #{resblock1122_forward.6} parent=5 // pred_check
      %p186 = pneg %p185
    $region22: #{resblock1122_forward.6} parent=5 // pred_check_branch
      %188 = sbr.rel (%p186) target = $region24
    $region23: #{resblock1122_forward.6} parent=5 // pred_region
      // Predicated region
      $region25: #{resblock1122_forward.6} parent=23 // pred_check
        %p189 = pneg %p46
      $region26: #{resblock1122_forward.6} parent=23 // pred_check_branch
        %191 = sbr.rel (%p189) target = $region28
      $region27: #{resblock1122_forward.6} parent=23 // pred_region
        %s192 = smul.u32 2, %s20
        %p193 = scmp.lt.s32.totalorder %s19, 1
        %s194 = scalar_select %p193, %s19, 1
        %p195 = scmp.lt.s32.totalorder %s192, 1
        %s196 = scalar_select %p195, %s192, 1
        %s197 = smul.addr %s194, 72
        %s198 = sadd.s32 %s196, %s197
        %s199 = smul.addr %s198, 4
        %s200 = scalar_lea.vmem %s0, %s199
        %s201 = smul.u32 2, %s20
      $region28: #{resblock1122_forward.6} parent=23 // pred_fallthru
        _
    $region24: #{resblock1122_forward.6} parent=5 // pred_fallthru
      _
    %p202 = scmp.le.s32.totalorder 1, %s12
    %p203 = scmp.lt.s32.totalorder %s12, 3
    %p204 = pnand %p202, %p203
    %p205 = pneg %p204
    // Predicated region
    $region29: #{resblock1122_forward.6} parent=5 // pred_check
      _
    $region30: #{resblock1122_forward.6} parent=5 // pred_check_branch
      %207 = sbr.rel (%p204) target = $region32
    $region31: #{resblock1122_forward.6} parent=5 // pred_region
      %s208 = ssub.s32 %s12, 1
      %s209 = smul.u32 2, %s22
      %p210 = scmp.lt.s32.totalorder %s21, 1
      %s211 = scalar_select %p210, %s21, 1
      %p212 = scmp.lt.s32.totalorder %s209, 1
      %s213 = scalar_select %p212, %s209, 1
      %s214 = smul.addr %s211, 72
      %s215 = sadd.s32 %s213, %s214
      %s216 = smul.addr %s215, 4
      %s217 = scalar_lea.vmem %s0, %s216
      %p218 = pneg %p52
      %p219 = pneg %p49
      %p220 = pneg %p73
      %p221 = pneg %p70
      %p222 = pneg %p94
      %p223 = pneg %p91
      %p224 = pneg %p122
      %p225 = pneg %p119
      %s226 = smul.u32 2, %s22
      %p227 = scmp.lt.s32.totalorder %s21, 1
      %s228 = scalar_select %p227, %s21, 1
      %p229 = scmp.lt.s32.totalorder %s226, 1
      %s230 = scalar_select %p229, %s226, 1
      %s231 = smul.addr %s228, 8
      %s232 = sadd.s32 %s230, %s231
      %s233 = smul.addr %s232, 4
      %s234 = scalar_lea.vmem %s3, %s233
      %p235 = pneg %p143
      %p236 = pneg %p140
      %p237 = pneg %p164
      %p238 = pneg %p161
      %s239 = smul.u32 2, %s22
      %p240 = scmp.lt.s32.totalorder %s21, 1
      %s241 = scalar_select %p240, %s21, 1
      %p242 = scmp.lt.s32.totalorder %s239, 1
      %s243 = scalar_select %p242, %s239, 1
      %s244 = smul.addr %s241, 72
      %s245 = sadd.s32 %s243, %s244
      %s246 = smul.addr %s245, 4
      %s247 = scalar_lea.vmem %s0, %s246
      %s248 = smul.u32 2, %s22
      %s249 = smul.u32 2, %s22
      %p250 = scmp.lt.s32.totalorder %s21, 1
      %s251 = scalar_select %p250, %s21, 1
      %p252 = scmp.lt.s32.totalorder %s249, 1
      %s253 = scalar_select %p252, %s249, 1
      %s254 = smul.addr %s251, 8
      %s255 = sadd.s32 %s253, %s254
      %s256 = smul.addr %s255, 4
      %s257 = scalar_lea.vmem %s3, %s256
      %s258 = smul.u32 2, %s22
      %p260 = scmp.eq.s32.totalorder %s21, 0
      %p261 = scmp.eq.s32.totalorder %s22, 0
      %p262 = pnand %p260, %p261
      %p263 = pneg %p262
      // Predicated region
      $region33: #{resblock1122_forward.6} parent=31 // pred_check
        _
      $region34: #{resblock1122_forward.6} parent=31 // pred_check_branch
        %265 = sbr.rel (%p262) target = $region36
      $region35: #{resblock1122_forward.6} parent=31 // pred_region
        %vm266 = vcmask 7168
        %267 = vst.msk [vmem:[%s4] sm:$0xff] %vm266, 0.0
        %268 = vst.msk [vmem:[%s4 + $0x8] sm:$0xff] %vm266, 0.0
        %269 = vst.msk [vmem:[%s4 + $0x10] sm:$0xff] %vm266, 0.0
        %270 = vst.msk [vmem:[%s4 + $0x18] sm:$0xff] %vm266, 0.0
        %271 = vst.msk [vmem:[%s5] sm:$0xff] %vm266, 0.0
        %272 = vst.msk [vmem:[%s5 + $0x8] sm:$0xff] %vm266, 0.0
        %273 = vst.msk [vmem:[%s5 + $0x10] sm:$0xff] %vm266, 0.0
        %274 = vst.msk [vmem:[%s5 + $0x18] sm:$0xff] %vm266, 0.0
      $region36: #{resblock1122_forward.6} parent=31 // pred_fallthru
        _
      %v275 = vld [vmem:[%s1] sm:$0xff]
      %v276 = vld [vmem:[%s1 + $0x8] sm:$0xf]
      %v277 = vld [vmem:[%s1 + $0xc] sm:$0xff]
      %v278 = vld [vmem:[%s1 + $0x14] sm:$0xf]
      %v279 = vld [vmem:[%s1 + $0x18] sm:$0xff]
      %v280 = vld [vmem:[%s1 + $0x20] sm:$0xf]
      %v281 = vld [vmem:[%s1 + $0x24] sm:$0xff]
      %v282 = vld [vmem:[%s1 + $0x2c] sm:$0xf]
      %v283 = vld [vmem:[%s247] sm:$0xff]
      %v284 = vld [vmem:[%s247 + $0x8] sm:$0xff]
      %v285 = vld [vmem:[%s247 + $0x10] sm:$0xff]
      %v286 = vld [vmem:[%s247 + $0x18] sm:$0xff]
      %v287 = vld [vmem:[%s247 + $0x20] sm:$0xff]
      %v288 = vld [vmem:[%s247 + $0x28] sm:$0xff]
      %v289 = vld [vmem:[%s247 + $0x30] sm:$0xff]
      %v290 = vld [vmem:[%s247 + $0x38] sm:$0xff]
      %v291 = vld [vmem:[%s247 + $0x40] sm:$0xff]
      %v292 = vld [vmem:[%s247 + $0x48] sm:$0xff]
      %v293 = vld [vmem:[%s247 + $0x50] sm:$0xff]
      %v294 = vld [vmem:[%s247 + $0x58] sm:$0xff]
      %v295 = vld [vmem:[%s247 + $0x60] sm:$0xff]
      %v296 = vld [vmem:[%s247 + $0x68] sm:$0xff]
      %v297 = vld [vmem:[%s247 + $0x70] sm:$0xff]
      %v298 = vld [vmem:[%s247 + $0x78] sm:$0xff]
      %v299 = vld [vmem:[%s247 + $0x80] sm:$0xff]
      %v300 = vld [vmem:[%s247 + $0x88] sm:$0xff]
      %v301 = vld [vmem:[%s247 + $0x90] sm:$0xff]
      %v302 = vld [vmem:[%s247 + $0x98] sm:$0xff]
      %v303 = vld [vmem:[%s247 + $0xa0] sm:$0xff]
      %v304 = vld [vmem:[%s247 + $0xa8] sm:$0xff]
      %v305 = vld [vmem:[%s247 + $0xb0] sm:$0xff]
      %v306 = vld [vmem:[%s247 + $0xb8] sm:$0xff]
      %v307 = vld [vmem:[%s247 + $0xc0] sm:$0xff]
      %v308 = vld [vmem:[%s247 + $0xc8] sm:$0xff]
      %v309 = vld [vmem:[%s247 + $0xd0] sm:$0xff]
      %v310 = vld [vmem:[%s247 + $0xd8] sm:$0xff]
      %v311 = vld [vmem:[%s247 + $0xe0] sm:$0xff]
      %v312 = vld [vmem:[%s247 + $0xe8] sm:$0xff]
      %v313 = vld [vmem:[%s247 + $0xf0] sm:$0xff]
      %v314 = vld [vmem:[%s247 + $0xf8] sm:$0xff]
      %v315 = vld [vmem:[%s247 + $0x100] sm:$0xff]
      %v316 = vld [vmem:[%s247 + $0x108] sm:$0xff]
      %v317 = vld [vmem:[%s247 + $0x110] sm:$0xff]
      %v318 = vld [vmem:[%s247 + $0x118] sm:$0xff]
      %v319 = vld [vmem:[%s2] sm:$0xff]
      %v320 = vld [vmem:[%s2 + $0x8] sm:$0xff]
      %v321 = vld [vmem:[%s2 + $0x10] sm:$0xff]
      %v322 = vld [vmem:[%s2 + $0x18] sm:$0xff]
      %324 = vset.pattern.permute.xlu0 0
      %325 = vperm.xlu0 %324, %v319
      %v326 = vpop.permute.xlu0 %325
      %329 = vset.pattern.permute.xlu0 0
      %330 = vperm.xlu0 %329, %v320
      %v331 = vpop.permute.xlu0 %330
      %334 = vset.pattern.permute.xlu0 0
      %335 = vperm.xlu0 %334, %v321
      %v336 = vpop.permute.xlu0 %335
      %339 = vset.pattern.permute.xlu0 0
      %340 = vperm.xlu0 %339, %v322
      %v341 = vpop.permute.xlu0 %340
      %v351 = vunpack.c.l.b16 %v275
      %v352 = vunpack.c.h.b16 %v275
      %v353 = vunpack.c.l.b16 %v276
      %v354 = vunpack.c.l.b16 %v277
      %v355 = vunpack.c.h.b16 %v277
      %v356 = vunpack.c.l.b16 %v278
      %v357 = vunpack.c.l.b16 %v279
      %v358 = vunpack.c.h.b16 %v279
      %v359 = vunpack.c.l.b16 %v280
      %v360 = vunpack.c.l.b16 %v281
      %v361 = vunpack.c.h.b16 %v281
      %v362 = vunpack.c.l.b16 %v282
      %v363 = vpack.c.b16 %v354, %v351
      %v364 = vpack.c.b16 %v355, %v352
      %v365 = vpack.c.b16 %v356, %v353
      %v366 = vpack.c.b16 %v360, %v357
      %v367 = vpack.c.b16 %v361, %v358
      %v368 = vpack.c.b16 %v362, %v359
      %v409 = vunpack.c.l.b16 %v283
      %v410 = vunpack.c.h.b16 %v283
      %v411 = vunpack.c.l.b16 %v284
      %v412 = vunpack.c.h.b16 %v284
      %v413 = vunpack.c.l.b16 %v285
      %v414 = vunpack.c.h.b16 %v285
      %v415 = vunpack.c.l.b16 %v286
      %v416 = vunpack.c.h.b16 %v286
      %v417 = vunpack.c.l.b16 %v287
      %v418 = vunpack.c.h.b16 %v287
      %v419 = vunpack.c.l.b16 %v288
      %v420 = vunpack.c.h.b16 %v288
      %v421 = vunpack.c.l.b16 %v289
      %v422 = vunpack.c.h.b16 %v289
      %v423 = vunpack.c.l.b16 %v290
      %v424 = vunpack.c.h.b16 %v290
      %v425 = vunpack.c.l.b16 %v291
      %v426 = vunpack.c.h.b16 %v291
      %v427 = vunpack.c.l.b16 %v292
      %v428 = vunpack.c.h.b16 %v292
      %v429 = vunpack.c.l.b16 %v293
      %v430 = vunpack.c.h.b16 %v293
      %v431 = vunpack.c.l.b16 %v294
      %v432 = vunpack.c.h.b16 %v294
      %v433 = vunpack.c.l.b16 %v295
      %v434 = vunpack.c.h.b16 %v295
      %v435 = vunpack.c.l.b16 %v296
      %v436 = vunpack.c.h.b16 %v296
      %v437 = vunpack.c.l.b16 %v297
      %v438 = vunpack.c.h.b16 %v297
      %v439 = vunpack.c.l.b16 %v298
      %v440 = vunpack.c.h.b16 %v298
      %v441 = vunpack.c.l.b16 %v299
      %v442 = vunpack.c.h.b16 %v299
      %v443 = vunpack.c.l.b16 %v300
      %v444 = vunpack.c.h.b16 %v300
      %v445 = vunpack.c.l.b16 %v301
      %v446 = vunpack.c.h.b16 %v301
      %v447 = vunpack.c.l.b16 %v302
      %v448 = vunpack.c.h.b16 %v302
      %v449 = vunpack.c.l.b16 %v303
      %v450 = vunpack.c.h.b16 %v303
      %v451 = vunpack.c.l.b16 %v304
      %v452 = vunpack.c.h.b16 %v304
      %v453 = vunpack.c.l.b16 %v305
      %v454 = vunpack.c.h.b16 %v305
      %v455 = vunpack.c.l.b16 %v306
      %v456 = vunpack.c.h.b16 %v306
      %v457 = vunpack.c.l.b16 %v307
      %v458 = vunpack.c.h.b16 %v307
      %v459 = vunpack.c.l.b16 %v308
      %v460 = vunpack.c.h.b16 %v308
      %v461 = vunpack.c.l.b16 %v309
      %v462 = vunpack.c.h.b16 %v309
      %v463 = vunpack.c.l.b16 %v310
      %v464 = vunpack.c.h.b16 %v310
      %v465 = vunpack.c.l.b16 %v311
      %v466 = vunpack.c.h.b16 %v311
      %v467 = vunpack.c.l.b16 %v312
      %v468 = vunpack.c.h.b16 %v312
      %v469 = vunpack.c.l.b16 %v313
      %v470 = vunpack.c.h.b16 %v313
      %v471 = vunpack.c.l.b16 %v314
      %v472 = vunpack.c.h.b16 %v314
      %v473 = vunpack.c.l.b16 %v315
      %v474 = vunpack.c.h.b16 %v315
      %v475 = vunpack.c.l.b16 %v316
      %v476 = vunpack.c.h.b16 %v316
      %v477 = vunpack.c.l.b16 %v317
      %v478 = vunpack.c.h.b16 %v317
      %v479 = vunpack.c.l.b16 %v318
      %v480 = vunpack.c.h.b16 %v318
      %v481 = vpack.c.b16 %v411, %v409
      %v482 = vpack.c.b16 %v412, %v410
      %v483 = vpack.c.b16 %v415, %v413
      %v484 = vpack.c.b16 %v416, %v414
      %v485 = vpack.c.b16 %v419, %v417
      %v486 = vpack.c.b16 %v420, %v418
      %v487 = vpack.c.b16 %v423, %v421
      %v488 = vpack.c.b16 %v424, %v422
      %v489 = vpack.c.b16 %v427, %v425
      %v490 = vpack.c.b16 %v428, %v426
      %v491 = vpack.c.b16 %v431, %v429
      %v492 = vpack.c.b16 %v432, %v430
      %v493 = vpack.c.b16 %v435, %v433
      %v494 = vpack.c.b16 %v436, %v434
      %v495 = vpack.c.b16 %v439, %v437
      %v496 = vpack.c.b16 %v440, %v438
      %v497 = vpack.c.b16 %v443, %v441
      %v498 = vpack.c.b16 %v444, %v442
      %v499 = vpack.c.b16 %v447, %v445
      %v500 = vpack.c.b16 %v448, %v446
      %v501 = vpack.c.b16 %v451, %v449
      %v502 = vpack.c.b16 %v452, %v450
      %v503 = vpack.c.b16 %v455, %v453
      %v504 = vpack.c.b16 %v456, %v454
      %v505 = vpack.c.b16 %v459, %v457
      %v506 = vpack.c.b16 %v460, %v458
      %v507 = vpack.c.b16 %v463, %v461
      %v508 = vpack.c.b16 %v464, %v462
      %v509 = vpack.c.b16 %v467, %v465
      %v510 = vpack.c.b16 %v468, %v466
      %v511 = vpack.c.b16 %v471, %v469
      %v512 = vpack.c.b16 %v472, %v470
      %v513 = vpack.c.b16 %v475, %v473
      %v514 = vpack.c.b16 %v476, %v474
      %v515 = vpack.c.b16 %v479, %v477
      %v516 = vpack.c.b16 %v480, %v478
      %vm553 = vcmask 261120
      %v555 = vsel %vm553, %v365, 0
      %v558 = vsel %vm553, %v368, 0
      %560 = vmatprep.subr.bf16.mxu0 %v496
      %561 = vmatpush1.bf16.msra.mxu0 %v495
      %562 = vmatprep.subr.bf16.mxu0 %v494
      %563 = vmatpush1.bf16.msra.mxu0 %v493
      %564 = vmatprep.subr.bf16.mxu0 %v492
      %565 = vmatpush1.bf16.msra.mxu0 %v491
      %566 = vmatprep.subr.bf16.mxu0 %v490
      %567 = vmatpush1.bf16.msra.mxu0 %v489
      %568 = vmatprep.subr.bf16.mxu0 %v488
      %569 = vmatpush1.bf16.msra.mxu0 %v487
      %570 = vmatprep.subr.bf16.mxu0 %v486
      %571 = vmatpush1.bf16.msra.mxu0 %v485
      %572 = vmatprep.subr.bf16.mxu0 %v484
      %573 = vmatpush1.bf16.msra.mxu0 %v483
      %574 = vmatprep.subr.bf16.mxu0 %v482
      %575 = vmatpush1.bf16.msra.mxu0 %v481
      %576 = vmatprep.subr.bf16.mxu0 %v512
      %577 = vmatpush2.bf16.msra.mxu0 %v511
      %578 = vmatprep.subr.bf16.mxu0 %v510
      %579 = vmatpush2.bf16.msra.mxu0 %v509
      %580 = vmatprep.subr.bf16.mxu0 %v508
      %581 = vmatpush2.bf16.msra.mxu0 %v507
      %582 = vmatprep.subr.bf16.mxu0 %v506
      %583 = vmatpush2.bf16.msra.mxu0 %v505
      %584 = vmatprep.subr.bf16.mxu0 %v504
      %585 = vmatpush2.bf16.msra.mxu0 %v503
      %586 = vmatprep.subr.bf16.mxu0 %v502
      %587 = vmatpush2.bf16.msra.mxu0 %v501
      %588 = vmatprep.subr.bf16.mxu0 %v500
      %589 = vmatpush2.bf16.msra.mxu0 %v499
      %590 = vmatprep.subr.bf16.mxu0 %v498
      %591 = vmatpush2.bf16.msra.mxu0 %v497
      %592 = vmatprep.mubr.bf16.mxu0 %v364
      %593 = vmatmul.mubr.bf16.gmra.mxu0 %v363
      %v594 = vpop.f32.mrf.mxu0
      %v595 = vadd.f32 %v326, %v594
      %v596 = vpop.f32.mrf.mxu0
      %v597 = vadd.f32 %v326, %v596
      %v598 = vpop.f32.mrf.mxu0
      %v599 = vadd.f32 %v331, %v598
      %v600 = vpop.f32.mrf.mxu0
      %v601 = vadd.f32 %v331, %v600
      %602 = vmatprep.mubr.bf16.mxu0 %v367
      %603 = vmatmul.mubr.bf16.gmra.mxu0 %v366
      %v604 = vpop.f32.mrf.mxu0
      %v605 = vadd.f32 %v336, %v604
      %v606 = vpop.f32.mrf.mxu0
      %v607 = vadd.f32 %v336, %v606
      %v608 = vpop.f32.mrf.mxu0
      %v609 = vadd.f32 %v341, %v608
      %v610 = vpop.f32.mrf.mxu0
      %v611 = vadd.f32 %v341, %v610
      %612 = vdwg.mxu0
      %613 = vmatprep.subr.bf16.mxu0 0
      %614 = vmatpush1.bf16.msra.mxu0 0
      %615 = vmatprep.subr.bf16.mxu0 0
      %616 = vmatpush1.bf16.msra.mxu0 0
      %617 = vmatprep.subr.bf16.mxu0 0
      %618 = vmatpush1.bf16.msra.mxu0 0
      %619 = vmatprep.subr.bf16.mxu0 0
      %620 = vmatpush1.bf16.msra.mxu0 0
      %621 = vmatprep.subr.bf16.mxu0 0
      %622 = vmatpush1.bf16.msra.mxu0 0
      %623 = vmatprep.subr.bf16.mxu0 0
      %624 = vmatpush1.bf16.msra.mxu0 0
      %625 = vmatprep.subr.bf16.mxu0 %v516
      %626 = vmatpush1.bf16.msra.mxu0 %v515
      %627 = vmatprep.subr.bf16.mxu0 %v514
      %628 = vmatpush1.bf16.msra.mxu0 %v513
      %629 = vmatprep.subr.bf16.mxu0 0
      %630 = vmatpush2.bf16.msra.mxu0 0
      %631 = vmatprep.subr.bf16.mxu0 0
      %632 = vmatpush2.bf16.msra.mxu0 0
      %633 = vmatprep.subr.bf16.mxu0 0
      %634 = vmatpush2.bf16.msra.mxu0 0
      %635 = vmatprep.subr.bf16.mxu0 0
      %636 = vmatpush2.bf16.msra.mxu0 0
      %637 = vmatprep.subr.bf16.mxu0 0
      %638 = vmatpush2.bf16.msra.mxu0 0
      %639 = vmatprep.subr.bf16.mxu0 0
      %640 = vmatpush2.bf16.msra.mxu0 0
      %641 = vmatprep.subr.bf16.mxu0 0
      %642 = vmatpush2.bf16.msra.mxu0 0
      %643 = vmatprep.subr.bf16.mxu0 0
      %644 = vmatpush2.bf16.msra.mxu0 0
      %645 = vmatprep.mubr.bf16.mxu0 0
      %646 = vmatmul.mubr.bf16.gmra.mxu0 %v555
      %v647 = vpop.f32.mrf.mxu0
      %v648 = vadd.f32 %v595, %v647
      %v649 = vpop.f32.mrf.mxu0
      %v650 = vadd.f32 %v597, %v649
      %v651 = vpop.f32.mrf.mxu0
      %v652 = vadd.f32 %v599, %v651
      %v653 = vpop.f32.mrf.mxu0
      %v654 = vadd.f32 %v601, %v653
      %655 = vmatprep.mubr.bf16.mxu0 0
      %656 = vmatmul.mubr.bf16.gmra.mxu0 %v558
      %v657 = vpop.f32.mrf.mxu0
      %v658 = vadd.f32 %v605, %v657
      %v659 = vpop.f32.mrf.mxu0
      %v660 = vadd.f32 %v607, %v659
      %v661 = vpop.f32.mrf.mxu0
      %v662 = vadd.f32 %v609, %v661
      %v663 = vpop.f32.mrf.mxu0
      %v664 = vadd.f32 %v611, %v663
      %665 = vdwg.mxu0
      %vm666 = vcmp.gt.f32.partialorder %v648, 0.0
      %vm667 = vcmp.gt.f32.partialorder %v650, 0.0
      %vm668 = vcmp.gt.f32.partialorder %v652, 0.0
      %vm669 = vcmp.gt.f32.partialorder %v654, 0.0
      %vm670 = vcmp.gt.f32.partialorder %v658, 0.0
      %vm671 = vcmp.gt.f32.partialorder %v660, 0.0
      %vm672 = vcmp.gt.f32.partialorder %v662, 0.0
      %vm673 = vcmp.gt.f32.partialorder %v664, 0.0
      %v674 = vmul.f32 %v648, 0.01
      %v675 = vmul.f32 %v650, 0.01
      %v676 = vmul.f32 %v652, 0.01
      %v677 = vmul.f32 %v654, 0.01
      %v678 = vmul.f32 %v658, 0.01
      %v679 = vmul.f32 %v660, 0.01
      %v680 = vmul.f32 %v662, 0.01
      %v681 = vmul.f32 %v664, 0.01
      %v682 = vsel %vm666, %v648, %v674
      %v683 = vsel %vm667, %v650, %v675
      %v684 = vsel %vm668, %v652, %v676
      %v685 = vsel %vm669, %v654, %v677
      %v686 = vsel %vm670, %v658, %v678
      %v687 = vsel %vm671, %v660, %v679
      %v688 = vsel %vm672, %v662, %v680
      %v689 = vsel %vm673, %v664, %v681
      %v690 = vpack.c.bf16 %v684, %v682
      %v691 = vpack.c.bf16 %v685, %v683
      %v692 = vpack.c.bf16 %v688, %v686
      %v693 = vpack.c.bf16 %v689, %v687
      %v698 = vunpack.c.l.b16 %v690
      %v699 = vunpack.c.l.b16 %v691
      %v700 = vunpack.c.h.b16 %v690
      %v701 = vunpack.c.h.b16 %v691
      %v702 = vunpack.c.l.b16 %v692
      %v703 = vunpack.c.l.b16 %v693
      %v704 = vunpack.c.h.b16 %v692
      %v705 = vunpack.c.h.b16 %v693
      %v706 = vpack.c.b16 %v699, %v698
      %v707 = vpack.c.b16 %v701, %v700
      %v708 = vpack.c.b16 %v703, %v702
      %v709 = vpack.c.b16 %v705, %v704
      %714 = vst [vmem:[%s257] sm:$0xff] %v706
      %715 = vst [vmem:[%s257 + $0x8] sm:$0xff] %v707
      %716 = vst [vmem:[%s257 + $0x10] sm:$0xff] %v708
      %717 = vst [vmem:[%s257 + $0x18] sm:$0xff] %v709
      %v718 = vld [vmem:[%s4] sm:$0xff]
      %v719 = vld [vmem:[%s4 + $0x8] sm:$0xff]
      %v720 = vld [vmem:[%s4 + $0x10] sm:$0xff]
      %v721 = vld [vmem:[%s4 + $0x18] sm:$0xff]
      %v722 = vadd.f32 %v682, %v683
      %723 = vadd.xlane.f32.xlu0 %v722
      %v724 = vpop.xlane.xlu0 %723
      %v725 = vadd.f32 %v684, %v685
      %726 = vadd.xlane.f32.xlu0 %v725
      %v727 = vpop.xlane.xlu0 %726
      %v728 = vadd.f32 %v686, %v687
      %729 = vadd.xlane.f32.xlu0 %v728
      %v730 = vpop.xlane.xlu0 %729
      %v731 = vadd.f32 %v688, %v689
      %732 = vadd.xlane.f32.xlu0 %v731
      %v733 = vpop.xlane.xlu0 %732
      %v734 = vadd.f32 %v718, %v724
      %v735 = vadd.f32 %v719, %v727
      %v736 = vadd.f32 %v720, %v730
      %v737 = vadd.f32 %v721, %v733
      %vm738 = vcmask 7168
      %739 = vst.msk [vmem:[%s4] sm:$0xff] %vm738, %v734
      %740 = vst.msk [vmem:[%s4 + $0x8] sm:$0xff] %vm738, %v735
      %741 = vst.msk [vmem:[%s4 + $0x10] sm:$0xff] %vm738, %v736
      %742 = vst.msk [vmem:[%s4 + $0x18] sm:$0xff] %vm738, %v737
      %v743 = vld [vmem:[%s5] sm:$0xff]
      %v744 = vld [vmem:[%s5 + $0x8] sm:$0xff]
      %v745 = vld [vmem:[%s5 + $0x10] sm:$0xff]
      %v746 = vld [vmem:[%s5 + $0x18] sm:$0xff]
      %v747 = vmul.f32 %v682, %v682
      %v748 = vmul.f32 %v683, %v683
      %v749 = vmul.f32 %v684, %v684
      %v750 = vmul.f32 %v685, %v685
      %v751 = vmul.f32 %v686, %v686
      %v752 = vmul.f32 %v687, %v687
      %v753 = vmul.f32 %v688, %v688
      %v754 = vmul.f32 %v689, %v689
      %v755 = vadd.f32 %v747, %v748
      %756 = vadd.xlane.f32.xlu0 %v755
      %v757 = vpop.xlane.xlu0 %756
      %v758 = vadd.f32 %v749, %v750
      %759 = vadd.xlane.f32.xlu0 %v758
      %v760 = vpop.xlane.xlu0 %759
      %v761 = vadd.f32 %v751, %v752
      %762 = vadd.xlane.f32.xlu0 %v761
      %v763 = vpop.xlane.xlu0 %762
      %v764 = vadd.f32 %v753, %v754
      %765 = vadd.xlane.f32.xlu0 %v764
      %v766 = vpop.xlane.xlu0 %765
      %v767 = vadd.f32 %v743, %v757
      %v768 = vadd.f32 %v744, %v760
      %v769 = vadd.f32 %v745, %v763
      %v770 = vadd.f32 %v746, %v766
      %771 = vst.msk [vmem:[%s5] sm:$0xff] %vm738, %v767
      %772 = vst.msk [vmem:[%s5 + $0x8] sm:$0xff] %vm738, %v768
      %773 = vst.msk [vmem:[%s5 + $0x10] sm:$0xff] %vm738, %v769
      %774 = vst.msk [vmem:[%s5 + $0x18] sm:$0xff] %vm738, %v770
      %s775 = smul.u32 2, %s22
      %p776 = scmp.lt.s32.totalorder %s21, 1
      %s777 = scalar_select %p776, %s21, 1
      %p778 = scmp.lt.s32.totalorder %s775, 1
      %s779 = scalar_select %p778, %s775, 1
      %s780 = smul.addr %s777, 8
      %s781 = sadd.s32 %s779, %s780
      %s782 = smul.addr %s781, 4
      %s783 = scalar_lea.vmem %s3, %s782
      // Predicated region
      $region37: #{resblock1122_forward.6} parent=31 // pred_check
        %p784 = pneg %p119
      $region38: #{resblock1122_forward.6} parent=31 // pred_check_branch
        %786 = sbr.rel (%p784) target = $region40
      $region39: #{resblock1122_forward.6} parent=31 // pred_region
        %s787 = smul.u32 2, %s22
      $region40: #{resblock1122_forward.6} parent=31 // pred_fallthru
        _
      // Predicated region
      $region41: #{resblock1122_forward.6} parent=31 // pred_check
        %p788 = pneg %p140
      $region42: #{resblock1122_forward.6} parent=31 // pred_check_branch
        %790 = sbr.rel (%p788) target = $region44
      $region43: #{resblock1122_forward.6} parent=31 // pred_region
        _
      $region44: #{resblock1122_forward.6} parent=31 // pred_fallthru
        _
      // Predicated region
      $region45: #{resblock1122_forward.6} parent=31 // pred_check
        %p791 = pneg %p161
      $region46: #{resblock1122_forward.6} parent=31 // pred_check_branch
        %793 = sbr.rel (%p791) target = $region48
      $region47: #{resblock1122_forward.6} parent=31 // pred_region
        _
      $region48: #{resblock1122_forward.6} parent=31 // pred_fallthru
        _
      // Predicated region
      $region49: #{resblock1122_forward.6} parent=31 // pred_check
        %p794 = pneg %p140
      $region50: #{resblock1122_forward.6} parent=31 // pred_check_branch
        %796 = sbr.rel (%p794) target = $region52
      $region51: #{resblock1122_forward.6} parent=31 // pred_region
        _
      $region52: #{resblock1122_forward.6} parent=31 // pred_fallthru
        _
      // Predicated region
      $region53: #{resblock1122_forward.6} parent=31 // pred_check
        %p797 = pneg %p161
      $region54: #{resblock1122_forward.6} parent=31 // pred_check_branch
        %799 = sbr.rel (%p797) target = $region56
      $region55: #{resblock1122_forward.6} parent=31 // pred_region
        _
      $region56: #{resblock1122_forward.6} parent=31 // pred_fallthru
        _
    $region32: #{resblock1122_forward.6} parent=5 // pred_fallthru
      _
    %p800 = scmp.le.s32.totalorder 2, %s12
    // Predicated region
    $region57: #{resblock1122_forward.6} parent=5 // pred_check
      %p801 = pneg %p800
    $region58: #{resblock1122_forward.6} parent=5 // pred_check_branch
      %803 = sbr.rel (%p801) target = $region60
    $region59: #{resblock1122_forward.6} parent=5 // pred_region
      %s804 = ssub.s32 %s12, 2
      // Predicated region
      $region61: #{resblock1122_forward.6} parent=59 // pred_check
        %p805 = pneg %p125
      $region62: #{resblock1122_forward.6} parent=59 // pred_check_branch
        %807 = sbr.rel (%p805) target = $region64
      $region63: #{resblock1122_forward.6} parent=59 // pred_region
        %s808 = smul.u32 2, %s24
        %p809 = scmp.lt.s32.totalorder %s23, 1
        %s810 = scalar_select %p809, %s23, 1
        %p811 = scmp.lt.s32.totalorder %s808, 1
        %s812 = scalar_select %p811, %s808, 1
        %s813 = smul.addr %s810, 8
        %s814 = sadd.s32 %s812, %s813
        %s815 = smul.addr %s814, 4
        %s816 = scalar_lea.vmem %s3, %s815
      $region64: #{resblock1122_forward.6} parent=59 // pred_fallthru
        _
    $region60: #{resblock1122_forward.6} parent=5 // pred_fallthru
      _
  $region6: #{resblock1122_forward.6} parent=0 // loop_footer
    %s16 = sadd.s32 1, %s12
  $region7: #{resblock1122_forward.6} parent=0 // loop_footer_branch
    %11 = sbr.rel target = $region3
  $region8: #{resblock1122_forward.6} parent=0 // loop_exit
    _

// kernel: resblock1122_forward.7
$region0: #{resblock1122_forward.7}
  #allocation0 [shape = 'u32[]', space=smem, size = 0x4, offset = 0x4, fixed_abs, tag = 'smem constant byte address 0x4 - core index']
  #allocation1 [shape = 'u32[144,128]{1,0:T(1,128)}', space=vmem, size = 0x12000, scoped, tag = 'internal scratch']
  %s0 = inlined_call_operand.vmem [shape: bf16[2,128,256], index: 0, kind: input, shape index: {}]
  %s1 = inlined_call_operand.vmem [shape: bf16[32,128], index: 1, kind: input, shape index: {}]
  %s2 = inlined_call_operand.vmem [shape: f32[32,1], index: 2, kind: input, shape index: {}]
  %s3 = inlined_call_operand.vmem [shape: bf16[2,32,256], index: 3, kind: output, shape index: {0}]
  %s4 = inlined_call_operand.vmem [shape: f32[32,1], index: 4, kind: output, shape index: {1}]
  %s5 = inlined_call_operand.vmem [shape: f32[32,1], index: 5, kind: output, shape index: {2}]
  %6 = xla_tuple %s3, %s4, %s5
  %s7 = sld [smem:[#allocation0]]
  $region65: #{resblock1122_forward.7} parent=0
    _
  %s9 = ssub.s32 1, %s7
  %s10 = scalar_select 0, %s9, %s7
  loop: start=0, step=1, limit=4
  $region2: #{resblock1122_forward.7} parent=0 // loop_pre_header
    _
  $region3: #{resblock1122_forward.7} parent=0 // loop_header
    %s12 = sphi 0, %s16
    %p13 = scmp.ge.s32.totalorder %s12, 4
    %s19 = sphi 0, %s31
    %s20 = sphi 0, %s27
    %s21 = sphi 0, %s19
    %s22 = sphi 0, %s20
    %s23 = sphi 0, %s21
    %s24 = sphi 0, %s22
    %s36 = sphi 0, %s38
    %s39 = sphi 0, %s36
    %s40 = sphi 0, %s39
    %s56 = sphi 0, %s40
    %s60 = sphi 0, %s60
    %s62 = sphi 0, %s60
    %s63 = sphi 0, %s62
    %s77 = sphi 0, %s63
    %s81 = sphi 0, %s81
    %s83 = sphi 0, %s81
    %s84 = sphi 0, %s83
    %s98 = sphi 0, %s84
    %s106 = sphi 0, %s108
    %s109 = sphi 0, %s106
    %s110 = sphi 0, %s109
    %s126 = sphi 0, %s110
    %s130 = sphi 0, %s130
    %s132 = sphi 0, %s130
    %s133 = sphi 0, %s132
    %s147 = sphi 0, %s133
    %s151 = sphi 0, %s151
    %s153 = sphi 0, %s151
    %s154 = sphi 0, %s153
    %s168 = sphi 0, %s154
  $region4: #{resblock1122_forward.7} parent=0 // loop_header_branch
    %15 = sbr.rel (%p13) target = $region8
  $region5: #{resblock1122_forward.7} parent=0 // loop_body
    %s17 = ssub.s32 %s12, 1
    %s18 = ssub.s32 %s12, 2
    %s25 = sadd.s32 1, %s20
    %p26 = scmp.ge.s32.totalorder %s25, 1
    %s27 = scalar_select %p26, 0, %s25
    %s28 = sadd.s32 1, %s19
    %s29 = scalar_select %p26, %s28, %s19
    %p30 = scmp.ge.s32.totalorder %s29, 2
    %s31 = scalar_select %p30, 0, %s29
    %s32 = ssub.s32 %s19, %s31
    %s33 = ssub.s32 %s20, %s27
    %s34 = sor.u32 %s32, %s33
    %p35 = scmp.eq.s32.totalorder %s34, 0
    %s37 = sadd.s32 %s36, 1
    %s38 = scalar_select %p35, %s36, %s37
    %p41 = pneg %p35
    %p42 = scmp.eq.s32.totalorder %s12, 1
    %p43 = por %p41, %p42
    %p44 = scmp.ne.s32.totalorder %s36, %s39
    %p45 = scmp.eq.s32.totalorder %s12, 0
    %p46 = por %p44, %p45
    %p47 = scmp.ne.s32.totalorder %s36, %s39
    %p48 = scmp.eq.s32.totalorder %s17, 1
    %p49 = por %p47, %p48
    %p50 = scmp.ne.s32.totalorder %s39, %s40
    %p51 = scmp.eq.s32.totalorder %s17, 0
    %p52 = por %p50, %p51
    %p53 = scmp.ne.s32.totalorder %s39, %s40
    %p54 = scmp.eq.s32.totalorder %s18, 1
    %p55 = por %p53, %p54
    %p57 = scmp.ne.s32.totalorder %s40, %s56
    %p58 = scmp.eq.s32.totalorder %s18, 0
    %p59 = por %p57, %p58
    %s61 = sadd.s32 %s60, 1
    %p64 = scmp.eq.s32.totalorder %s12, 1
    %p65 = scmp.ne.s32.totalorder %s60, %s62
    %p66 = scmp.eq.s32.totalorder %s12, 0
    %p67 = por %p65, %p66
    %p68 = scmp.ne.s32.totalorder %s60, %s62
    %p69 = scmp.eq.s32.totalorder %s17, 1
    %p70 = por %p68, %p69
    %p71 = scmp.ne.s32.totalorder %s62, %s63
    %p72 = scmp.eq.s32.totalorder %s17, 0
    %p73 = por %p71, %p72
    %p74 = scmp.ne.s32.totalorder %s62, %s63
    %p75 = scmp.eq.s32.totalorder %s18, 1
    %p76 = por %p74, %p75
    %p78 = scmp.ne.s32.totalorder %s63, %s77
    %p79 = scmp.eq.s32.totalorder %s18, 0
    %p80 = por %p78, %p79
    %s82 = sadd.s32 %s81, 1
    %p85 = scmp.eq.s32.totalorder %s12, 1
    %p86 = scmp.ne.s32.totalorder %s81, %s83
    %p87 = scmp.eq.s32.totalorder %s12, 0
    %p88 = por %p86, %p87
    %p89 = scmp.ne.s32.totalorder %s81, %s83
    %p90 = scmp.eq.s32.totalorder %s17, 1
    %p91 = por %p89, %p90
    %p92 = scmp.ne.s32.totalorder %s83, %s84
    %p93 = scmp.eq.s32.totalorder %s17, 0
    %p94 = por %p92, %p93
    %p95 = scmp.ne.s32.totalorder %s83, %s84
    %p96 = scmp.eq.s32.totalorder %s18, 1
    %p97 = por %p95, %p96
    %p99 = scmp.ne.s32.totalorder %s84, %s98
    %p100 = scmp.eq.s32.totalorder %s18, 0
    %p101 = por %p99, %p100
    %s102 = ssub.s32 %s19, %s31
    %s103 = ssub.s32 %s20, %s27
    %s104 = sor.u32 %s102, %s103
    %p105 = scmp.eq.s32.totalorder %s104, 0
    %s107 = sadd.s32 %s106, 1
    %s108 = scalar_select %p105, %s106, %s107
    %p111 = pneg %p105
    %p112 = scmp.eq.s32.totalorder %s12, 1
    %p113 = por %p111, %p112
    %p114 = scmp.ne.s32.totalorder %s106, %s109
    %p115 = scmp.eq.s32.totalorder %s12, 0
    %p116 = por %p114, %p115
    %p117 = scmp.ne.s32.totalorder %s106, %s109
    %p118 = scmp.eq.s32.totalorder %s17, 1
    %p119 = por %p117, %p118
    %p120 = scmp.ne.s32.totalorder %s109, %s110
    %p121 = scmp.eq.s32.totalorder %s17, 0
    %p122 = por %p120, %p121
    %p123 = scmp.ne.s32.totalorder %s109, %s110
    %p124 = scmp.eq.s32.totalorder %s18, 1
    %p125 = por %p123, %p124
    %p127 = scmp.ne.s32.totalorder %s110, %s126
    %p128 = scmp.eq.s32.totalorder %s18, 0
    %p129 = por %p127, %p128
    %s131 = sadd.s32 %s130, 1
    %p134 = scmp.eq.s32.totalorder %s12, 1
    %p135 = scmp.ne.s32.totalorder %s130, %s132
    %p136 = scmp.eq.s32.totalorder %s12, 0
    %p137 = por %p135, %p136
    %p138 = scmp.ne.s32.totalorder %s130, %s132
    %p139 = scmp.eq.s32.totalorder %s17, 1
    %p140 = por %p138, %p139
    %p141 = scmp.ne.s32.totalorder %s132, %s133
    %p142 = scmp.eq.s32.totalorder %s17, 0
    %p143 = por %p141, %p142
    %p144 = scmp.ne.s32.totalorder %s132, %s133
    %p145 = scmp.eq.s32.totalorder %s18, 1
    %p146 = por %p144, %p145
    %p148 = scmp.ne.s32.totalorder %s133, %s147
    %p149 = scmp.eq.s32.totalorder %s18, 0
    %p150 = por %p148, %p149
    %s152 = sadd.s32 %s151, 1
    %p155 = scmp.eq.s32.totalorder %s12, 1
    %p156 = scmp.ne.s32.totalorder %s151, %s153
    %p157 = scmp.eq.s32.totalorder %s12, 0
    %p158 = por %p156, %p157
    %p159 = scmp.ne.s32.totalorder %s151, %s153
    %p160 = scmp.eq.s32.totalorder %s17, 1
    %p161 = por %p159, %p160
    %p162 = scmp.ne.s32.totalorder %s153, %s154
    %p163 = scmp.eq.s32.totalorder %s17, 0
    %p164 = por %p162, %p163
    %p165 = scmp.ne.s32.totalorder %s153, %s154
    %p166 = scmp.eq.s32.totalorder %s18, 1
    %p167 = por %p165, %p166
    %p169 = scmp.ne.s32.totalorder %s154, %s168
    %p170 = scmp.eq.s32.totalorder %s18, 0
    %p171 = por %p169, %p170
    %p172 = scmp.le.s32.totalorder 1, %s12
    %p173 = scmp.lt.s32.totalorder %s12, 3
    %p174 = pnand %p172, %p173
    %p175 = pneg %p174
    // Predicated region
    $region9: #{resblock1122_forward.7} parent=5 // pred_check
      _
    $region10: #{resblock1122_forward.7} parent=5 // pred_check_branch
      %177 = sbr.rel (%p174) target = $region12
    $region11: #{resblock1122_forward.7} parent=5 // pred_region
      %s178 = ssub.s32 %s12, 1
      // Predicated region
      $region13: #{resblock1122_forward.7} parent=11 // pred_check
        %p179 = pneg %p73
      $region14: #{resblock1122_forward.7} parent=11 // pred_check_branch
        %181 = sbr.rel (%p179) target = $region16
      $region15: #{resblock1122_forward.7} parent=11 // pred_region
        _
      $region16: #{resblock1122_forward.7} parent=11 // pred_fallthru
        _
      // Predicated region
      $region17: #{resblock1122_forward.7} parent=11 // pred_check
        %p182 = pneg %p94
      $region18: #{resblock1122_forward.7} parent=11 // pred_check_branch
        %184 = sbr.rel (%p182) target = $region20
      $region19: #{resblock1122_forward.7} parent=11 // pred_region
        _
      $region20: #{resblock1122_forward.7} parent=11 // pred_fallthru
        _
    $region12: #{resblock1122_forward.7} parent=5 // pred_fallthru
      _
    %p185 = scmp.lt.s32.totalorder %s12, 2
    // Predicated region
    $region21: #{resblock1122_forward.7} parent=5 // pred_check
      %p186 = pneg %p185
    $region22: #{resblock1122_forward.7} parent=5 // pred_check_branch
      %188 = sbr.rel (%p186) target = $region24
    $region23: #{resblock1122_forward.7} parent=5 // pred_region
      // Predicated region
      $region25: #{resblock1122_forward.7} parent=23 // pred_check
        %p189 = pneg %p46
      $region26: #{resblock1122_forward.7} parent=23 // pred_check_branch
        %191 = sbr.rel (%p189) target = $region28
      $region27: #{resblock1122_forward.7} parent=23 // pred_region
        %s192 = smul.u32 2, %s20
        %p193 = scmp.lt.s32.totalorder %s19, 1
        %s194 = scalar_select %p193, %s19, 1
        %p195 = scmp.lt.s32.totalorder %s192, 1
        %s196 = scalar_select %p195, %s192, 1
        %s197 = smul.addr %s194, 32
        %s198 = sadd.s32 %s196, %s197
        %s199 = smul.addr %s198, 4
        %s200 = scalar_lea.vmem %s0, %s199
        %s201 = smul.u32 2, %s20
      $region28: #{resblock1122_forward.7} parent=23 // pred_fallthru
        _
    $region24: #{resblock1122_forward.7} parent=5 // pred_fallthru
      _
    %p202 = scmp.le.s32.totalorder 1, %s12
    %p203 = scmp.lt.s32.totalorder %s12, 3
    %p204 = pnand %p202, %p203
    %p205 = pneg %p204
    // Predicated region
    $region29: #{resblock1122_forward.7} parent=5 // pred_check
      _
    $region30: #{resblock1122_forward.7} parent=5 // pred_check_branch
      %207 = sbr.rel (%p204) target = $region32
    $region31: #{resblock1122_forward.7} parent=5 // pred_region
      %s208 = ssub.s32 %s12, 1
      %s209 = smul.u32 2, %s22
      %p210 = scmp.lt.s32.totalorder %s21, 1
      %s211 = scalar_select %p210, %s21, 1
      %p212 = scmp.lt.s32.totalorder %s209, 1
      %s213 = scalar_select %p212, %s209, 1
      %s214 = smul.addr %s211, 32
      %s215 = sadd.s32 %s213, %s214
      %s216 = smul.addr %s215, 4
      %s217 = scalar_lea.vmem %s0, %s216
      %p218 = pneg %p52
      %p219 = pneg %p49
      %p220 = pneg %p73
      %p221 = pneg %p70
      %p222 = pneg %p94
      %p223 = pneg %p91
      %p224 = pneg %p122
      %p225 = pneg %p119
      %s226 = smul.u32 2, %s22
      %p227 = scmp.lt.s32.totalorder %s21, 1
      %s228 = scalar_select %p227, %s21, 1
      %p229 = scmp.lt.s32.totalorder %s226, 1
      %s230 = scalar_select %p229, %s226, 1
      %s231 = smul.addr %s228, 8
      %s232 = sadd.s32 %s230, %s231
      %s233 = smul.addr %s232, 4
      %s234 = scalar_lea.vmem %s3, %s233
      %p235 = pneg %p143
      %p236 = pneg %p140
      %p237 = pneg %p164
      %p238 = pneg %p161
      %s239 = smul.u32 2, %s22
      %p240 = scmp.lt.s32.totalorder %s21, 1
      %s241 = scalar_select %p240, %s21, 1
      %p242 = scmp.lt.s32.totalorder %s239, 1
      %s243 = scalar_select %p242, %s239, 1
      %s244 = smul.addr %s241, 32
      %s245 = sadd.s32 %s243, %s244
      %s246 = smul.addr %s245, 4
      %s247 = scalar_lea.vmem %s0, %s246
      %s248 = smul.u32 2, %s22
      %s249 = smul.u32 2, %s22
      %p250 = scmp.lt.s32.totalorder %s21, 1
      %s251 = scalar_select %p250, %s21, 1
      %p252 = scmp.lt.s32.totalorder %s249, 1
      %s253 = scalar_select %p252, %s249, 1
      %s254 = smul.addr %s251, 8
      %s255 = sadd.s32 %s253, %s254
      %s256 = smul.addr %s255, 4
      %s257 = scalar_lea.vmem %s3, %s256
      %s258 = smul.u32 2, %s22
      %p260 = scmp.eq.s32.totalorder %s21, 0
      %p261 = scmp.eq.s32.totalorder %s22, 0
      %p262 = pnand %p260, %p261
      %p263 = pneg %p262
      // Predicated region
      $region33: #{resblock1122_forward.7} parent=31 // pred_check
        _
      $region34: #{resblock1122_forward.7} parent=31 // pred_check_branch
        %265 = sbr.rel (%p262) target = $region36
      $region35: #{resblock1122_forward.7} parent=31 // pred_region
        %vm266 = vcmask 7168
        %267 = vst.msk [vmem:[%s4] sm:$0xff] %vm266, 0.0
        %268 = vst.msk [vmem:[%s4 + $0x8] sm:$0xff] %vm266, 0.0
        %269 = vst.msk [vmem:[%s4 + $0x10] sm:$0xff] %vm266, 0.0
        %270 = vst.msk [vmem:[%s4 + $0x18] sm:$0xff] %vm266, 0.0
        %271 = vst.msk [vmem:[%s5] sm:$0xff] %vm266, 0.0
        %272 = vst.msk [vmem:[%s5 + $0x8] sm:$0xff] %vm266, 0.0
        %273 = vst.msk [vmem:[%s5 + $0x10] sm:$0xff] %vm266, 0.0
        %274 = vst.msk [vmem:[%s5 + $0x18] sm:$0xff] %vm266, 0.0
      $region36: #{resblock1122_forward.7} parent=31 // pred_fallthru
        _
      %v275 = vld [vmem:[%s1] sm:$0xf]
      %v276 = vld [vmem:[%s1 + $0x4] sm:$0xf]
      %v277 = vld [vmem:[%s1 + $0x8] sm:$0xf]
      %v278 = vld [vmem:[%s1 + $0xc] sm:$0xf]
      %v279 = vld [vmem:[%s247] sm:$0xff]
      %v280 = vld [vmem:[%s247 + $0x8] sm:$0xff]
      %v281 = vld [vmem:[%s247 + $0x10] sm:$0xff]
      %v282 = vld [vmem:[%s247 + $0x18] sm:$0xff]
      %v283 = vld [vmem:[%s247 + $0x20] sm:$0xff]
      %v284 = vld [vmem:[%s247 + $0x28] sm:$0xff]
      %v285 = vld [vmem:[%s247 + $0x30] sm:$0xff]
      %v286 = vld [vmem:[%s247 + $0x38] sm:$0xff]
      %v287 = vld [vmem:[%s247 + $0x40] sm:$0xff]
      %v288 = vld [vmem:[%s247 + $0x48] sm:$0xff]
      %v289 = vld [vmem:[%s247 + $0x50] sm:$0xff]
      %v290 = vld [vmem:[%s247 + $0x58] sm:$0xff]
      %v291 = vld [vmem:[%s247 + $0x60] sm:$0xff]
      %v292 = vld [vmem:[%s247 + $0x68] sm:$0xff]
      %v293 = vld [vmem:[%s247 + $0x70] sm:$0xff]
      %v294 = vld [vmem:[%s247 + $0x78] sm:$0xff]
      %v295 = vld [vmem:[%s2] sm:$0xff]
      %v296 = vld [vmem:[%s2 + $0x8] sm:$0xff]
      %v297 = vld [vmem:[%s2 + $0x10] sm:$0xff]
      %v298 = vld [vmem:[%s2 + $0x18] sm:$0xff]
      %300 = vset.pattern.permute.xlu0 0
      %301 = vperm.xlu0 %300, %v295
      %v302 = vpop.permute.xlu0 %301
      %305 = vset.pattern.permute.xlu0 0
      %306 = vperm.xlu0 %305, %v296
      %v307 = vpop.permute.xlu0 %306
      %310 = vset.pattern.permute.xlu0 0
      %311 = vperm.xlu0 %310, %v297
      %v312 = vpop.permute.xlu0 %311
      %315 = vset.pattern.permute.xlu0 0
      %316 = vperm.xlu0 %315, %v298
      %v317 = vpop.permute.xlu0 %316
      %v323 = vunpack.c.l.b16 %v275
      %v324 = vunpack.c.l.b16 %v276
      %v325 = vunpack.c.l.b16 %v277
      %v326 = vunpack.c.l.b16 %v278
      %v327 = vpack.c.b16 %v324, %v323
      %v328 = vpack.c.b16 %v326, %v325
      %v347 = vunpack.c.l.b16 %v279
      %v348 = vunpack.c.h.b16 %v279
      %v349 = vunpack.c.l.b16 %v280
      %v350 = vunpack.c.h.b16 %v280
      %v351 = vunpack.c.l.b16 %v281
      %v352 = vunpack.c.h.b16 %v281
      %v353 = vunpack.c.l.b16 %v282
      %v354 = vunpack.c.h.b16 %v282
      %v355 = vunpack.c.l.b16 %v283
      %v356 = vunpack.c.h.b16 %v283
      %v357 = vunpack.c.l.b16 %v284
      %v358 = vunpack.c.h.b16 %v284
      %v359 = vunpack.c.l.b16 %v285
      %v360 = vunpack.c.h.b16 %v285
      %v361 = vunpack.c.l.b16 %v286
      %v362 = vunpack.c.h.b16 %v286
      %v363 = vunpack.c.l.b16 %v287
      %v364 = vunpack.c.h.b16 %v287
      %v365 = vunpack.c.l.b16 %v288
      %v366 = vunpack.c.h.b16 %v288
      %v367 = vunpack.c.l.b16 %v289
      %v368 = vunpack.c.h.b16 %v289
      %v369 = vunpack.c.l.b16 %v290
      %v370 = vunpack.c.h.b16 %v290
      %v371 = vunpack.c.l.b16 %v291
      %v372 = vunpack.c.h.b16 %v291
      %v373 = vunpack.c.l.b16 %v292
      %v374 = vunpack.c.h.b16 %v292
      %v375 = vunpack.c.l.b16 %v293
      %v376 = vunpack.c.h.b16 %v293
      %v377 = vunpack.c.l.b16 %v294
      %v378 = vunpack.c.h.b16 %v294
      %v379 = vpack.c.b16 %v349, %v347
      %v380 = vpack.c.b16 %v350, %v348
      %v381 = vpack.c.b16 %v353, %v351
      %v382 = vpack.c.b16 %v354, %v352
      %v383 = vpack.c.b16 %v357, %v355
      %v384 = vpack.c.b16 %v358, %v356
      %v385 = vpack.c.b16 %v361, %v359
      %v386 = vpack.c.b16 %v362, %v360
      %v387 = vpack.c.b16 %v365, %v363
      %v388 = vpack.c.b16 %v366, %v364
      %v389 = vpack.c.b16 %v369, %v367
      %v390 = vpack.c.b16 %v370, %v368
      %v391 = vpack.c.b16 %v373, %v371
      %v392 = vpack.c.b16 %v374, %v372
      %v393 = vpack.c.b16 %v377, %v375
      %v394 = vpack.c.b16 %v378, %v376
      %411 = vmatprep.subr.bf16.mxu0 %v394
      %412 = vmatpush1.bf16.msra.mxu0 %v393
      %413 = vmatprep.subr.bf16.mxu0 %v392
      %414 = vmatpush1.bf16.msra.mxu0 %v391
      %415 = vmatprep.subr.bf16.mxu0 %v390
      %416 = vmatpush1.bf16.msra.mxu0 %v389
      %417 = vmatprep.subr.bf16.mxu0 %v388
      %418 = vmatpush1.bf16.msra.mxu0 %v387
      %419 = vmatprep.subr.bf16.mxu0 %v386
      %420 = vmatpush1.bf16.msra.mxu0 %v385
      %421 = vmatprep.subr.bf16.mxu0 %v384
      %422 = vmatpush1.bf16.msra.mxu0 %v383
      %423 = vmatprep.subr.bf16.mxu0 %v382
      %424 = vmatpush1.bf16.msra.mxu0 %v381
      %425 = vmatprep.subr.bf16.mxu0 %v380
      %426 = vmatpush1.bf16.msra.mxu0 %v379
      %427 = vmatprep.subr.bf16.mxu0 0
      %428 = vmatpush2.bf16.msra.mxu0 0
      %429 = vmatprep.subr.bf16.mxu0 0
      %430 = vmatpush2.bf16.msra.mxu0 0
      %431 = vmatprep.subr.bf16.mxu0 0
      %432 = vmatpush2.bf16.msra.mxu0 0
      %433 = vmatprep.subr.bf16.mxu0 0
      %434 = vmatpush2.bf16.msra.mxu0 0
      %435 = vmatprep.subr.bf16.mxu0 0
      %436 = vmatpush2.bf16.msra.mxu0 0
      %437 = vmatprep.subr.bf16.mxu0 0
      %438 = vmatpush2.bf16.msra.mxu0 0
      %439 = vmatprep.subr.bf16.mxu0 0
      %440 = vmatpush2.bf16.msra.mxu0 0
      %441 = vmatprep.subr.bf16.mxu0 0
      %442 = vmatpush2.bf16.msra.mxu0 0
      %443 = vmatprep.mubr.bf16.mxu0 0
      %444 = vmatmul.mubr.bf16.gmra.mxu0 %v327
      %v445 = vpop.f32.mrf.mxu0
      %v446 = vadd.f32 %v302, %v445
      %v447 = vpop.f32.mrf.mxu0
      %v448 = vadd.f32 %v302, %v447
      %v449 = vpop.f32.mrf.mxu0
      %v450 = vadd.f32 %v307, %v449
      %v451 = vpop.f32.mrf.mxu0
      %v452 = vadd.f32 %v307, %v451
      %453 = vmatprep.mubr.bf16.mxu0 0
      %454 = vmatmul.mubr.bf16.gmra.mxu0 %v328
      %v455 = vpop.f32.mrf.mxu0
      %v456 = vadd.f32 %v312, %v455
      %v457 = vpop.f32.mrf.mxu0
      %v458 = vadd.f32 %v312, %v457
      %v459 = vpop.f32.mrf.mxu0
      %v460 = vadd.f32 %v317, %v459
      %v461 = vpop.f32.mrf.mxu0
      %v462 = vadd.f32 %v317, %v461
      %463 = vdwg.mxu0
      %vm464 = vcmp.gt.f32.partialorder %v446, 0.0
      %vm465 = vcmp.gt.f32.partialorder %v448, 0.0
      %vm466 = vcmp.gt.f32.partialorder %v450, 0.0
      %vm467 = vcmp.gt.f32.partialorder %v452, 0.0
      %vm468 = vcmp.gt.f32.partialorder %v456, 0.0
      %vm469 = vcmp.gt.f32.partialorder %v458, 0.0
      %vm470 = vcmp.gt.f32.partialorder %v460, 0.0
      %vm471 = vcmp.gt.f32.partialorder %v462, 0.0
      %v472 = vmul.f32 %v446, 0.01
      %v473 = vmul.f32 %v448, 0.01
      %v474 = vmul.f32 %v450, 0.01
      %v475 = vmul.f32 %v452, 0.01
      %v476 = vmul.f32 %v456, 0.01
      %v477 = vmul.f32 %v458, 0.01
      %v478 = vmul.f32 %v460, 0.01
      %v479 = vmul.f32 %v462, 0.01
      %v480 = vsel %vm464, %v446, %v472
      %v481 = vsel %vm465, %v448, %v473
      %v482 = vsel %vm466, %v450, %v474
      %v483 = vsel %vm467, %v452, %v475
      %v484 = vsel %vm468, %v456, %v476
      %v485 = vsel %vm469, %v458, %v477
      %v486 = vsel %vm470, %v460, %v478
      %v487 = vsel %vm471, %v462, %v479
      %v488 = vpack.c.bf16 %v482, %v480
      %v489 = vpack.c.bf16 %v483, %v481
      %v490 = vpack.c.bf16 %v486, %v484
      %v491 = vpack.c.bf16 %v487, %v485
      %v496 = vunpack.c.l.b16 %v488
      %v497 = vunpack.c.l.b16 %v489
      %v498 = vunpack.c.h.b16 %v488
      %v499 = vunpack.c.h.b16 %v489
      %v500 = vunpack.c.l.b16 %v490
      %v501 = vunpack.c.l.b16 %v491
      %v502 = vunpack.c.h.b16 %v490
      %v503 = vunpack.c.h.b16 %v491
      %v504 = vpack.c.b16 %v497, %v496
      %v505 = vpack.c.b16 %v499, %v498
      %v506 = vpack.c.b16 %v501, %v500
      %v507 = vpack.c.b16 %v503, %v502
      %512 = vst [vmem:[%s257] sm:$0xff] %v504
      %513 = vst [vmem:[%s257 + $0x8] sm:$0xff] %v505
      %514 = vst [vmem:[%s257 + $0x10] sm:$0xff] %v506
      %515 = vst [vmem:[%s257 + $0x18] sm:$0xff] %v507
      %v516 = vld [vmem:[%s4] sm:$0xff]
      %v517 = vld [vmem:[%s4 + $0x8] sm:$0xff]
      %v518 = vld [vmem:[%s4 + $0x10] sm:$0xff]
      %v519 = vld [vmem:[%s4 + $0x18] sm:$0xff]
      %v520 = vadd.f32 %v480, %v481
      %521 = vadd.xlane.f32.xlu0 %v520
      %v522 = vpop.xlane.xlu0 %521
      %v523 = vadd.f32 %v482, %v483
      %524 = vadd.xlane.f32.xlu0 %v523
      %v525 = vpop.xlane.xlu0 %524
      %v526 = vadd.f32 %v484, %v485
      %527 = vadd.xlane.f32.xlu0 %v526
      %v528 = vpop.xlane.xlu0 %527
      %v529 = vadd.f32 %v486, %v487
      %530 = vadd.xlane.f32.xlu0 %v529
      %v531 = vpop.xlane.xlu0 %530
      %v532 = vadd.f32 %v516, %v522
      %v533 = vadd.f32 %v517, %v525
      %v534 = vadd.f32 %v518, %v528
      %v535 = vadd.f32 %v519, %v531
      %vm536 = vcmask 7168
      %537 = vst.msk [vmem:[%s4] sm:$0xff] %vm536, %v532
      %538 = vst.msk [vmem:[%s4 + $0x8] sm:$0xff] %vm536, %v533
      %539 = vst.msk [vmem:[%s4 + $0x10] sm:$0xff] %vm536, %v534
      %540 = vst.msk [vmem:[%s4 + $0x18] sm:$0xff] %vm536, %v535
      %v541 = vld [vmem:[%s5] sm:$0xff]
      %v542 = vld [vmem:[%s5 + $0x8] sm:$0xff]
      %v543 = vld [vmem:[%s5 + $0x10] sm:$0xff]
      %v544 = vld [vmem:[%s5 + $0x18] sm:$0xff]
      %v545 = vmul.f32 %v480, %v480
      %v546 = vmul.f32 %v481, %v481
      %v547 = vmul.f32 %v482, %v482
      %v548 = vmul.f32 %v483, %v483
      %v549 = vmul.f32 %v484, %v484
      %v550 = vmul.f32 %v485, %v485
      %v551 = vmul.f32 %v486, %v486
      %v552 = vmul.f32 %v487, %v487
      %v553 = vadd.f32 %v545, %v546
      %554 = vadd.xlane.f32.xlu0 %v553
      %v555 = vpop.xlane.xlu0 %554
      %v556 = vadd.f32 %v547, %v548
      %557 = vadd.xlane.f32.xlu0 %v556
      %v558 = vpop.xlane.xlu0 %557
      %v559 = vadd.f32 %v549, %v550
      %560 = vadd.xlane.f32.xlu0 %v559
      %v561 = vpop.xlane.xlu0 %560
      %v562 = vadd.f32 %v551, %v552
      %563 = vadd.xlane.f32.xlu0 %v562
      %v564 = vpop.xlane.xlu0 %563
      %v565 = vadd.f32 %v541, %v555
      %v566 = vadd.f32 %v542, %v558
      %v567 = vadd.f32 %v543, %v561
      %v568 = vadd.f32 %v544, %v564
      %569 = vst.msk [vmem:[%s5] sm:$0xff] %vm536, %v565
      %570 = vst.msk [vmem:[%s5 + $0x8] sm:$0xff] %vm536, %v566
      %571 = vst.msk [vmem:[%s5 + $0x10] sm:$0xff] %vm536, %v567
      %572 = vst.msk [vmem:[%s5 + $0x18] sm:$0xff] %vm536, %v568
      %s573 = smul.u32 2, %s22
      %p574 = scmp.lt.s32.totalorder %s21, 1
      %s575 = scalar_select %p574, %s21, 1
      %p576 = scmp.lt.s32.totalorder %s573, 1
      %s577 = scalar_select %p576, %s573, 1
      %s578 = smul.addr %s575, 8
      %s579 = sadd.s32 %s577, %s578
      %s580 = smul.addr %s579, 4
      %s581 = scalar_lea.vmem %s3, %s580
      // Predicated region
      $region37: #{resblock1122_forward.7} parent=31 // pred_check
        %p582 = pneg %p119
      $region38: #{resblock1122_forward.7} parent=31 // pred_check_branch
        %584 = sbr.rel (%p582) target = $region40
      $region39: #{resblock1122_forward.7} parent=31 // pred_region
        %s585 = smul.u32 2, %s22
      $region40: #{resblock1122_forward.7} parent=31 // pred_fallthru
        _
      // Predicated region
      $region41: #{resblock1122_forward.7} parent=31 // pred_check
        %p586 = pneg %p140
      $region42: #{resblock1122_forward.7} parent=31 // pred_check_branch
        %588 = sbr.rel (%p586) target = $region44
      $region43: #{resblock1122_forward.7} parent=31 // pred_region
        _
      $region44: #{resblock1122_forward.7} parent=31 // pred_fallthru
        _
      // Predicated region
      $region45: #{resblock1122_forward.7} parent=31 // pred_check
        %p589 = pneg %p161
      $region46: #{resblock1122_forward.7} parent=31 // pred_check_branch
        %591 = sbr.rel (%p589) target = $region48
      $region47: #{resblock1122_forward.7} parent=31 // pred_region
        _
      $region48: #{resblock1122_forward.7} parent=31 // pred_fallthru
        _
      // Predicated region
      $region49: #{resblock1122_forward.7} parent=31 // pred_check
        %p592 = pneg %p140
      $region50: #{resblock1122_forward.7} parent=31 // pred_check_branch
        %594 = sbr.rel (%p592) target = $region52
      $region51: #{resblock1122_forward.7} parent=31 // pred_region
        _
      $region52: #{resblock1122_forward.7} parent=31 // pred_fallthru
        _
      // Predicated region
      $region53: #{resblock1122_forward.7} parent=31 // pred_check
        %p595 = pneg %p161
      $region54: #{resblock1122_forward.7} parent=31 // pred_check_branch
        %597 = sbr.rel (%p595) target = $region56
      $region55: #{resblock1122_forward.7} parent=31 // pred_region
        _
      $region56: #{resblock1122_forward.7} parent=31 // pred_fallthru
        _
    $region32: #{resblock1122_forward.7} parent=5 // pred_fallthru
      _
    %p598 = scmp.le.s32.totalorder 2, %s12
    // Predicated region
    $region57: #{resblock1122_forward.7} parent=5 // pred_check
      %p599 = pneg %p598
    $region58: #{resblock1122_forward.7} parent=5 // pred_check_branch
      %601 = sbr.rel (%p599) target = $region60
    $region59: #{resblock1122_forward.7} parent=5 // pred_region
      %s602 = ssub.s32 %s12, 2
      // Predicated region
      $region61: #{resblock1122_forward.7} parent=59 // pred_check
        %p603 = pneg %p125
      $region62: #{resblock1122_forward.7} parent=59 // pred_check_branch
        %605 = sbr.rel (%p603) target = $region64
      $region63: #{resblock1122_forward.7} parent=59 // pred_region
        %s606 = smul.u32 2, %s24
        %p607 = scmp.lt.s32.totalorder %s23, 1
        %s608 = scalar_select %p607, %s23, 1
        %p609 = scmp.lt.s32.totalorder %s606, 1
        %s610 = scalar_select %p609, %s606, 1
        %s611 = smul.addr %s608, 8
        %s612 = sadd.s32 %s610, %s611
        %s613 = smul.addr %s612, 4
        %s614 = scalar_lea.vmem %s3, %s613
      $region64: #{resblock1122_forward.7} parent=59 // pred_fallthru
        _
    $region60: #{resblock1122_forward.7} parent=5 // pred_fallthru
      _
  $region6: #{resblock1122_forward.7} parent=0 // loop_footer
    %s16 = sadd.s32 1, %s12
  $region7: #{resblock1122_forward.7} parent=0 // loop_footer_branch
    %11 = sbr.rel target = $region3
  $region8: #{resblock1122_forward.7} parent=0 // loop_exit
    _

// kernel: resblock1122_forward.9
$region0: #{resblock1122_forward.9}
  #allocation0 [shape = 'u32[]', space=smem, size = 0x4, offset = 0x4, fixed_abs, tag = 'smem constant byte address 0x4 - core index']
  #allocation1 [shape = 'u32[144,128]{1,0:T(1,128)}', space=vmem, size = 0x12000, scoped, tag = 'internal scratch']
  %s0 = inlined_call_operand.vmem [shape: bf16[2,32,256], index: 0, kind: input, shape index: {}]
  %s1 = inlined_call_operand.vmem [shape: f32[2,32,256], index: 1, kind: input, shape index: {}]
  %s2 = inlined_call_operand.vmem [shape: f32[32,1], index: 2, kind: input, shape index: {}]
  %s3 = inlined_call_operand.vmem [shape: f32[32,1], index: 3, kind: input, shape index: {}]
  %s4 = inlined_call_operand.vmem [shape: f32[2,32,256], index: 4, kind: output, shape index: {}]
  %s5 = sld [smem:[#allocation0]]
  $region49: #{resblock1122_forward.9} parent=0
    _
  %s7 = ssub.s32 1, %s5
  %s8 = scalar_select 0, %s7, %s5
  loop: start=0, step=1, limit=4
  $region2: #{resblock1122_forward.9} parent=0 // loop_pre_header
    _
  $region3: #{resblock1122_forward.9} parent=0 // loop_header
    %s10 = sphi 0, %s14
    %p11 = scmp.ge.s32.totalorder %s10, 4
    %s17 = sphi 0, %s29
    %s18 = sphi 0, %s25
    %s19 = sphi 0, %s17
    %s20 = sphi 0, %s18
    %s21 = sphi 0, %s19
    %s22 = sphi 0, %s20
    %s34 = sphi 0, %s36
    %s37 = sphi 0, %s34
    %s38 = sphi 0, %s37
    %s54 = sphi 0, %s38
    %s62 = sphi 0, %s64
    %s65 = sphi 0, %s62
    %s66 = sphi 0, %s65
    %s82 = sphi 0, %s66
    %s86 = sphi 0, %s86
    %s88 = sphi 0, %s86
    %s89 = sphi 0, %s88
    %s103 = sphi 0, %s89
    %s107 = sphi 0, %s107
    %s109 = sphi 0, %s107
    %s110 = sphi 0, %s109
    %s124 = sphi 0, %s110
    %s132 = sphi 0, %s134
    %s135 = sphi 0, %s132
    %s136 = sphi 0, %s135
    %s152 = sphi 0, %s136
  $region4: #{resblock1122_forward.9} parent=0 // loop_header_branch
    %13 = sbr.rel (%p11) target = $region8
  $region5: #{resblock1122_forward.9} parent=0 // loop_body
    %s15 = ssub.s32 %s10, 1
    %s16 = ssub.s32 %s10, 2
    %s23 = sadd.s32 1, %s18
    %p24 = scmp.ge.s32.totalorder %s23, 1
    %s25 = scalar_select %p24, 0, %s23
    %s26 = sadd.s32 1, %s17
    %s27 = scalar_select %p24, %s26, %s17
    %p28 = scmp.ge.s32.totalorder %s27, 2
    %s29 = scalar_select %p28, 0, %s27
    %s30 = ssub.s32 %s17, %s29
    %s31 = ssub.s32 %s18, %s25
    %s32 = sor.u32 %s30, %s31
    %p33 = scmp.eq.s32.totalorder %s32, 0
    %s35 = sadd.s32 %s34, 1
    %s36 = scalar_select %p33, %s34, %s35
    %p39 = pneg %p33
    %p40 = scmp.eq.s32.totalorder %s10, 1
    %p41 = por %p39, %p40
    %p42 = scmp.ne.s32.totalorder %s34, %s37
    %p43 = scmp.eq.s32.totalorder %s10, 0
    %p44 = por %p42, %p43
    %p45 = scmp.ne.s32.totalorder %s34, %s37
    %p46 = scmp.eq.s32.totalorder %s15, 1
    %p47 = por %p45, %p46
    %p48 = scmp.ne.s32.totalorder %s37, %s38
    %p49 = scmp.eq.s32.totalorder %s15, 0
    %p50 = por %p48, %p49
    %p51 = scmp.ne.s32.totalorder %s37, %s38
    %p52 = scmp.eq.s32.totalorder %s16, 1
    %p53 = por %p51, %p52
    %p55 = scmp.ne.s32.totalorder %s38, %s54
    %p56 = scmp.eq.s32.totalorder %s16, 0
    %p57 = por %p55, %p56
    %s58 = ssub.s32 %s17, %s29
    %s59 = ssub.s32 %s18, %s25
    %s60 = sor.u32 %s58, %s59
    %p61 = scmp.eq.s32.totalorder %s60, 0
    %s63 = sadd.s32 %s62, 1
    %s64 = scalar_select %p61, %s62, %s63
    %p67 = pneg %p61
    %p68 = scmp.eq.s32.totalorder %s10, 1
    %p69 = por %p67, %p68
    %p70 = scmp.ne.s32.totalorder %s62, %s65
    %p71 = scmp.eq.s32.totalorder %s10, 0
    %p72 = por %p70, %p71
    %p73 = scmp.ne.s32.totalorder %s62, %s65
    %p74 = scmp.eq.s32.totalorder %s15, 1
    %p75 = por %p73, %p74
    %p76 = scmp.ne.s32.totalorder %s65, %s66
    %p77 = scmp.eq.s32.totalorder %s15, 0
    %p78 = por %p76, %p77
    %p79 = scmp.ne.s32.totalorder %s65, %s66
    %p80 = scmp.eq.s32.totalorder %s16, 1
    %p81 = por %p79, %p80
    %p83 = scmp.ne.s32.totalorder %s66, %s82
    %p84 = scmp.eq.s32.totalorder %s16, 0
    %p85 = por %p83, %p84
    %s87 = sadd.s32 %s86, 1
    %p90 = scmp.eq.s32.totalorder %s10, 1
    %p91 = scmp.ne.s32.totalorder %s86, %s88
    %p92 = scmp.eq.s32.totalorder %s10, 0
    %p93 = por %p91, %p92
    %p94 = scmp.ne.s32.totalorder %s86, %s88
    %p95 = scmp.eq.s32.totalorder %s15, 1
    %p96 = por %p94, %p95
    %p97 = scmp.ne.s32.totalorder %s88, %s89
    %p98 = scmp.eq.s32.totalorder %s15, 0
    %p99 = por %p97, %p98
    %p100 = scmp.ne.s32.totalorder %s88, %s89
    %p101 = scmp.eq.s32.totalorder %s16, 1
    %p102 = por %p100, %p101
    %p104 = scmp.ne.s32.totalorder %s89, %s103
    %p105 = scmp.eq.s32.totalorder %s16, 0
    %p106 = por %p104, %p105
    %s108 = sadd.s32 %s107, 1
    %p111 = scmp.eq.s32.totalorder %s10, 1
    %p112 = scmp.ne.s32.totalorder %s107, %s109
    %p113 = scmp.eq.s32.totalorder %s10, 0
    %p114 = por %p112, %p113
    %p115 = scmp.ne.s32.totalorder %s107, %s109
    %p116 = scmp.eq.s32.totalorder %s15, 1
    %p117 = por %p115, %p116
    %p118 = scmp.ne.s32.totalorder %s109, %s110
    %p119 = scmp.eq.s32.totalorder %s15, 0
    %p120 = por %p118, %p119
    %p121 = scmp.ne.s32.totalorder %s109, %s110
    %p122 = scmp.eq.s32.totalorder %s16, 1
    %p123 = por %p121, %p122
    %p125 = scmp.ne.s32.totalorder %s110, %s124
    %p126 = scmp.eq.s32.totalorder %s16, 0
    %p127 = por %p125, %p126
    %s128 = ssub.s32 %s17, %s29
    %s129 = ssub.s32 %s18, %s25
    %s130 = sor.u32 %s128, %s129
    %p131 = scmp.eq.s32.totalorder %s130, 0
    %s133 = sadd.s32 %s132, 1
    %s134 = scalar_select %p131, %s132, %s133
    %p137 = pneg %p131
    %p138 = scmp.eq.s32.totalorder %s10, 1
    %p139 = por %p137, %p138
    %p140 = scmp.ne.s32.totalorder %s132, %s135
    %p141 = scmp.eq.s32.totalorder %s10, 0
    %p142 = por %p140, %p141
    %p143 = scmp.ne.s32.totalorder %s132, %s135
    %p144 = scmp.eq.s32.totalorder %s15, 1
    %p145 = por %p143, %p144
    %p146 = scmp.ne.s32.totalorder %s135, %s136
    %p147 = scmp.eq.s32.totalorder %s15, 0
    %p148 = por %p146, %p147
    %p149 = scmp.ne.s32.totalorder %s135, %s136
    %p150 = scmp.eq.s32.totalorder %s16, 1
    %p151 = por %p149, %p150
    %p153 = scmp.ne.s32.totalorder %s136, %s152
    %p154 = scmp.eq.s32.totalorder %s16, 0
    %p155 = por %p153, %p154
    %p156 = scmp.le.s32.totalorder 1, %s10
    %p157 = scmp.lt.s32.totalorder %s10, 3
    %p158 = pnand %p156, %p157
    %p159 = pneg %p158
    // Predicated region
    $region9: #{resblock1122_forward.9} parent=5 // pred_check
      _
    $region10: #{resblock1122_forward.9} parent=5 // pred_check_branch
      %161 = sbr.rel (%p158) target = $region12
    $region11: #{resblock1122_forward.9} parent=5 // pred_region
      %s162 = ssub.s32 %s10, 1
      // Predicated region
      $region13: #{resblock1122_forward.9} parent=11 // pred_check
        %p163 = pneg %p99
      $region14: #{resblock1122_forward.9} parent=11 // pred_check_branch
        %165 = sbr.rel (%p163) target = $region16
      $region15: #{resblock1122_forward.9} parent=11 // pred_region
        _
      $region16: #{resblock1122_forward.9} parent=11 // pred_fallthru
        _
      // Predicated region
      $region17: #{resblock1122_forward.9} parent=11 // pred_check
        %p166 = pneg %p120
      $region18: #{resblock1122_forward.9} parent=11 // pred_check_branch
        %168 = sbr.rel (%p166) target = $region20
      $region19: #{resblock1122_forward.9} parent=11 // pred_region
        _
      $region20: #{resblock1122_forward.9} parent=11 // pred_fallthru
        _
    $region12: #{resblock1122_forward.9} parent=5 // pred_fallthru
      _
    %p169 = scmp.lt.s32.totalorder %s10, 2
    // Predicated region
    $region21: #{resblock1122_forward.9} parent=5 // pred_check
      %p170 = pneg %p169
    $region22: #{resblock1122_forward.9} parent=5 // pred_check_branch
      %172 = sbr.rel (%p170) target = $region24
    $region23: #{resblock1122_forward.9} parent=5 // pred_region
      // Predicated region
      $region25: #{resblock1122_forward.9} parent=23 // pred_check
        %p173 = pneg %p44
      $region26: #{resblock1122_forward.9} parent=23 // pred_check_branch
        %175 = sbr.rel (%p173) target = $region28
      $region27: #{resblock1122_forward.9} parent=23 // pred_region
        %s176 = smul.u32 2, %s18
        %p177 = scmp.lt.s32.totalorder %s17, 1
        %s178 = scalar_select %p177, %s17, 1
        %p179 = scmp.lt.s32.totalorder %s176, 1
        %s180 = scalar_select %p179, %s176, 1
        %s181 = smul.addr %s178, 8
        %s182 = sadd.s32 %s180, %s181
        %s183 = smul.addr %s182, 4
        %s184 = scalar_lea.vmem %s0, %s183
        %s185 = smul.u32 2, %s18
      $region28: #{resblock1122_forward.9} parent=23 // pred_fallthru
        _
      // Predicated region
      $region29: #{resblock1122_forward.9} parent=23 // pred_check
        %p186 = pneg %p72
      $region30: #{resblock1122_forward.9} parent=23 // pred_check_branch
        %188 = sbr.rel (%p186) target = $region32
      $region31: #{resblock1122_forward.9} parent=23 // pred_region
        %s189 = smul.u32 2, %s18
        %p190 = scmp.lt.s32.totalorder %s17, 1
        %s191 = scalar_select %p190, %s17, 1
        %p192 = scmp.lt.s32.totalorder %s189, 1
        %s193 = scalar_select %p192, %s189, 1
        %s194 = smul.addr %s191, 8
        %s195 = sadd.s32 %s193, %s194
        %s196 = smul.addr %s195, 8
        %s197 = scalar_lea.vmem %s1, %s196
        %s198 = smul.u32 2, %s18
      $region32: #{resblock1122_forward.9} parent=23 // pred_fallthru
        _
    $region24: #{resblock1122_forward.9} parent=5 // pred_fallthru
      _
    %p199 = scmp.le.s32.totalorder 1, %s10
    %p200 = scmp.lt.s32.totalorder %s10, 3
    %p201 = pnand %p199, %p200
    %p202 = pneg %p201
    // Predicated region
    $region33: #{resblock1122_forward.9} parent=5 // pred_check
      _
    $region34: #{resblock1122_forward.9} parent=5 // pred_check_branch
      %204 = sbr.rel (%p201) target = $region36
    $region35: #{resblock1122_forward.9} parent=5 // pred_region
      %s205 = ssub.s32 %s10, 1
      %s206 = smul.u32 2, %s20
      %p207 = scmp.lt.s32.totalorder %s19, 1
      %s208 = scalar_select %p207, %s19, 1
      %p209 = scmp.lt.s32.totalorder %s206, 1
      %s210 = scalar_select %p209, %s206, 1
      %s211 = smul.addr %s208, 8
      %s212 = sadd.s32 %s210, %s211
      %s213 = smul.addr %s212, 4
      %s214 = scalar_lea.vmem %s0, %s213
      %p215 = pneg %p50
      %p216 = pneg %p47
      %s217 = smul.u32 2, %s20
      %p218 = scmp.lt.s32.totalorder %s19, 1
      %s219 = scalar_select %p218, %s19, 1
      %p220 = scmp.lt.s32.totalorder %s217, 1
      %s221 = scalar_select %p220, %s217, 1
      %s222 = smul.addr %s219, 8
      %s223 = sadd.s32 %s221, %s222
      %s224 = smul.addr %s223, 8
      %s225 = scalar_lea.vmem %s1, %s224
      %p226 = pneg %p78
      %p227 = pneg %p75
      %p228 = pneg %p99
      %p229 = pneg %p96
      %p230 = pneg %p120
      %p231 = pneg %p117
      %p232 = pneg %p148
      %p233 = pneg %p145
      %s234 = smul.u32 2, %s20
      %p235 = scmp.lt.s32.totalorder %s19, 1
      %s236 = scalar_select %p235, %s19, 1
      %p237 = scmp.lt.s32.totalorder %s234, 1
      %s238 = scalar_select %p237, %s234, 1
      %s239 = smul.addr %s236, 8
      %s240 = sadd.s32 %s238, %s239
      %s241 = smul.addr %s240, 8
      %s242 = scalar_lea.vmem %s4, %s241
      %s243 = smul.u32 2, %s20
      %p244 = scmp.lt.s32.totalorder %s19, 1
      %s245 = scalar_select %p244, %s19, 1
      %p246 = scmp.lt.s32.totalorder %s243, 1
      %s247 = scalar_select %p246, %s243, 1
      %s248 = smul.addr %s245, 8
      %s249 = sadd.s32 %s247, %s248
      %s250 = smul.addr %s249, 4
      %s251 = scalar_lea.vmem %s0, %s250
      %s252 = smul.u32 2, %s20
      %s253 = smul.u32 2, %s20
      %p254 = scmp.lt.s32.totalorder %s19, 1
      %s255 = scalar_select %p254, %s19, 1
      %p256 = scmp.lt.s32.totalorder %s253, 1
      %s257 = scalar_select %p256, %s253, 1
      %s258 = smul.addr %s255, 8
      %s259 = sadd.s32 %s257, %s258
      %s260 = smul.addr %s259, 8
      %s261 = scalar_lea.vmem %s1, %s260
      %s262 = smul.u32 2, %s20
      %s263 = smul.u32 2, %s20
      %p264 = scmp.lt.s32.totalorder %s19, 1
      %s265 = scalar_select %p264, %s19, 1
      %p266 = scmp.lt.s32.totalorder %s263, 1
      %s267 = scalar_select %p266, %s263, 1
      %s268 = smul.addr %s265, 8
      %s269 = sadd.s32 %s267, %s268
      %s270 = smul.addr %s269, 8
      %s271 = scalar_lea.vmem %s4, %s270
      %s272 = smul.u32 2, %s20
      %v273 = vld [vmem:[%s251] sm:$0xff]
      %v274 = vld [vmem:[%s251 + $0x8] sm:$0xff]
      %v275 = vld [vmem:[%s251 + $0x10] sm:$0xff]
      %v276 = vld [vmem:[%s251 + $0x18] sm:$0xff]
      %v277 = vunpack.c.l.bf16 %v273
      %v278 = vunpack.c.h.bf16 %v273
      %v279 = vunpack.c.l.bf16 %v274
      %v280 = vunpack.c.h.bf16 %v274
      %v281 = vunpack.c.l.bf16 %v275
      %v282 = vunpack.c.h.bf16 %v275
      %v283 = vunpack.c.l.bf16 %v276
      %v284 = vunpack.c.h.bf16 %v276
      %v285 = vld [vmem:[%s2] sm:$0xff]
      %v286 = vld [vmem:[%s2 + $0x8] sm:$0xff]
      %v287 = vld [vmem:[%s2 + $0x10] sm:$0xff]
      %v288 = vld [vmem:[%s2 + $0x18] sm:$0xff]
      %290 = vset.pattern.permute.xlu0 0
      %291 = vperm.xlu0 %290, %v285
      %v292 = vpop.permute.xlu0 %291
      %295 = vset.pattern.permute.xlu0 0
      %296 = vperm.xlu0 %295, %v286
      %v297 = vpop.permute.xlu0 %296
      %300 = vset.pattern.permute.xlu0 0
      %301 = vperm.xlu0 %300, %v287
      %v302 = vpop.permute.xlu0 %301
      %305 = vset.pattern.permute.xlu0 0
      %306 = vperm.xlu0 %305, %v288
      %v307 = vpop.permute.xlu0 %306
      %v309 = vmul.f32 %v277, %v292
      %v310 = vmul.f32 %v278, %v292
      %v311 = vmul.f32 %v279, %v297
      %v312 = vmul.f32 %v280, %v297
      %v313 = vmul.f32 %v281, %v302
      %v314 = vmul.f32 %v282, %v302
      %v315 = vmul.f32 %v283, %v307
      %v316 = vmul.f32 %v284, %v307
      %v317 = vld [vmem:[%s3] sm:$0xff]
      %v318 = vld [vmem:[%s3 + $0x8] sm:$0xff]
      %v319 = vld [vmem:[%s3 + $0x10] sm:$0xff]
      %v320 = vld [vmem:[%s3 + $0x18] sm:$0xff]
      %322 = vset.pattern.permute.xlu0 0
      %323 = vperm.xlu0 %322, %v317
      %v324 = vpop.permute.xlu0 %323
      %327 = vset.pattern.permute.xlu0 0
      %328 = vperm.xlu0 %327, %v318
      %v329 = vpop.permute.xlu0 %328
      %332 = vset.pattern.permute.xlu0 0
      %333 = vperm.xlu0 %332, %v319
      %v334 = vpop.permute.xlu0 %333
      %337 = vset.pattern.permute.xlu0 0
      %338 = vperm.xlu0 %337, %v320
      %v339 = vpop.permute.xlu0 %338
      %v341 = vadd.f32 %v309, %v324
      %v342 = vadd.f32 %v310, %v324
      %v343 = vadd.f32 %v311, %v329
      %v344 = vadd.f32 %v312, %v329
      %v345 = vadd.f32 %v313, %v334
      %v346 = vadd.f32 %v314, %v334
      %v347 = vadd.f32 %v315, %v339
      %v348 = vadd.f32 %v316, %v339
      %v349 = vld [vmem:[%s261] sm:$0xff]
      %v350 = vld [vmem:[%s261 + $0x8] sm:$0xff]
      %v351 = vld [vmem:[%s261 + $0x10] sm:$0xff]
      %v352 = vld [vmem:[%s261 + $0x18] sm:$0xff]
      %v353 = vld [vmem:[%s261 + $0x20] sm:$0xff]
      %v354 = vld [vmem:[%s261 + $0x28] sm:$0xff]
      %v355 = vld [vmem:[%s261 + $0x30] sm:$0xff]
      %v356 = vld [vmem:[%s261 + $0x38] sm:$0xff]
      %v357 = vadd.f32 %v341, %v349
      %v358 = vadd.f32 %v342, %v350
      %v359 = vadd.f32 %v343, %v351
      %v360 = vadd.f32 %v344, %v352
      %v361 = vadd.f32 %v345, %v353
      %v362 = vadd.f32 %v346, %v354
      %v363 = vadd.f32 %v347, %v355
      %v364 = vadd.f32 %v348, %v356
      %365 = vst [vmem:[%s271] sm:$0xff] %v357
      %366 = vst [vmem:[%s271 + $0x8] sm:$0xff] %v358
      %367 = vst [vmem:[%s271 + $0x10] sm:$0xff] %v359
      %368 = vst [vmem:[%s271 + $0x18] sm:$0xff] %v360
      %369 = vst [vmem:[%s271 + $0x20] sm:$0xff] %v361
      %370 = vst [vmem:[%s271 + $0x28] sm:$0xff] %v362
      %371 = vst [vmem:[%s271 + $0x30] sm:$0xff] %v363
      %372 = vst [vmem:[%s271 + $0x38] sm:$0xff] %v364
      %s373 = smul.u32 2, %s20
      %p374 = scmp.lt.s32.totalorder %s19, 1
      %s375 = scalar_select %p374, %s19, 1
      %p376 = scmp.lt.s32.totalorder %s373, 1
      %s377 = scalar_select %p376, %s373, 1
      %s378 = smul.addr %s375, 8
      %s379 = sadd.s32 %s377, %s378
      %s380 = smul.addr %s379, 8
      %s381 = scalar_lea.vmem %s4, %s380
      // Predicated region
      $region37: #{resblock1122_forward.9} parent=35 // pred_check
        %p382 = pneg %p145
      $region38: #{resblock1122_forward.9} parent=35 // pred_check_branch
        %384 = sbr.rel (%p382) target = $region40
      $region39: #{resblock1122_forward.9} parent=35 // pred_region
        %s385 = smul.u32 2, %s20
      $region40: #{resblock1122_forward.9} parent=35 // pred_fallthru
        _
    $region36: #{resblock1122_forward.9} parent=5 // pred_fallthru
      _
    %p386 = scmp.le.s32.totalorder 2, %s10
    // Predicated region
    $region41: #{resblock1122_forward.9} parent=5 // pred_check
      %p387 = pneg %p386
    $region42: #{resblock1122_forward.9} parent=5 // pred_check_branch
      %389 = sbr.rel (%p387) target = $region44
    $region43: #{resblock1122_forward.9} parent=5 // pred_region
      %s390 = ssub.s32 %s10, 2
      // Predicated region
      $region45: #{resblock1122_forward.9} parent=43 // pred_check
        %p391 = pneg %p151
      $region46: #{resblock1122_forward.9} parent=43 // pred_check_branch
        %393 = sbr.rel (%p391) target = $region48
      $region47: #{resblock1122_forward.9} parent=43 // pred_region
        %s394 = smul.u32 2, %s22
        %p395 = scmp.lt.s32.totalorder %s21, 1
        %s396 = scalar_select %p395, %s21, 1
        %p397 = scmp.lt.s32.totalorder %s394, 1
        %s398 = scalar_select %p397, %s394, 1
        %s399 = smul.addr %s396, 8
        %s400 = sadd.s32 %s398, %s399
        %s401 = smul.addr %s400, 8
        %s402 = scalar_lea.vmem %s4, %s401
      $region48: #{resblock1122_forward.9} parent=43 // pred_fallthru
        _
    $region44: #{resblock1122_forward.9} parent=5 // pred_fallthru
      _
  $region6: #{resblock1122_forward.9} parent=0 // loop_footer
    %s14 = sadd.s32 1, %s10
  $region7: #{resblock1122_forward.9} parent=0 // loop_footer_branch
    %9 = sbr.rel target = $region3
  $region8: #{resblock1122_forward.9} parent=0 // loop_exit
    _

// kernel: resblock1122_forward.8
$region0: #{resblock1122_forward.8}
  #allocation0 [shape = 'u32[]', space=smem, size = 0x4, offset = 0x4, fixed_abs, tag = 'smem constant byte address 0x4 - core index']
  #allocation1 [shape = 'u32[144,128]{1,0:T(1,128)}', space=vmem, size = 0x12000, scoped, tag = 'internal scratch']
  %s0 = inlined_call_operand.vmem [shape: bf16[2,32,256], index: 0, kind: input, shape index: {}]
  %s1 = inlined_call_operand.vmem [shape: bf16[2,32,256], index: 1, kind: input, shape index: {}]
  %s2 = inlined_call_operand.vmem [shape: bf16[2,32,256], index: 2, kind: input, shape index: {}]
  %s3 = inlined_call_operand.vmem [shape: bf16[32,96], index: 3, kind: input, shape index: {}]
  %s4 = inlined_call_operand.vmem [shape: f32[32,1], index: 4, kind: input, shape index: {}]
  %s5 = inlined_call_operand.vmem [shape: bf16[2,32,256], index: 5, kind: output, shape index: {0}]
  %s6 = inlined_call_operand.vmem [shape: f32[32,1], index: 6, kind: output, shape index: {1}]
  %s7 = inlined_call_operand.vmem [shape: f32[32,1], index: 7, kind: output, shape index: {2}]
  %8 = xla_tuple %s5, %s6, %s7
  %s9 = sld [smem:[#allocation0]]
  $region73: #{resblock1122_forward.8} parent=0
    _
  %s11 = ssub.s32 1, %s9
  %s12 = scalar_select 0, %s11, %s9
  loop: start=0, step=1, limit=4
  $region2: #{resblock1122_forward.8} parent=0 // loop_pre_header
    _
  $region3: #{resblock1122_forward.8} parent=0 // loop_header
    %s14 = sphi 0, %s18
    %p15 = scmp.ge.s32.totalorder %s14, 4
    %s21 = sphi 0, %s33
    %s22 = sphi 0, %s29
    %s23 = sphi 0, %s21
    %s24 = sphi 0, %s22
    %s25 = sphi 0, %s23
    %s26 = sphi 0, %s24
    %s38 = sphi 0, %s40
    %s41 = sphi 0, %s38
    %s42 = sphi 0, %s41
    %s58 = sphi 0, %s42
    %s66 = sphi 0, %s68
    %s69 = sphi 0, %s66
    %s70 = sphi 0, %s69
    %s86 = sphi 0, %s70
    %s94 = sphi 0, %s96
    %s97 = sphi 0, %s94
    %s98 = sphi 0, %s97
    %s114 = sphi 0, %s98
    %s118 = sphi 0, %s118
    %s120 = sphi 0, %s118
    %s121 = sphi 0, %s120
    %s135 = sphi 0, %s121
    %s139 = sphi 0, %s139
    %s141 = sphi 0, %s139
    %s142 = sphi 0, %s141
    %s156 = sphi 0, %s142
    %s164 = sphi 0, %s166
    %s167 = sphi 0, %s164
    %s168 = sphi 0, %s167
    %s184 = sphi 0, %s168
    %s188 = sphi 0, %s188
    %s190 = sphi 0, %s188
    %s191 = sphi 0, %s190
    %s205 = sphi 0, %s191
    %s209 = sphi 0, %s209
    %s211 = sphi 0, %s209
    %s212 = sphi 0, %s211
    %s226 = sphi 0, %s212
  $region4: #{resblock1122_forward.8} parent=0 // loop_header_branch
    %17 = sbr.rel (%p15) target = $region8
  $region5: #{resblock1122_forward.8} parent=0 // loop_body
    %s19 = ssub.s32 %s14, 1
    %s20 = ssub.s32 %s14, 2
    %s27 = sadd.s32 1, %s22
    %p28 = scmp.ge.s32.totalorder %s27, 1
    %s29 = scalar_select %p28, 0, %s27
    %s30 = sadd.s32 1, %s21
    %s31 = scalar_select %p28, %s30, %s21
    %p32 = scmp.ge.s32.totalorder %s31, 2
    %s33 = scalar_select %p32, 0, %s31
    %s34 = ssub.s32 %s21, %s33
    %s35 = ssub.s32 %s22, %s29
    %s36 = sor.u32 %s34, %s35
    %p37 = scmp.eq.s32.totalorder %s36, 0
    %s39 = sadd.s32 %s38, 1
    %s40 = scalar_select %p37, %s38, %s39
    %p43 = pneg %p37
    %p44 = scmp.eq.s32.totalorder %s14, 1
    %p45 = por %p43, %p44
    %p46 = scmp.ne.s32.totalorder %s38, %s41
    %p47 = scmp.eq.s32.totalorder %s14, 0
    %p48 = por %p46, %p47
    %p49 = scmp.ne.s32.totalorder %s38, %s41
    %p50 = scmp.eq.s32.totalorder %s19, 1
    %p51 = por %p49, %p50
    %p52 = scmp.ne.s32.totalorder %s41, %s42
    %p53 = scmp.eq.s32.totalorder %s19, 0
    %p54 = por %p52, %p53
    %p55 = scmp.ne.s32.totalorder %s41, %s42
    %p56 = scmp.eq.s32.totalorder %s20, 1
    %p57 = por %p55, %p56
    %p59 = scmp.ne.s32.totalorder %s42, %s58
    %p60 = scmp.eq.s32.totalorder %s20, 0
    %p61 = por %p59, %p60
    %s62 = ssub.s32 %s21, %s33
    %s63 = ssub.s32 %s22, %s29
    %s64 = sor.u32 %s62, %s63
    %p65 = scmp.eq.s32.totalorder %s64, 0
    %s67 = sadd.s32 %s66, 1
    %s68 = scalar_select %p65, %s66, %s67
    %p71 = pneg %p65
    %p72 = scmp.eq.s32.totalorder %s14, 1
    %p73 = por %p71, %p72
    %p74 = scmp.ne.s32.totalorder %s66, %s69
    %p75 = scmp.eq.s32.totalorder %s14, 0
    %p76 = por %p74, %p75
    %p77 = scmp.ne.s32.totalorder %s66, %s69
    %p78 = scmp.eq.s32.totalorder %s19, 1
    %p79 = por %p77, %p78
    %p80 = scmp.ne.s32.totalorder %s69, %s70
    %p81 = scmp.eq.s32.totalorder %s19, 0
    %p82 = por %p80, %p81
    %p83 = scmp.ne.s32.totalorder %s69, %s70
    %p84 = scmp.eq.s32.totalorder %s20, 1
    %p85 = por %p83, %p84
    %p87 = scmp.ne.s32.totalorder %s70, %s86
    %p88 = scmp.eq.s32.totalorder %s20, 0
    %p89 = por %p87, %p88
    %s90 = ssub.s32 %s21, %s33
    %s91 = ssub.s32 %s22, %s29
    %s92 = sor.u32 %s90, %s91
    %p93 = scmp.eq.s32.totalorder %s92, 0
    %s95 = sadd.s32 %s94, 1
    %s96 = scalar_select %p93, %s94, %s95
    %p99 = pneg %p93
    %p100 = scmp.eq.s32.totalorder %s14, 1
    %p101 = por %p99, %p100
    %p102 = scmp.ne.s32.totalorder %s94, %s97
    %p103 = scmp.eq.s32.totalorder %s14, 0
    %p104 = por %p102, %p103
    %p105 = scmp.ne.s32.totalorder %s94, %s97
    %p106 = scmp.eq.s32.totalorder %s19, 1
    %p107 = por %p105, %p106
    %p108 = scmp.ne.s32.totalorder %s97, %s98
    %p109 = scmp.eq.s32.totalorder %s19, 0
    %p110 = por %p108, %p109
    %p111 = scmp.ne.s32.totalorder %s97, %s98
    %p112 = scmp.eq.s32.totalorder %s20, 1
    %p113 = por %p111, %p112
    %p115 = scmp.ne.s32.totalorder %s98, %s114
    %p116 = scmp.eq.s32.totalorder %s20, 0
    %p117 = por %p115, %p116
    %s119 = sadd.s32 %s118, 1
    %p122 = scmp.eq.s32.totalorder %s14, 1
    %p123 = scmp.ne.s32.totalorder %s118, %s120
    %p124 = scmp.eq.s32.totalorder %s14, 0
    %p125 = por %p123, %p124
    %p126 = scmp.ne.s32.totalorder %s118, %s120
    %p127 = scmp.eq.s32.totalorder %s19, 1
    %p128 = por %p126, %p127
    %p129 = scmp.ne.s32.totalorder %s120, %s121
    %p130 = scmp.eq.s32.totalorder %s19, 0
    %p131 = por %p129, %p130
    %p132 = scmp.ne.s32.totalorder %s120, %s121
    %p133 = scmp.eq.s32.totalorder %s20, 1
    %p134 = por %p132, %p133
    %p136 = scmp.ne.s32.totalorder %s121, %s135
    %p137 = scmp.eq.s32.totalorder %s20, 0
    %p138 = por %p136, %p137
    %s140 = sadd.s32 %s139, 1
    %p143 = scmp.eq.s32.totalorder %s14, 1
    %p144 = scmp.ne.s32.totalorder %s139, %s141
    %p145 = scmp.eq.s32.totalorder %s14, 0
    %p146 = por %p144, %p145
    %p147 = scmp.ne.s32.totalorder %s139, %s141
    %p148 = scmp.eq.s32.totalorder %s19, 1
    %p149 = por %p147, %p148
    %p150 = scmp.ne.s32.totalorder %s141, %s142
    %p151 = scmp.eq.s32.totalorder %s19, 0
    %p152 = por %p150, %p151
    %p153 = scmp.ne.s32.totalorder %s141, %s142
    %p154 = scmp.eq.s32.totalorder %s20, 1
    %p155 = por %p153, %p154
    %p157 = scmp.ne.s32.totalorder %s142, %s156
    %p158 = scmp.eq.s32.totalorder %s20, 0
    %p159 = por %p157, %p158
    %s160 = ssub.s32 %s21, %s33
    %s161 = ssub.s32 %s22, %s29
    %s162 = sor.u32 %s160, %s161
    %p163 = scmp.eq.s32.totalorder %s162, 0
    %s165 = sadd.s32 %s164, 1
    %s166 = scalar_select %p163, %s164, %s165
    %p169 = pneg %p163
    %p170 = scmp.eq.s32.totalorder %s14, 1
    %p171 = por %p169, %p170
    %p172 = scmp.ne.s32.totalorder %s164, %s167
    %p173 = scmp.eq.s32.totalorder %s14, 0
    %p174 = por %p172, %p173
    %p175 = scmp.ne.s32.totalorder %s164, %s167
    %p176 = scmp.eq.s32.totalorder %s19, 1
    %p177 = por %p175, %p176
    %p178 = scmp.ne.s32.totalorder %s167, %s168
    %p179 = scmp.eq.s32.totalorder %s19, 0
    %p180 = por %p178, %p179
    %p181 = scmp.ne.s32.totalorder %s167, %s168
    %p182 = scmp.eq.s32.totalorder %s20, 1
    %p183 = por %p181, %p182
    %p185 = scmp.ne.s32.totalorder %s168, %s184
    %p186 = scmp.eq.s32.totalorder %s20, 0
    %p187 = por %p185, %p186
    %s189 = sadd.s32 %s188, 1
    %p192 = scmp.eq.s32.totalorder %s14, 1
    %p193 = scmp.ne.s32.totalorder %s188, %s190
    %p194 = scmp.eq.s32.totalorder %s14, 0
    %p195 = por %p193, %p194
    %p196 = scmp.ne.s32.totalorder %s188, %s190
    %p197 = scmp.eq.s32.totalorder %s19, 1
    %p198 = por %p196, %p197
    %p199 = scmp.ne.s32.totalorder %s190, %s191
    %p200 = scmp.eq.s32.totalorder %s19, 0
    %p201 = por %p199, %p200
    %p202 = scmp.ne.s32.totalorder %s190, %s191
    %p203 = scmp.eq.s32.totalorder %s20, 1
    %p204 = por %p202, %p203
    %p206 = scmp.ne.s32.totalorder %s191, %s205
    %p207 = scmp.eq.s32.totalorder %s20, 0
    %p208 = por %p206, %p207
    %s210 = sadd.s32 %s209, 1
    %p213 = scmp.eq.s32.totalorder %s14, 1
    %p214 = scmp.ne.s32.totalorder %s209, %s211
    %p215 = scmp.eq.s32.totalorder %s14, 0
    %p216 = por %p214, %p215
    %p217 = scmp.ne.s32.totalorder %s209, %s211
    %p218 = scmp.eq.s32.totalorder %s19, 1
    %p219 = por %p217, %p218
    %p220 = scmp.ne.s32.totalorder %s211, %s212
    %p221 = scmp.eq.s32.totalorder %s19, 0
    %p222 = por %p220, %p221
    %p223 = scmp.ne.s32.totalorder %s211, %s212
    %p224 = scmp.eq.s32.totalorder %s20, 1
    %p225 = por %p223, %p224
    %p227 = scmp.ne.s32.totalorder %s212, %s226
    %p228 = scmp.eq.s32.totalorder %s20, 0
    %p229 = por %p227, %p228
    %p230 = scmp.le.s32.totalorder 1, %s14
    %p231 = scmp.lt.s32.totalorder %s14, 3
    %p232 = pnand %p230, %p231
    %p233 = pneg %p232
    // Predicated region
    $region9: #{resblock1122_forward.8} parent=5 // pred_check
      _
    $region10: #{resblock1122_forward.8} parent=5 // pred_check_branch
      %235 = sbr.rel (%p232) target = $region12
    $region11: #{resblock1122_forward.8} parent=5 // pred_region
      %s236 = ssub.s32 %s14, 1
      // Predicated region
      $region13: #{resblock1122_forward.8} parent=11 // pred_check
        %p237 = pneg %p131
      $region14: #{resblock1122_forward.8} parent=11 // pred_check_branch
        %239 = sbr.rel (%p237) target = $region16
      $region15: #{resblock1122_forward.8} parent=11 // pred_region
        _
      $region16: #{resblock1122_forward.8} parent=11 // pred_fallthru
        _
      // Predicated region
      $region17: #{resblock1122_forward.8} parent=11 // pred_check
        %p240 = pneg %p152
      $region18: #{resblock1122_forward.8} parent=11 // pred_check_branch
        %242 = sbr.rel (%p240) target = $region20
      $region19: #{resblock1122_forward.8} parent=11 // pred_region
        _
      $region20: #{resblock1122_forward.8} parent=11 // pred_fallthru
        _
    $region12: #{resblock1122_forward.8} parent=5 // pred_fallthru
      _
    %p243 = scmp.lt.s32.totalorder %s14, 2
    // Predicated region
    $region21: #{resblock1122_forward.8} parent=5 // pred_check
      %p244 = pneg %p243
    $region22: #{resblock1122_forward.8} parent=5 // pred_check_branch
      %246 = sbr.rel (%p244) target = $region24
    $region23: #{resblock1122_forward.8} parent=5 // pred_region
      // Predicated region
      $region25: #{resblock1122_forward.8} parent=23 // pred_check
        %p247 = pneg %p48
      $region26: #{resblock1122_forward.8} parent=23 // pred_check_branch
        %249 = sbr.rel (%p247) target = $region28
      $region27: #{resblock1122_forward.8} parent=23 // pred_region
        %s250 = smul.u32 2, %s22
        %p251 = scmp.lt.s32.totalorder %s21, 1
        %s252 = scalar_select %p251, %s21, 1
        %p253 = scmp.lt.s32.totalorder %s250, 1
        %s254 = scalar_select %p253, %s250, 1
        %s255 = smul.addr %s252, 8
        %s256 = sadd.s32 %s254, %s255
        %s257 = smul.addr %s256, 4
        %s258 = scalar_lea.vmem %s0, %s257
        %s259 = smul.u32 2, %s22
      $region28: #{resblock1122_forward.8} parent=23 // pred_fallthru
        _
      // Predicated region
      $region29: #{resblock1122_forward.8} parent=23 // pred_check
        %p260 = pneg %p76
      $region30: #{resblock1122_forward.8} parent=23 // pred_check_branch
        %262 = sbr.rel (%p260) target = $region32
      $region31: #{resblock1122_forward.8} parent=23 // pred_region
        %s263 = smul.u32 2, %s22
        %p264 = scmp.lt.s32.totalorder %s21, 1
        %s265 = scalar_select %p264, %s21, 1
        %p266 = scmp.lt.s32.totalorder %s263, 1
        %s267 = scalar_select %p266, %s263, 1
        %s268 = smul.addr %s265, 8
        %s269 = sadd.s32 %s267, %s268
        %s270 = smul.addr %s269, 4
        %s271 = scalar_lea.vmem %s1, %s270
        %s272 = smul.u32 2, %s22
      $region32: #{resblock1122_forward.8} parent=23 // pred_fallthru
        _
      // Predicated region
      $region33: #{resblock1122_forward.8} parent=23 // pred_check
        %p273 = pneg %p104
      $region34: #{resblock1122_forward.8} parent=23 // pred_check_branch
        %275 = sbr.rel (%p273) target = $region36
      $region35: #{resblock1122_forward.8} parent=23 // pred_region
        %s276 = smul.u32 2, %s22
        %p277 = scmp.lt.s32.totalorder %s21, 1
        %s278 = scalar_select %p277, %s21, 1
        %p279 = scmp.lt.s32.totalorder %s276, 1
        %s280 = scalar_select %p279, %s276, 1
        %s281 = smul.addr %s278, 8
        %s282 = sadd.s32 %s280, %s281
        %s283 = smul.addr %s282, 4
        %s284 = scalar_lea.vmem %s2, %s283
        %s285 = smul.u32 2, %s22
      $region36: #{resblock1122_forward.8} parent=23 // pred_fallthru
        _
    $region24: #{resblock1122_forward.8} parent=5 // pred_fallthru
      _
    %p286 = scmp.le.s32.totalorder 1, %s14
    %p287 = scmp.lt.s32.totalorder %s14, 3
    %p288 = pnand %p286, %p287
    %p289 = pneg %p288
    // Predicated region
    $region37: #{resblock1122_forward.8} parent=5 // pred_check
      _
    $region38: #{resblock1122_forward.8} parent=5 // pred_check_branch
      %291 = sbr.rel (%p288) target = $region40
    $region39: #{resblock1122_forward.8} parent=5 // pred_region
      %s292 = ssub.s32 %s14, 1
      %s293 = smul.u32 2, %s24
      %p294 = scmp.lt.s32.totalorder %s23, 1
      %s295 = scalar_select %p294, %s23, 1
      %p296 = scmp.lt.s32.totalorder %s293, 1
      %s297 = scalar_select %p296, %s293, 1
      %s298 = smul.addr %s295, 8
      %s299 = sadd.s32 %s297, %s298
      %s300 = smul.addr %s299, 4
      %s301 = scalar_lea.vmem %s0, %s300
      %p302 = pneg %p54
      %p303 = pneg %p51
      %s304 = smul.u32 2, %s24
      %p305 = scmp.lt.s32.totalorder %s23, 1
      %s306 = scalar_select %p305, %s23, 1
      %p307 = scmp.lt.s32.totalorder %s304, 1
      %s308 = scalar_select %p307, %s304, 1
      %s309 = smul.addr %s306, 8
      %s310 = sadd.s32 %s308, %s309
      %s311 = smul.addr %s310, 4
      %s312 = scalar_lea.vmem %s1, %s311
      %p313 = pneg %p82
      %p314 = pneg %p79
      %s315 = smul.u32 2, %s24
      %p316 = scmp.lt.s32.totalorder %s23, 1
      %s317 = scalar_select %p316, %s23, 1
      %p318 = scmp.lt.s32.totalorder %s315, 1
      %s319 = scalar_select %p318, %s315, 1
      %s320 = smul.addr %s317, 8
      %s321 = sadd.s32 %s319, %s320
      %s322 = smul.addr %s321, 4
      %s323 = scalar_lea.vmem %s2, %s322
      %p324 = pneg %p110
      %p325 = pneg %p107
      %p326 = pneg %p131
      %p327 = pneg %p128
      %p328 = pneg %p152
      %p329 = pneg %p149
      %p330 = pneg %p180
      %p331 = pneg %p177
      %s332 = smul.u32 2, %s24
      %p333 = scmp.lt.s32.totalorder %s23, 1
      %s334 = scalar_select %p333, %s23, 1
      %p335 = scmp.lt.s32.totalorder %s332, 1
      %s336 = scalar_select %p335, %s332, 1
      %s337 = smul.addr %s334, 8
      %s338 = sadd.s32 %s336, %s337
      %s339 = smul.addr %s338, 4
      %s340 = scalar_lea.vmem %s5, %s339
      %p341 = pneg %p201
      %p342 = pneg %p198
      %p343 = pneg %p222
      %p344 = pneg %p219
      %s345 = smul.u32 2, %s24
      %p346 = scmp.lt.s32.totalorder %s23, 1
      %s347 = scalar_select %p346, %s23, 1
      %p348 = scmp.lt.s32.totalorder %s345, 1
      %s349 = scalar_select %p348, %s345, 1
      %s350 = smul.addr %s347, 8
      %s351 = sadd.s32 %s349, %s350
      %s352 = smul.addr %s351, 4
      %s353 = scalar_lea.vmem %s0, %s352
      %s354 = smul.u32 2, %s24
      %s355 = smul.u32 2, %s24
      %p356 = scmp.lt.s32.totalorder %s23, 1
      %s357 = scalar_select %p356, %s23, 1
      %p358 = scmp.lt.s32.totalorder %s355, 1
      %s359 = scalar_select %p358, %s355, 1
      %s360 = smul.addr %s357, 8
      %s361 = sadd.s32 %s359, %s360
      %s362 = smul.addr %s361, 4
      %s363 = scalar_lea.vmem %s1, %s362
      %s364 = smul.u32 2, %s24
      %s365 = smul.u32 2, %s24
      %p366 = scmp.lt.s32.totalorder %s23, 1
      %s367 = scalar_select %p366, %s23, 1
      %p368 = scmp.lt.s32.totalorder %s365, 1
      %s369 = scalar_select %p368, %s365, 1
      %s370 = smul.addr %s367, 8
      %s371 = sadd.s32 %s369, %s370
      %s372 = smul.addr %s371, 4
      %s373 = scalar_lea.vmem %s2, %s372
      %s374 = smul.u32 2, %s24
      %s375 = smul.u32 2, %s24
      %p376 = scmp.lt.s32.totalorder %s23, 1
      %s377 = scalar_select %p376, %s23, 1
      %p378 = scmp.lt.s32.totalorder %s375, 1
      %s379 = scalar_select %p378, %s375, 1
      %s380 = smul.addr %s377, 8
      %s381 = sadd.s32 %s379, %s380
      %s382 = smul.addr %s381, 4
      %s383 = scalar_lea.vmem %s5, %s382
      %s384 = smul.u32 2, %s24
      %p386 = scmp.eq.s32.totalorder %s23, 0
      %p387 = scmp.eq.s32.totalorder %s24, 0
      %p388 = pnand %p386, %p387
      %p389 = pneg %p388
      // Predicated region
      $region41: #{resblock1122_forward.8} parent=39 // pred_check
        _
      $region42: #{resblock1122_forward.8} parent=39 // pred_check_branch
        %391 = sbr.rel (%p388) target = $region44
      $region43: #{resblock1122_forward.8} parent=39 // pred_region
        %vm392 = vcmask 7168
        %393 = vst.msk [vmem:[%s6] sm:$0xff] %vm392, 0.0
        %394 = vst.msk [vmem:[%s6 + $0x8] sm:$0xff] %vm392, 0.0
        %395 = vst.msk [vmem:[%s6 + $0x10] sm:$0xff] %vm392, 0.0
        %396 = vst.msk [vmem:[%s6 + $0x18] sm:$0xff] %vm392, 0.0
        %397 = vst.msk [vmem:[%s7] sm:$0xff] %vm392, 0.0
        %398 = vst.msk [vmem:[%s7 + $0x8] sm:$0xff] %vm392, 0.0
        %399 = vst.msk [vmem:[%s7 + $0x10] sm:$0xff] %vm392, 0.0
        %400 = vst.msk [vmem:[%s7 + $0x18] sm:$0xff] %vm392, 0.0
      $region44: #{resblock1122_forward.8} parent=39 // pred_fallthru
        _
      %v401 = vld [vmem:[%s353] sm:$0xff]
      %v402 = vld [vmem:[%s353 + $0x8] sm:$0xff]
      %v403 = vld [vmem:[%s353 + $0x10] sm:$0xff]
      %v404 = vld [vmem:[%s353 + $0x18] sm:$0xff]
      %v405 = vld [vmem:[%s363] sm:$0xff]
      %v406 = vld [vmem:[%s363 + $0x8] sm:$0xff]
      %v407 = vld [vmem:[%s363 + $0x10] sm:$0xff]
      %v408 = vld [vmem:[%s363 + $0x18] sm:$0xff]
      %v409 = vld [vmem:[%s373] sm:$0xff]
      %v410 = vld [vmem:[%s373 + $0x8] sm:$0xff]
      %v411 = vld [vmem:[%s373 + $0x10] sm:$0xff]
      %v412 = vld [vmem:[%s373 + $0x18] sm:$0xff]
      %v417 = vunpack.c.l.b16 %v401
      %v418 = vunpack.c.h.b16 %v401
      %v419 = vunpack.c.l.b16 %v402
      %v420 = vunpack.c.h.b16 %v402
      %v421 = vunpack.c.l.b16 %v403
      %v422 = vunpack.c.h.b16 %v403
      %v423 = vunpack.c.l.b16 %v404
      %v424 = vunpack.c.h.b16 %v404
      %v425 = vpack.c.b16 %v419, %v417
      %v426 = vpack.c.b16 %v420, %v418
      %v427 = vpack.c.b16 %v423, %v421
      %v428 = vpack.c.b16 %v424, %v422
      %v437 = vunpack.c.l.b16 %v405
      %v438 = vunpack.c.h.b16 %v405
      %v439 = vunpack.c.l.b16 %v406
      %v440 = vunpack.c.h.b16 %v406
      %v441 = vunpack.c.l.b16 %v407
      %v442 = vunpack.c.h.b16 %v407
      %v443 = vunpack.c.l.b16 %v408
      %v444 = vunpack.c.h.b16 %v408
      %v445 = vpack.c.b16 %v439, %v437
      %v446 = vpack.c.b16 %v440, %v438
      %v447 = vpack.c.b16 %v443, %v441
      %v448 = vpack.c.b16 %v444, %v442
      %v457 = vunpack.c.l.b16 %v409
      %v458 = vunpack.c.h.b16 %v409
      %v459 = vunpack.c.l.b16 %v410
      %v460 = vunpack.c.h.b16 %v410
      %v461 = vunpack.c.l.b16 %v411
      %v462 = vunpack.c.h.b16 %v411
      %v463 = vunpack.c.l.b16 %v412
      %v464 = vunpack.c.h.b16 %v412
      %v465 = vpack.c.b16 %v459, %v457
      %v466 = vpack.c.b16 %v460, %v458
      %v467 = vpack.c.b16 %v463, %v461
      %v468 = vpack.c.b16 %v464, %v462
      %v473 = vld [vmem:[%s3] sm:$0xf]
      %v474 = vld [vmem:[%s3 + $0x4] sm:$0xf]
      %v475 = vld [vmem:[%s3 + $0x8] sm:$0xf]
      %v476 = vld [vmem:[%s3 + $0xc] sm:$0xf]
      %v477 = vld [vmem:[%s4] sm:$0xff]
      %v478 = vld [vmem:[%s4 + $0x8] sm:$0xff]
      %v479 = vld [vmem:[%s4 + $0x10] sm:$0xff]
      %v480 = vld [vmem:[%s4 + $0x18] sm:$0xff]
      %482 = vset.pattern.permute.xlu0 0
      %483 = vperm.xlu0 %482, %v477
      %v484 = vpop.permute.xlu0 %483
      %487 = vset.pattern.permute.xlu0 0
      %488 = vperm.xlu0 %487, %v478
      %v489 = vpop.permute.xlu0 %488
      %492 = vset.pattern.permute.xlu0 0
      %493 = vperm.xlu0 %492, %v479
      %v494 = vpop.permute.xlu0 %493
      %497 = vset.pattern.permute.xlu0 0
      %498 = vperm.xlu0 %497, %v480
      %v499 = vpop.permute.xlu0 %498
      %v505 = vunpack.c.l.b16 %v473
      %v506 = vunpack.c.l.b16 %v474
      %v507 = vunpack.c.l.b16 %v475
      %v508 = vunpack.c.l.b16 %v476
      %v509 = vpack.c.b16 %v506, %v505
      %v510 = vpack.c.b16 %v508, %v507
      %vm511 = vcmask 785408
      %v513 = vsel %vm511, %v509, 0
      %v516 = vsel %vm511, %v510, 0
      %518 = vmatprep.subr.bf16.mxu0 0
      %519 = vmatpush1.bf16.msra.mxu0 0
      %520 = vmatprep.subr.bf16.mxu0 0
      %521 = vmatpush1.bf16.msra.mxu0 0
      %522 = vmatprep.subr.bf16.mxu0 %v468
      %523 = vmatpush1.bf16.msra.mxu0 %v467
      %524 = vmatprep.subr.bf16.mxu0 %v466
      %525 = vmatpush1.bf16.msra.mxu0 %v465
      %526 = vmatprep.subr.bf16.mxu0 %v448
      %527 = vmatpush1.bf16.msra.mxu0 %v447
      %528 = vmatprep.subr.bf16.mxu0 %v446
      %529 = vmatpush1.bf16.msra.mxu0 %v445
      %530 = vmatprep.subr.bf16.mxu0 %v428
      %531 = vmatpush1.bf16.msra.mxu0 %v427
      %532 = vmatprep.subr.bf16.mxu0 %v426
      %533 = vmatpush1.bf16.msra.mxu0 %v425
      %534 = vmatprep.subr.bf16.mxu0 0
      %535 = vmatpush2.bf16.msra.mxu0 0
      %536 = vmatprep.subr.bf16.mxu0 0
      %537 = vmatpush2.bf16.msra.mxu0 0
      %538 = vmatprep.subr.bf16.mxu0 0
      %539 = vmatpush2.bf16.msra.mxu0 0
      %540 = vmatprep.subr.bf16.mxu0 0
      %541 = vmatpush2.bf16.msra.mxu0 0
      %542 = vmatprep.subr.bf16.mxu0 0
      %543 = vmatpush2.bf16.msra.mxu0 0
      %544 = vmatprep.subr.bf16.mxu0 0
      %545 = vmatpush2.bf16.msra.mxu0 0
      %546 = vmatprep.subr.bf16.mxu0 0
      %547 = vmatpush2.bf16.msra.mxu0 0
      %548 = vmatprep.subr.bf16.mxu0 0
      %549 = vmatpush2.bf16.msra.mxu0 0
      %550 = vmatprep.mubr.bf16.mxu0 0
      %551 = vmatmul.mubr.bf16.gmra.mxu0 %v513
      %v552 = vpop.f32.mrf.mxu0
      %v553 = vadd.f32 %v484, %v552
      %v554 = vpop.f32.mrf.mxu0
      %v555 = vadd.f32 %v484, %v554
      %v556 = vpop.f32.mrf.mxu0
      %v557 = vadd.f32 %v489, %v556
      %v558 = vpop.f32.mrf.mxu0
      %v559 = vadd.f32 %v489, %v558
      %560 = vmatprep.mubr.bf16.mxu0 0
      %561 = vmatmul.mubr.bf16.gmra.mxu0 %v516
      %v562 = vpop.f32.mrf.mxu0
      %v563 = vadd.f32 %v494, %v562
      %v564 = vpop.f32.mrf.mxu0
      %v565 = vadd.f32 %v494, %v564
      %v566 = vpop.f32.mrf.mxu0
      %v567 = vadd.f32 %v499, %v566
      %v568 = vpop.f32.mrf.mxu0
      %v569 = vadd.f32 %v499, %v568
      %570 = vdwg.mxu0
      %vm571 = vcmp.gt.f32.partialorder %v553, 0.0
      %vm572 = vcmp.gt.f32.partialorder %v555, 0.0
      %vm573 = vcmp.gt.f32.partialorder %v557, 0.0
      %vm574 = vcmp.gt.f32.partialorder %v559, 0.0
      %vm575 = vcmp.gt.f32.partialorder %v563, 0.0
      %vm576 = vcmp.gt.f32.partialorder %v565, 0.0
      %vm577 = vcmp.gt.f32.partialorder %v567, 0.0
      %vm578 = vcmp.gt.f32.partialorder %v569, 0.0
      %v579 = vmul.f32 %v553, 0.01
      %v580 = vmul.f32 %v555, 0.01
      %v581 = vmul.f32 %v557, 0.01
      %v582 = vmul.f32 %v559, 0.01
      %v583 = vmul.f32 %v563, 0.01
      %v584 = vmul.f32 %v565, 0.01
      %v585 = vmul.f32 %v567, 0.01
      %v586 = vmul.f32 %v569, 0.01
      %v587 = vsel %vm571, %v553, %v579
      %v588 = vsel %vm572, %v555, %v580
      %v589 = vsel %vm573, %v557, %v581
      %v590 = vsel %vm574, %v559, %v582
      %v591 = vsel %vm575, %v563, %v583
      %v592 = vsel %vm576, %v565, %v584
      %v593 = vsel %vm577, %v567, %v585
      %v594 = vsel %vm578, %v569, %v586
      %v595 = vpack.c.bf16 %v589, %v587
      %v596 = vpack.c.bf16 %v590, %v588
      %v597 = vpack.c.bf16 %v593, %v591
      %v598 = vpack.c.bf16 %v594, %v592
      %v603 = vunpack.c.l.b16 %v595
      %v604 = vunpack.c.l.b16 %v596
      %v605 = vunpack.c.h.b16 %v595
      %v606 = vunpack.c.h.b16 %v596
      %v607 = vunpack.c.l.b16 %v597
      %v608 = vunpack.c.l.b16 %v598
      %v609 = vunpack.c.h.b16 %v597
      %v610 = vunpack.c.h.b16 %v598
      %v611 = vpack.c.b16 %v604, %v603
      %v612 = vpack.c.b16 %v606, %v605
      %v613 = vpack.c.b16 %v608, %v607
      %v614 = vpack.c.b16 %v610, %v609
      %619 = vst [vmem:[%s383] sm:$0xff] %v611
      %620 = vst [vmem:[%s383 + $0x8] sm:$0xff] %v612
      %621 = vst [vmem:[%s383 + $0x10] sm:$0xff] %v613
      %622 = vst [vmem:[%s383 + $0x18] sm:$0xff] %v614
      %v623 = vld [vmem:[%s6] sm:$0xff]
      %v624 = vld [vmem:[%s6 + $0x8] sm:$0xff]
      %v625 = vld [vmem:[%s6 + $0x10] sm:$0xff]
      %v626 = vld [vmem:[%s6 + $0x18] sm:$0xff]
      %v627 = vadd.f32 %v587, %v588
      %628 = vadd.xlane.f32.xlu0 %v627
      %v629 = vpop.xlane.xlu0 %628
      %v630 = vadd.f32 %v589, %v590
      %631 = vadd.xlane.f32.xlu0 %v630
      %v632 = vpop.xlane.xlu0 %631
      %v633 = vadd.f32 %v591, %v592
      %634 = vadd.xlane.f32.xlu0 %v633
      %v635 = vpop.xlane.xlu0 %634
      %v636 = vadd.f32 %v593, %v594
      %637 = vadd.xlane.f32.xlu0 %v636
      %v638 = vpop.xlane.xlu0 %637
      %v639 = vadd.f32 %v623, %v629
      %v640 = vadd.f32 %v624, %v632
      %v641 = vadd.f32 %v625, %v635
      %v642 = vadd.f32 %v626, %v638
      %vm643 = vcmask 7168
      %644 = vst.msk [vmem:[%s6] sm:$0xff] %vm643, %v639
      %645 = vst.msk [vmem:[%s6 + $0x8] sm:$0xff] %vm643, %v640
      %646 = vst.msk [vmem:[%s6 + $0x10] sm:$0xff] %vm643, %v641
      %647 = vst.msk [vmem:[%s6 + $0x18] sm:$0xff] %vm643, %v642
      %v648 = vld [vmem:[%s7] sm:$0xff]
      %v649 = vld [vmem:[%s7 + $0x8] sm:$0xff]
      %v650 = vld [vmem:[%s7 + $0x10] sm:$0xff]
      %v651 = vld [vmem:[%s7 + $0x18] sm:$0xff]
      %v652 = vmul.f32 %v587, %v587
      %v653 = vmul.f32 %v588, %v588
      %v654 = vmul.f32 %v589, %v589
      %v655 = vmul.f32 %v590, %v590
      %v656 = vmul.f32 %v591, %v591
      %v657 = vmul.f32 %v592, %v592
      %v658 = vmul.f32 %v593, %v593
      %v659 = vmul.f32 %v594, %v594
      %v660 = vadd.f32 %v652, %v653
      %661 = vadd.xlane.f32.xlu0 %v660
      %v662 = vpop.xlane.xlu0 %661
      %v663 = vadd.f32 %v654, %v655
      %664 = vadd.xlane.f32.xlu0 %v663
      %v665 = vpop.xlane.xlu0 %664
      %v666 = vadd.f32 %v656, %v657
      %667 = vadd.xlane.f32.xlu0 %v666
      %v668 = vpop.xlane.xlu0 %667
      %v669 = vadd.f32 %v658, %v659
      %670 = vadd.xlane.f32.xlu0 %v669
      %v671 = vpop.xlane.xlu0 %670
      %v672 = vadd.f32 %v648, %v662
      %v673 = vadd.f32 %v649, %v665
      %v674 = vadd.f32 %v650, %v668
      %v675 = vadd.f32 %v651, %v671
      %676 = vst.msk [vmem:[%s7] sm:$0xff] %vm643, %v672
      %677 = vst.msk [vmem:[%s7 + $0x8] sm:$0xff] %vm643, %v673
      %678 = vst.msk [vmem:[%s7 + $0x10] sm:$0xff] %vm643, %v674
      %679 = vst.msk [vmem:[%s7 + $0x18] sm:$0xff] %vm643, %v675
      %s680 = smul.u32 2, %s24
      %p681 = scmp.lt.s32.totalorder %s23, 1
      %s682 = scalar_select %p681, %s23, 1
      %p683 = scmp.lt.s32.totalorder %s680, 1
      %s684 = scalar_select %p683, %s680, 1
      %s685 = smul.addr %s682, 8
      %s686 = sadd.s32 %s684, %s685
      %s687 = smul.addr %s686, 4
      %s688 = scalar_lea.vmem %s5, %s687
      // Predicated region
      $region45: #{resblock1122_forward.8} parent=39 // pred_check
        %p689 = pneg %p177
      $region46: #{resblock1122_forward.8} parent=39 // pred_check_branch
        %691 = sbr.rel (%p689) target = $region48
      $region47: #{resblock1122_forward.8} parent=39 // pred_region
        %s692 = smul.u32 2, %s24
      $region48: #{resblock1122_forward.8} parent=39 // pred_fallthru
        _
      // Predicated region
      $region49: #{resblock1122_forward.8} parent=39 // pred_check
        %p693 = pneg %p198
      $region50: #{resblock1122_forward.8} parent=39 // pred_check_branch
        %695 = sbr.rel (%p693) target = $region52
      $region51: #{resblock1122_forward.8} parent=39 // pred_region
        _
      $region52: #{resblock1122_forward.8} parent=39 // pred_fallthru
        _
      // Predicated region
      $region53: #{resblock1122_forward.8} parent=39 // pred_check
        %p696 = pneg %p219
      $region54: #{resblock1122_forward.8} parent=39 // pred_check_branch
        %698 = sbr.rel (%p696) target = $region56
      $region55: #{resblock1122_forward.8} parent=39 // pred_region
        _
      $region56: #{resblock1122_forward.8} parent=39 // pred_fallthru
        _
      // Predicated region
      $region57: #{resblock1122_forward.8} parent=39 // pred_check
        %p699 = pneg %p198
      $region58: #{resblock1122_forward.8} parent=39 // pred_check_branch
        %701 = sbr.rel (%p699) target = $region60
      $region59: #{resblock1122_forward.8} parent=39 // pred_region
        _
      $region60: #{resblock1122_forward.8} parent=39 // pred_fallthru
        _
      // Predicated region
      $region61: #{resblock1122_forward.8} parent=39 // pred_check
        %p702 = pneg %p219
      $region62: #{resblock1122_forward.8} parent=39 // pred_check_branch
        %704 = sbr.rel (%p702) target = $region64
      $region63: #{resblock1122_forward.8} parent=39 // pred_region
        _
      $region64: #{resblock1122_forward.8} parent=39 // pred_fallthru
        _
    $region40: #{resblock1122_forward.8} parent=5 // pred_fallthru
      _
    %p705 = scmp.le.s32.totalorder 2, %s14
    // Predicated region
    $region65: #{resblock1122_forward.8} parent=5 // pred_check
      %p706 = pneg %p705
    $region66: #{resblock1122_forward.8} parent=5 // pred_check_branch
      %708 = sbr.rel (%p706) target = $region68
    $region67: #{resblock1122_forward.8} parent=5 // pred_region
      %s709 = ssub.s32 %s14, 2
      // Predicated region
      $region69: #{resblock1122_forward.8} parent=67 // pred_check
        %p710 = pneg %p183
      $region70: #{resblock1122_forward.8} parent=67 // pred_check_branch
        %712 = sbr.rel (%p710) target = $region72
      $region71: #{resblock1122_forward.8} parent=67 // pred_region
        %s713 = smul.u32 2, %s26
        %p714 = scmp.lt.s32.totalorder %s25, 1
        %s715 = scalar_select %p714, %s25, 1
        %p716 = scmp.lt.s32.totalorder %s713, 1
        %s717 = scalar_select %p716, %s713, 1
        %s718 = smul.addr %s715, 8
        %s719 = sadd.s32 %s717, %s718
        %s720 = smul.addr %s719, 4
        %s721 = scalar_lea.vmem %s5, %s720
      $region72: #{resblock1122_forward.8} parent=67 // pred_fallthru
        _
    $region68: #{resblock1122_forward.8} parent=5 // pred_fallthru
      _
  $region6: #{resblock1122_forward.8} parent=0 // loop_footer
    %s18 = sadd.s32 1, %s14
  $region7: #{resblock1122_forward.8} parent=0 // loop_footer_branch
    %13 = sbr.rel target = $region3
  $region8: #{resblock1122_forward.8} parent=0 // loop_exit
    _

</llo_original>
